<compile_context>
chip_gen: v5e
topology: v5e:2x2
jax: 0.10.0
libtpu: 0.0.40
codegen_flags: <defaults>
</compile_context>

<pallas_src>
import jax
import jax.numpy as jnp
from jax import lax
from jax.experimental import pallas as pl
from jax.experimental.pallas import tpu as pltpu

KER = 5
PAD = KER // 2          # 2
EPS = 1e-5              # nn.InstanceNorm2d default


def _vmem_limit_bytes():
    # v5e/v6e have 128 MiB VMEM per TensorCore, v7x only 64 MiB: derive the scoped
    # limit from the hardware instead of hard-coding a number that overshoots v7x.
    try:
        cap = pltpu.get_tpu_info().vmem_capacity_bytes
    except Exception:
        cap = 64 * 1024 * 1024
    return int(cap * 3 // 4)


def resnet_block_forward(x_nchw, w1, b1, w2, b2, gamma):
    N, C, H, W = x_nchw.shape
    assert H > PAD and W > PAD, "ReflectionPad2d(2) needs H, W >= 3"
    HW = H * W
    Hp, Wp = H + 2 * PAD, W + 2 * PAD
    HWp = H * Wp                      # conv compute grid (padded-width row stride)
    KK = KER * KER
    TAIL = KER - 1                    # last kh-slab read runs TAIL cols past Hp*Wp
    Cp = ((C + 7) // 8) * 8           # input channels padded to 8-sublane boundary
    inv_count = 1.0 / float(HW)

    # Lane-dense I/O slab (host-side reshape is free).
    x_flat = x_nchw.reshape(N, C, HW)

    def prep_w(w):
        # HWIO (kh, kw, ci, co) -> (co, kh, kw, ci) zero-padded to Cp input channels
        # -> (co, (kh*KER + kw)*Cp + ci), bf16 MXU operand.
        wt = jnp.transpose(w, (3, 0, 1, 2))
        wt = jnp.pad(wt, ((0, 0), (0, 0), (0, 0), (0, Cp - C)))
        return wt.reshape(C, KK * Cp).astype(jnp.bfloat16)

    w1m, w2m = prep_w(w1), prep_w(w2)
    b1c = b1.reshape(C, 1).astype(jnp.float32)
    b2c = b2.reshape(C, 1).astype(jnp.float32)
    gamma1 = gamma.reshape(1).astype(jnp.float32)

    def kernel(x_ref, w1_ref, b1_ref, w2_ref, b2_ref, gamma_ref, out_ref,
               xpad_ref, patch_ref):
        # One-time init of regions the reflection pad never writes: the TAIL columns
        # read by the kh = KER-1 slab and (for C < 8) the zero-padded channel rows.
        xpad_ref[:, Hp * Wp:Hp * Wp + TAIL] = jnp.zeros((Cp, TAIL), jnp.bfloat16)
        if Cp > C:
            xpad_ref[C:Cp, :] = jnp.zeros((Cp - C, Hp * Wp + TAIL), jnp.bfloat16)

        def reflect_pad_store(src_hw):
            # src_hw: dense (C, H*W) f32 value.  Build ReflectionPad2d(PAD) rows as
            # one (C, H, Wp) value (left flip | row | right flip), cast to bf16 at
            # copy time, then ONE bulk interior store + 2*PAD halo-row stores.
            s3 = src_hw.reshape(C, H, W)
            left = jnp.concatenate(
                [s3[:, :, PAD - j:PAD - j + 1] for j in range(PAD)], axis=2)
            right = jnp.concatenate(
                [s3[:, :, W - 2 - j:W - 1 - j] for j in range(PAD)], axis=2)
            rows = jnp.concatenate([left, s3, right], axis=2)      # (C, H, Wp) f32
            rows_bf = rows.astype(jnp.bfloat16)
            xpad_ref[:C, PAD * Wp:PAD * Wp + HWp] = rows_bf.reshape(C, HWp)
            for r in range(PAD):                                   # top halo rows
                xpad_ref[:C, r * Wp:(r + 1) * Wp] = rows_bf[:, PAD - r, :]
            for q in range(PAD):                                   # bottom halo rows
                r = PAD + H + q
                xpad_ref[:C, r * Wp:(r + 1) * Wp] = rows_bf[:, H - 2 - q, :]

        def conv5x5(w_ref, b_ref):
            # kh-grouped im2col: per kh load one (Cp, HWp+TAIL) bf16 slab, place its
            # KER lane-shifted kw windows into the (KER*Cp, HWp) bf16 patch buffer
            # (8-sublane-aligned blocks) and run one accumulating K=KER*Cp matmul.
            acc = None
            for kh in range(KER):
                slab = xpad_ref[:, kh * Wp:kh * Wp + HWp + TAIL]
                for kw in range(KER):
                    patch_ref[kw * Cp:(kw + 1) * Cp, :] = slab[:, kw:kw + HWp]
                wk = w_ref[:, kh * KER * Cp:(kh + 1) * KER * Cp]   # (C, KER*Cp)
                d = jnp.dot(wk, patch_ref[...],
                            preferred_element_type=jnp.float32)    # (C, HWp) f32
                acc = d if acc is None else acc + d
            # Compact padded-width grid to a dense lane layout, then add bias.
            y = acc.reshape(C, H, Wp)[:, :, :W].reshape(C, HW)
            return y + b_ref[...]

        def instance_norm(y):
            # Two-pass (centered) variance on the dense (C, H*W) slab; all f32.
            m = jnp.sum(y, axis=1, keepdims=True) * inv_count
            c = y - m
            var = jnp.sum(c * c, axis=1, keepdims=True) * inv_count
            return c * lax.rsqrt(var + EPS)

        x2d = x_ref[0].astype(jnp.float32)                         # (C, H*W)

        # conv1: reflect pad -> 5x5 conv -> instance norm -> relu
        reflect_pad_store(x2d)
        h = jnp.maximum(instance_norm(conv5x5(w1_ref, b1_ref)), 0.0)
        # TODO(synk): nn.Dropout(0.5) path skipped (use_dropout=False config).

        # conv2: reflect pad -> 5x5 conv -> instance norm
        reflect_pad_store(h)
        h2 = instance_norm(conv5x5(w2_ref, b2_ref))

        # residual: single dense, lane-aligned (C, H*W) store
        out_ref[0] = (x2d + gamma_ref[0] * h2).astype(out_ref.dtype)

    flops = N * 2 * (2 * C * (KK * Cp) * HWp)                      # two convs
    bytes_accessed = 2 * N * C * HW * 4 + 2 * C * KK * Cp * 2 + 2 * C * 4 + 4

    # TODO(synk): for v7x with N == 1 (or odd N) add a second "parallel" grid axis
    # (H-row tiles with halo exchange + cross-tile IN stats) to keep both TCs busy.
    out_flat = pl.pallas_call(
        kernel,
        out_shape=jax.ShapeDtypeStruct((N, C, HW), x_nchw.dtype),
        grid_spec=pltpu.PrefetchScalarGridSpec(
            num_scalar_prefetch=0,
            grid=(N,),
            in_specs=[
                pl.BlockSpec((1, C, HW), lambda n: (n, 0, 0)),
                # Grid-invariant weight/bias blocks: single-buffered.
                pl.BlockSpec((C, KK * Cp), lambda n: (0, 0),
                             pipeline_mode=pl.Buffered(1)),
                pl.BlockSpec((C, 1), lambda n: (0, 0),
                             pipeline_mode=pl.Buffered(1)),
                pl.BlockSpec((C, KK * Cp), lambda n: (0, 0),
                             pipeline_mode=pl.Buffered(1)),
                pl.BlockSpec((C, 1), lambda n: (0, 0),
                             pipeline_mode=pl.Buffered(1)),
                pl.BlockSpec(memory_space=pltpu.MemorySpace.SMEM),  # gamma scalar
            ],
            out_specs=pl.BlockSpec((1, C, HW), lambda n: (n, 0, 0)),
            scratch_shapes=[
                pltpu.VMEM((Cp, Hp * Wp + TAIL), jnp.bfloat16),    # flat padded img
                pltpu.VMEM((KER * Cp, HWp), jnp.bfloat16),         # kh-grouped im2col
            ],
        ),
        compiler_params=pltpu.CompilerParams(
            dimension_semantics=("parallel",),
            vmem_limit_bytes=_vmem_limit_bytes(),
        ),
        cost_estimate=pl.CostEstimate(
            flops=flops, transcendentals=2 * N * C,
            bytes_accessed=bytes_accessed),
    )(x_flat, w1m, b1c, w2m, b2c, gamma1)

    return out_flat.reshape(N, C, H, W)


def _reference_forward(x, w1, b1, w2, b2, gamma):
    # Pure-JAX reference (correctness check only), NCHW / HWIO, f32 precision.
    def conv(v, w, b):
        vp = jnp.pad(v, ((0, 0), (0, 0), (PAD, PAD), (PAD, PAD)), mode="reflect")
        y = lax.conv_general_dilated(
            vp, w, window_strides=(1, 1), padding="VALID",
            dimension_numbers=("NCHW", "HWIO", "NCHW"),
            precision=lax.Precision.HIGHEST)
        return y + b.reshape(1, -1, 1, 1)

    def inorm(y):
        m = jnp.mean(y, axis=(2, 3), keepdims=True)
        v = jnp.mean((y - m) ** 2, axis=(2, 3), keepdims=True)
        return (y - m) * lax.rsqrt(v + EPS)

    h = jnp.maximum(inorm(conv(x, w1, b1)), 0.0)
    h = inorm(conv(h, w2, b2))
    return x + gamma.reshape(()) * h


if __name__ == "__main__":
    N, C, H, W = 2, 4, 16, 16          # PyTorch input NCHW (2, 4, 16, 16)

    key = jax.random.PRNGKey(0)
    kx, k1, kb1, k2, kb2 = jax.random.split(key, 5)

    x = jax.random.normal(kx, (N, C, H, W), jnp.float32)
    # nn.Conv2d(dim, dim, 5, bias=True) parameters, stored HWIO.
    w1 = jax.random.normal(k1, (KER, KER, C, C), jnp.float32) * 0.1
    b1 = jax.random.normal(kb1, (C,), jnp.float32) * 0.1
    w2 = jax.random.normal(k2, (KER, KER, C, C), jnp.float32) * 0.1
    b2 = jax.random.normal(kb2, (C,), jnp.float32) * 0.1
    # gamma is a scalar nn.Parameter initialised to 0 (identity block); use 0.1 so
    # the conv path is actually exercised by the check.
    gamma = jnp.array([0.1], jnp.float32)

    out = jax.block_until_ready(resnet_block_forward(x, w1, b1, w2, b2, gamma))
    ref = jax.block_until_ready(_reference_forward(x, w1, b1, w2, b2, gamma))

    assert out.shape == (N, C, H, W)
    max_err = float(jnp.max(jnp.abs(out - ref)))
    # bf16 MXU operands (f32 accumulation / norm math) vs an f32 HIGHEST reference:
    # expected error is O(1e-3) scaled by gamma; tolerance kept loose at 2e-2.
    assert max_err < 2e-2, max_err
    print("KERNEL_OK")
</pallas_src>

<mosaic_0001>
module attributes {stable_mosaic.version = 11 : i64} {
  func.func @kernel(%arg0: i32, %arg1: memref<1x4x256xf32, #tpu.memory_space<vmem>>, %arg2: memref<4x200xbf16, #tpu.memory_space<vmem>>, %arg3: memref<4x1xf32, #tpu.memory_space<vmem>>, %arg4: memref<4x200xbf16, #tpu.memory_space<vmem>>, %arg5: memref<4x1xf32, #tpu.memory_space<vmem>>, %arg6: memref<1xf32, #tpu.memory_space<smem>>, %arg7: memref<1x4x256xf32, #tpu.memory_space<vmem>>, %arg8: memref<8x404xbf16, #tpu.memory_space<vmem>>, %arg9: memref<40x320xbf16, #tpu.memory_space<vmem>>) attributes {dimension_semantics = [#tpu.dimension_semantics<parallel>], iteration_bounds = array<i64: 2>, scalar_prefetch = 0 : i64, scratch_operands = 2 : i64, tpu.core_type = #tpu.core_type<tc>, window_params = [{transform_indices = @transform_0, window_bounds = array<i64: 1, 4, 256>}, {pipeline_mode = #tpu.pipeline_mode<synchronous>, transform_indices = @transform_1, window_bounds = array<i64: 4, 200>}, {pipeline_mode = #tpu.pipeline_mode<synchronous>, transform_indices = @transform_2, window_bounds = array<i64: 4, 1>}, {pipeline_mode = #tpu.pipeline_mode<synchronous>, transform_indices = @transform_3, window_bounds = array<i64: 4, 200>}, {pipeline_mode = #tpu.pipeline_mode<synchronous>, transform_indices = @transform_4, window_bounds = array<i64: 4, 1>}, {transform_indices = @transform_5, window_bounds = array<i64: 1>}, {transform_indices = @transform_6, window_bounds = array<i64: 1, 4, 256>}]} {
    %cst = arith.constant 0.000000e+00 : bf16
    %0 = vector.broadcast %cst : bf16 to vector<8x4xbf16>
    %c0 = arith.constant 0 : index
    %c400 = arith.constant 400 : index
    %1 = vector.load %arg8[%c0, %c400] : memref<8x404xbf16, #tpu.memory_space<vmem>>, vector<8x4xbf16>
    tpu.vector_store %arg8[%c0, %c400], %0 {strides = array<i32>} : memref<8x404xbf16, #tpu.memory_space<vmem>>, vector<8x4xbf16>,
    %cst_0 = arith.constant 0.000000e+00 : bf16
    %2 = vector.broadcast %cst_0 : bf16 to vector<4x404xbf16>
    %c4 = arith.constant 4 : index
    %c0_1 = arith.constant 0 : index
    %3 = vector.load %arg8[%c4, %c0_1] : memref<8x404xbf16, #tpu.memory_space<vmem>>, vector<4x404xbf16>
    tpu.vector_store %arg8[%c4, %c0_1], %2 {strides = array<i32>} : memref<8x404xbf16, #tpu.memory_space<vmem>>, vector<4x404xbf16>,
    %c0_2 = arith.constant 0 : index
    %c0_3 = arith.constant 0 : index
    %c0_4 = arith.constant 0 : index
    %4 = vector.load %arg1[%c0_2, %c0_3, %c0_4] : memref<1x4x256xf32, #tpu.memory_space<vmem>>, vector<1x4x256xf32>
    %5 = vector.shape_cast %4 : vector<1x4x256xf32> to vector<4x256xf32>
    %6 = vector.shape_cast %5 : vector<4x256xf32> to vector<4x16x16xf32>
    %7 = vector.extract_strided_slice %6 {offsets = [0, 0, 2], sizes = [4, 16, 1], strides = [1, 1, 1]} : vector<4x16x16xf32> to vector<4x16x1xf32>
    %8 = vector.extract_strided_slice %6 {offsets = [0, 0, 1], sizes = [4, 16, 1], strides = [1, 1, 1]} : vector<4x16x16xf32> to vector<4x16x1xf32>
    %9 = tpu.concatenate %7, %8 in 2 : vector<4x16x1xf32>, vector<4x16x1xf32> -> vector<4x16x2xf32>
    %10 = vector.extract_strided_slice %6 {offsets = [0, 0, 14], sizes = [4, 16, 1], strides = [1, 1, 1]} : vector<4x16x16xf32> to vector<4x16x1xf32>
    %11 = vector.extract_strided_slice %6 {offsets = [0, 0, 13], sizes = [4, 16, 1], strides = [1, 1, 1]} : vector<4x16x16xf32> to vector<4x16x1xf32>
    %12 = tpu.concatenate %10, %11 in 2 : vector<4x16x1xf32>, vector<4x16x1xf32> -> vector<4x16x2xf32>
    %13 = tpu.concatenate %9, %6, %12 in 2 : vector<4x16x2xf32>, vector<4x16x16xf32>, vector<4x16x2xf32> -> vector<4x16x20xf32>
    %14 = arith.truncf %13 : vector<4x16x20xf32> to vector<4x16x20xbf16>
    %15 = vector.shape_cast %14 : vector<4x16x20xbf16> to vector<4x320xbf16>
    %c0_5 = arith.constant 0 : index
    %c40 = arith.constant 40 : index
    %16 = vector.load %arg8[%c0_5, %c40] : memref<8x404xbf16, #tpu.memory_space<vmem>>, vector<4x320xbf16>
    tpu.vector_store %arg8[%c0_5, %c40], %15 {strides = array<i32>} : memref<8x404xbf16, #tpu.memory_space<vmem>>, vector<4x320xbf16>,
    %17 = vector.extract_strided_slice %14 {offsets = [0, 2, 0], sizes = [4, 1, 20], strides = [1, 1, 1]} : vector<4x16x20xbf16> to vector<4x1x20xbf16>
    %18 = vector.shape_cast %17 : vector<4x1x20xbf16> to vector<4x20xbf16>
    %c0_6 = arith.constant 0 : index
    %c0_7 = arith.constant 0 : index
    %19 = vector.load %arg8[%c0_6, %c0_7] : memref<8x404xbf16, #tpu.memory_space<vmem>>, vector<4x20xbf16>
    tpu.vector_store %arg8[%c0_6, %c0_7], %18 {strides = array<i32>} : memref<8x404xbf16, #tpu.memory_space<vmem>>, vector<4x20xbf16>,
    %20 = vector.extract_strided_slice %14 {offsets = [0, 1, 0], sizes = [4, 1, 20], strides = [1, 1, 1]} : vector<4x16x20xbf16> to vector<4x1x20xbf16>
    %21 = vector.shape_cast %20 : vector<4x1x20xbf16> to vector<4x20xbf16>
    %c0_8 = arith.constant 0 : index
    %c20 = arith.constant 20 : index
    %22 = vector.load %arg8[%c0_8, %c20] : memref<8x404xbf16, #tpu.memory_space<vmem>>, vector<4x20xbf16>
    tpu.vector_store %arg8[%c0_8, %c20], %21 {strides = array<i32>} : memref<8x404xbf16, #tpu.memory_space<vmem>>, vector<4x20xbf16>,
    %23 = vector.extract_strided_slice %14 {offsets = [0, 14, 0], sizes = [4, 1, 20], strides = [1, 1, 1]} : vector<4x16x20xbf16> to vector<4x1x20xbf16>
    %24 = vector.shape_cast %23 : vector<4x1x20xbf16> to vector<4x20xbf16>
    %c0_9 = arith.constant 0 : index
    %c360 = arith.constant 360 : index
    %25 = vector.load %arg8[%c0_9, %c360] : memref<8x404xbf16, #tpu.memory_space<vmem>>, vector<4x20xbf16>
    tpu.vector_store %arg8[%c0_9, %c360], %24 {strides = array<i32>} : memref<8x404xbf16, #tpu.memory_space<vmem>>, vector<4x20xbf16>,
    %26 = vector.extract_strided_slice %14 {offsets = [0, 13, 0], sizes = [4, 1, 20], strides = [1, 1, 1]} : vector<4x16x20xbf16> to vector<4x1x20xbf16>
    %27 = vector.shape_cast %26 : vector<4x1x20xbf16> to vector<4x20xbf16>
    %c0_10 = arith.constant 0 : index
    %c380 = arith.constant 380 : index
    %28 = vector.load %arg8[%c0_10, %c380] : memref<8x404xbf16, #tpu.memory_space<vmem>>, vector<4x20xbf16>
    tpu.vector_store %arg8[%c0_10, %c380], %27 {strides = array<i32>} : memref<8x404xbf16, #tpu.memory_space<vmem>>, vector<4x20xbf16>,
    %c0_11 = arith.constant 0 : index
    %c0_12 = arith.constant 0 : index
    %29 = vector.load %arg8[%c0_11, %c0_12] : memref<8x404xbf16, #tpu.memory_space<vmem>>, vector<8x324xbf16>
    %30 = vector.extract_strided_slice %29 {offsets = [0, 0], sizes = [8, 320], strides = [1, 1]} : vector<8x324xbf16> to vector<8x320xbf16>
    %c0_13 = arith.constant 0 : index
    %c0_14 = arith.constant 0 : index
    %31 = vector.load %arg9[%c0_13, %c0_14] : memref<40x320xbf16, #tpu.memory_space<vmem>>, vector<8x320xbf16>
    tpu.vector_store %arg9[%c0_13, %c0_14], %30 {strides = array<i32>} : memref<40x320xbf16, #tpu.memory_space<vmem>>, vector<8x320xbf16>,
    %32 = vector.extract_strided_slice %29 {offsets = [0, 1], sizes = [8, 320], strides = [1, 1]} : vector<8x324xbf16> to vector<8x320xbf16>
    %c8 = arith.constant 8 : index
    %c0_15 = arith.constant 0 : index
    %33 = vector.load %arg9[%c8, %c0_15] : memref<40x320xbf16, #tpu.memory_space<vmem>>, vector<8x320xbf16>
    tpu.vector_store %arg9[%c8, %c0_15], %32 {strides = array<i32>} : memref<40x320xbf16, #tpu.memory_space<vmem>>, vector<8x320xbf16>,
    %34 = vector.extract_strided_slice %29 {offsets = [0, 2], sizes = [8, 320], strides = [1, 1]} : vector<8x324xbf16> to vector<8x320xbf16>
    %c16 = arith.constant 16 : index
    %c0_16 = arith.constant 0 : index
    %35 = vector.load %arg9[%c16, %c0_16] : memref<40x320xbf16, #tpu.memory_space<vmem>>, vector<8x320xbf16>
    tpu.vector_store %arg9[%c16, %c0_16], %34 {strides = array<i32>} : memref<40x320xbf16, #tpu.memory_space<vmem>>, vector<8x320xbf16>,
    %36 = vector.extract_strided_slice %29 {offsets = [0, 3], sizes = [8, 320], strides = [1, 1]} : vector<8x324xbf16> to vector<8x320xbf16>
    %c24 = arith.constant 24 : index
    %c0_17 = arith.constant 0 : index
    %37 = vector.load %arg9[%c24, %c0_17] : memref<40x320xbf16, #tpu.memory_space<vmem>>, vector<8x320xbf16>
    tpu.vector_store %arg9[%c24, %c0_17], %36 {strides = array<i32>} : memref<40x320xbf16, #tpu.memory_space<vmem>>, vector<8x320xbf16>,
    %38 = vector.extract_strided_slice %29 {offsets = [0, 4], sizes = [8, 320], strides = [1, 1]} : vector<8x324xbf16> to vector<8x320xbf16>
    %c32 = arith.constant 32 : index
    %c0_18 = arith.constant 0 : index
    %39 = vector.load %arg9[%c32, %c0_18] : memref<40x320xbf16, #tpu.memory_space<vmem>>, vector<8x320xbf16>
    tpu.vector_store %arg9[%c32, %c0_18], %38 {strides = array<i32>} : memref<40x320xbf16, #tpu.memory_space<vmem>>, vector<8x320xbf16>,
    %c0_19 = arith.constant 0 : index
    %c0_20 = arith.constant 0 : index
    %40 = vector.load %arg2[%c0_19, %c0_20] : memref<4x200xbf16, #tpu.memory_space<vmem>>, vector<4x40xbf16>
    %c0_21 = arith.constant 0 : index
    %c0_22 = arith.constant 0 : index
    %41 = vector.load %arg9[%c0_21, %c0_22] : memref<40x320xbf16, #tpu.memory_space<vmem>>, vector<40x320xbf16>
    %cst_23 = arith.constant dense<0.000000e+00> : vector<4x320xf32>
    %42 = tpu.matmul %40, %41, %cst_23 {dimension_numbers = #tpu.dot_dimension_numbers<[1], [0], [0], [1], [0, 0, 1, 1], [], []>} : vector<4x40xbf16>, vector<40x320xbf16>, vector<4x320xf32> -> vector<4x320xf32>
    %c0_24 = arith.constant 0 : index
    %c20_25 = arith.constant 20 : index
    %43 = vector.load %arg8[%c0_24, %c20_25] : memref<8x404xbf16, #tpu.memory_space<vmem>>, vector<8x324xbf16>
    %44 = vector.extract_strided_slice %43 {offsets = [0, 0], sizes = [8, 320], strides = [1, 1]} : vector<8x324xbf16> to vector<8x320xbf16>
    %c0_26 = arith.constant 0 : index
    %c0_27 = arith.constant 0 : index
    %45 = vector.load %arg9[%c0_26, %c0_27] : memref<40x320xbf16, #tpu.memory_space<vmem>>, vector<8x320xbf16>
    tpu.vector_store %arg9[%c0_26, %c0_27], %44 {strides = array<i32>} : memref<40x320xbf16, #tpu.memory_space<vmem>>, vector<8x320xbf16>,
    %46 = vector.extract_strided_slice %43 {offsets = [0, 1], sizes = [8, 320], strides = [1, 1]} : vector<8x324xbf16> to vector<8x320xbf16>
    %c8_28 = arith.constant 8 : index
    %c0_29 = arith.constant 0 : index
    %47 = vector.load %arg9[%c8_28, %c0_29] : memref<40x320xbf16, #tpu.memory_space<vmem>>, vector<8x320xbf16>
    tpu.vector_store %arg9[%c8_28, %c0_29], %46 {strides = array<i32>} : memref<40x320xbf16, #tpu.memory_space<vmem>>, vector<8x320xbf16>,
    %48 = vector.extract_strided_slice %43 {offsets = [0, 2], sizes = [8, 320], strides = [1, 1]} : vector<8x324xbf16> to vector<8x320xbf16>
    %c16_30 = arith.constant 16 : index
    %c0_31 = arith.constant 0 : index
    %49 = vector.load %arg9[%c16_30, %c0_31] : memref<40x320xbf16, #tpu.memory_space<vmem>>, vector<8x320xbf16>
    tpu.vector_store %arg9[%c16_30, %c0_31], %48 {strides = array<i32>} : memref<40x320xbf16, #tpu.memory_space<vmem>>, vector<8x320xbf16>,
    %50 = vector.extract_strided_slice %43 {offsets = [0, 3], sizes = [8, 320], strides = [1, 1]} : vector<8x324xbf16> to vector<8x320xbf16>
    %c24_32 = arith.constant 24 : index
    %c0_33 = arith.constant 0 : index
    %51 = vector.load %arg9[%c24_32, %c0_33] : memref<40x320xbf16, #tpu.memory_space<vmem>>, vector<8x320xbf16>
    tpu.vector_store %arg9[%c24_32, %c0_33], %50 {strides = array<i32>} : memref<40x320xbf16, #tpu.memory_space<vmem>>, vector<8x320xbf16>,
    %52 = vector.extract_strided_slice %43 {offsets = [0, 4], sizes = [8, 320], strides = [1, 1]} : vector<8x324xbf16> to vector<8x320xbf16>
    %c32_34 = arith.constant 32 : index
    %c0_35 = arith.constant 0 : index
    %53 = vector.load %arg9[%c32_34, %c0_35] : memref<40x320xbf16, #tpu.memory_space<vmem>>, vector<8x320xbf16>
    tpu.vector_store %arg9[%c32_34, %c0_35], %52 {strides = array<i32>} : memref<40x320xbf16, #tpu.memory_space<vmem>>, vector<8x320xbf16>,
    %c0_36 = arith.constant 0 : index
    %c40_37 = arith.constant 40 : index
    %54 = vector.load %arg2[%c0_36, %c40_37] : memref<4x200xbf16, #tpu.memory_space<vmem>>, vector<4x40xbf16>
    %c0_38 = arith.constant 0 : index
    %c0_39 = arith.constant 0 : index
    %55 = vector.load %arg9[%c0_38, %c0_39] : memref<40x320xbf16, #tpu.memory_space<vmem>>, vector<40x320xbf16>
    %cst_40 = arith.constant dense<0.000000e+00> : vector<4x320xf32>
    %56 = tpu.matmul %54, %55, %cst_40 {dimension_numbers = #tpu.dot_dimension_numbers<[1], [0], [0], [1], [0, 0, 1, 1], [], []>} : vector<4x40xbf16>, vector<40x320xbf16>, vector<4x320xf32> -> vector<4x320xf32>
    %57 = arith.addf %42, %56 : vector<4x320xf32>
    %c0_41 = arith.constant 0 : index
    %c40_42 = arith.constant 40 : index
    %58 = vector.load %arg8[%c0_41, %c40_42] : memref<8x404xbf16, #tpu.memory_space<vmem>>, vector<8x324xbf16>
    %59 = vector.extract_strided_slice %58 {offsets = [0, 0], sizes = [8, 320], strides = [1, 1]} : vector<8x324xbf16> to vector<8x320xbf16>
    %c0_43 = arith.constant 0 : index
    %c0_44 = arith.constant 0 : index
    %60 = vector.load %arg9[%c0_43, %c0_44] : memref<40x320xbf16, #tpu.memory_space<vmem>>, vector<8x320xbf16>
    tpu.vector_store %arg9[%c0_43, %c0_44], %59 {strides = array<i32>} : memref<40x320xbf16, #tpu.memory_space<vmem>>, vector<8x320xbf16>,
    %61 = vector.extract_strided_slice %58 {offsets = [0, 1], sizes = [8, 320], strides = [1, 1]} : vector<8x324xbf16> to vector<8x320xbf16>
    %c8_45 = arith.constant 8 : index
    %c0_46 = arith.constant 0 : index
    %62 = vector.load %arg9[%c8_45, %c0_46] : memref<40x320xbf16, #tpu.memory_space<vmem>>, vector<8x320xbf16>
    tpu.vector_store %arg9[%c8_45, %c0_46], %61 {strides = array<i32>} : memref<40x320xbf16, #tpu.memory_space<vmem>>, vector<8x320xbf16>,
    %63 = vector.extract_strided_slice %58 {offsets = [0, 2], sizes = [8, 320], strides = [1, 1]} : vector<8x324xbf16> to vector<8x320xbf16>
    %c16_47 = arith.constant 16 : index
    %c0_48 = arith.constant 0 : index
    %64 = vector.load %arg9[%c16_47, %c0_48] : memref<40x320xbf16, #tpu.memory_space<vmem>>, vector<8x320xbf16>
    tpu.vector_store %arg9[%c16_47, %c0_48], %63 {strides = array<i32>} : memref<40x320xbf16, #tpu.memory_space<vmem>>, vector<8x320xbf16>,
    %65 = vector.extract_strided_slice %58 {offsets = [0, 3], sizes = [8, 320], strides = [1, 1]} : vector<8x324xbf16> to vector<8x320xbf16>
    %c24_49 = arith.constant 24 : index
    %c0_50 = arith.constant 0 : index
    %66 = vector.load %arg9[%c24_49, %c0_50] : memref<40x320xbf16, #tpu.memory_space<vmem>>, vector<8x320xbf16>
    tpu.vector_store %arg9[%c24_49, %c0_50], %65 {strides = array<i32>} : memref<40x320xbf16, #tpu.memory_space<vmem>>, vector<8x320xbf16>,
    %67 = vector.extract_strided_slice %58 {offsets = [0, 4], sizes = [8, 320], strides = [1, 1]} : vector<8x324xbf16> to vector<8x320xbf16>
    %c32_51 = arith.constant 32 : index
    %c0_52 = arith.constant 0 : index
    %68 = vector.load %arg9[%c32_51, %c0_52] : memref<40x320xbf16, #tpu.memory_space<vmem>>, vector<8x320xbf16>
    tpu.vector_store %arg9[%c32_51, %c0_52], %67 {strides = array<i32>} : memref<40x320xbf16, #tpu.memory_space<vmem>>, vector<8x320xbf16>,
    %c0_53 = arith.constant 0 : index
    %c80 = arith.constant 80 : index
    %69 = vector.load %arg2[%c0_53, %c80] : memref<4x200xbf16, #tpu.memory_space<vmem>>, vector<4x40xbf16>
    %c0_54 = arith.constant 0 : index
    %c0_55 = arith.constant 0 : index
    %70 = vector.load %arg9[%c0_54, %c0_55] : memref<40x320xbf16, #tpu.memory_space<vmem>>, vector<40x320xbf16>
    %cst_56 = arith.constant dense<0.000000e+00> : vector<4x320xf32>
    %71 = tpu.matmul %69, %70, %cst_56 {dimension_numbers = #tpu.dot_dimension_numbers<[1], [0], [0], [1], [0, 0, 1, 1], [], []>} : vector<4x40xbf16>, vector<40x320xbf16>, vector<4x320xf32> -> vector<4x320xf32>
    %72 = arith.addf %57, %71 : vector<4x320xf32>
    %c0_57 = arith.constant 0 : index
    %c60 = arith.constant 60 : index
    %73 = vector.load %arg8[%c0_57, %c60] : memref<8x404xbf16, #tpu.memory_space<vmem>>, vector<8x324xbf16>
    %74 = vector.extract_strided_slice %73 {offsets = [0, 0], sizes = [8, 320], strides = [1, 1]} : vector<8x324xbf16> to vector<8x320xbf16>
    %c0_58 = arith.constant 0 : index
    %c0_59 = arith.constant 0 : index
    %75 = vector.load %arg9[%c0_58, %c0_59] : memref<40x320xbf16, #tpu.memory_space<vmem>>, vector<8x320xbf16>
    tpu.vector_store %arg9[%c0_58, %c0_59], %74 {strides = array<i32>} : memref<40x320xbf16, #tpu.memory_space<vmem>>, vector<8x320xbf16>,
    %76 = vector.extract_strided_slice %73 {offsets = [0, 1], sizes = [8, 320], strides = [1, 1]} : vector<8x324xbf16> to vector<8x320xbf16>
    %c8_60 = arith.constant 8 : index
    %c0_61 = arith.constant 0 : index
    %77 = vector.load %arg9[%c8_60, %c0_61] : memref<40x320xbf16, #tpu.memory_space<vmem>>, vector<8x320xbf16>
    tpu.vector_store %arg9[%c8_60, %c0_61], %76 {strides = array<i32>} : memref<40x320xbf16, #tpu.memory_space<vmem>>, vector<8x320xbf16>,
    %78 = vector.extract_strided_slice %73 {offsets = [0, 2], sizes = [8, 320], strides = [1, 1]} : vector<8x324xbf16> to vector<8x320xbf16>
    %c16_62 = arith.constant 16 : index
    %c0_63 = arith.constant 0 : index
    %79 = vector.load %arg9[%c16_62, %c0_63] : memref<40x320xbf16, #tpu.memory_space<vmem>>, vector<8x320xbf16>
    tpu.vector_store %arg9[%c16_62, %c0_63], %78 {strides = array<i32>} : memref<40x320xbf16, #tpu.memory_space<vmem>>, vector<8x320xbf16>,
    %80 = vector.extract_strided_slice %73 {offsets = [0, 3], sizes = [8, 320], strides = [1, 1]} : vector<8x324xbf16> to vector<8x320xbf16>
    %c24_64 = arith.constant 24 : index
    %c0_65 = arith.constant 0 : index
    %81 = vector.load %arg9[%c24_64, %c0_65] : memref<40x320xbf16, #tpu.memory_space<vmem>>, vector<8x320xbf16>
    tpu.vector_store %arg9[%c24_64, %c0_65], %80 {strides = array<i32>} : memref<40x320xbf16, #tpu.memory_space<vmem>>, vector<8x320xbf16>,
    %82 = vector.extract_strided_slice %73 {offsets = [0, 4], sizes = [8, 320], strides = [1, 1]} : vector<8x324xbf16> to vector<8x320xbf16>
    %c32_66 = arith.constant 32 : index
    %c0_67 = arith.constant 0 : index
    %83 = vector.load %arg9[%c32_66, %c0_67] : memref<40x320xbf16, #tpu.memory_space<vmem>>, vector<8x320xbf16>
    tpu.vector_store %arg9[%c32_66, %c0_67], %82 {strides = array<i32>} : memref<40x320xbf16, #tpu.memory_space<vmem>>, vector<8x320xbf16>,
    %c0_68 = arith.constant 0 : index
    %c120 = arith.constant 120 : index
    %84 = vector.load %arg2[%c0_68, %c120] : memref<4x200xbf16, #tpu.memory_space<vmem>>, vector<4x40xbf16>
    %c0_69 = arith.constant 0 : index
    %c0_70 = arith.constant 0 : index
    %85 = vector.load %arg9[%c0_69, %c0_70] : memref<40x320xbf16, #tpu.memory_space<vmem>>, vector<40x320xbf16>
    %cst_71 = arith.constant dense<0.000000e+00> : vector<4x320xf32>
    %86 = tpu.matmul %84, %85, %cst_71 {dimension_numbers = #tpu.dot_dimension_numbers<[1], [0], [0], [1], [0, 0, 1, 1], [], []>} : vector<4x40xbf16>, vector<40x320xbf16>, vector<4x320xf32> -> vector<4x320xf32>
    %87 = arith.addf %72, %86 : vector<4x320xf32>
    %c0_72 = arith.constant 0 : index
    %c80_73 = arith.constant 80 : index
    %88 = vector.load %arg8[%c0_72, %c80_73] : memref<8x404xbf16, #tpu.memory_space<vmem>>, vector<8x324xbf16>
    %89 = vector.extract_strided_slice %88 {offsets = [0, 0], sizes = [8, 320], strides = [1, 1]} : vector<8x324xbf16> to vector<8x320xbf16>
    %c0_74 = arith.constant 0 : index
    %c0_75 = arith.constant 0 : index
    %90 = vector.load %arg9[%c0_74, %c0_75] : memref<40x320xbf16, #tpu.memory_space<vmem>>, vector<8x320xbf16>
    tpu.vector_store %arg9[%c0_74, %c0_75], %89 {strides = array<i32>} : memref<40x320xbf16, #tpu.memory_space<vmem>>, vector<8x320xbf16>,
    %91 = vector.extract_strided_slice %88 {offsets = [0, 1], sizes = [8, 320], strides = [1, 1]} : vector<8x324xbf16> to vector<8x320xbf16>
    %c8_76 = arith.constant 8 : index
    %c0_77 = arith.constant 0 : index
    %92 = vector.load %arg9[%c8_76, %c0_77] : memref<40x320xbf16, #tpu.memory_space<vmem>>, vector<8x320xbf16>
    tpu.vector_store %arg9[%c8_76, %c0_77], %91 {strides = array<i32>} : memref<40x320xbf16, #tpu.memory_space<vmem>>, vector<8x320xbf16>,
    %93 = vector.extract_strided_slice %88 {offsets = [0, 2], sizes = [8, 320], strides = [1, 1]} : vector<8x324xbf16> to vector<8x320xbf16>
    %c16_78 = arith.constant 16 : index
    %c0_79 = arith.constant 0 : index
    %94 = vector.load %arg9[%c16_78, %c0_79] : memref<40x320xbf16, #tpu.memory_space<vmem>>, vector<8x320xbf16>
    tpu.vector_store %arg9[%c16_78, %c0_79], %93 {strides = array<i32>} : memref<40x320xbf16, #tpu.memory_space<vmem>>, vector<8x320xbf16>,
    %95 = vector.extract_strided_slice %88 {offsets = [0, 3], sizes = [8, 320], strides = [1, 1]} : vector<8x324xbf16> to vector<8x320xbf16>
    %c24_80 = arith.constant 24 : index
    %c0_81 = arith.constant 0 : index
    %96 = vector.load %arg9[%c24_80, %c0_81] : memref<40x320xbf16, #tpu.memory_space<vmem>>, vector<8x320xbf16>
    tpu.vector_store %arg9[%c24_80, %c0_81], %95 {strides = array<i32>} : memref<40x320xbf16, #tpu.memory_space<vmem>>, vector<8x320xbf16>,
    %97 = vector.extract_strided_slice %88 {offsets = [0, 4], sizes = [8, 320], strides = [1, 1]} : vector<8x324xbf16> to vector<8x320xbf16>
    %c32_82 = arith.constant 32 : index
    %c0_83 = arith.constant 0 : index
    %98 = vector.load %arg9[%c32_82, %c0_83] : memref<40x320xbf16, #tpu.memory_space<vmem>>, vector<8x320xbf16>
    tpu.vector_store %arg9[%c32_82, %c0_83], %97 {strides = array<i32>} : memref<40x320xbf16, #tpu.memory_space<vmem>>, vector<8x320xbf16>,
    %c0_84 = arith.constant 0 : index
    %c160 = arith.constant 160 : index
    %99 = vector.load %arg2[%c0_84, %c160] : memref<4x200xbf16, #tpu.memory_space<vmem>>, vector<4x40xbf16>
    %c0_85 = arith.constant 0 : index
    %c0_86 = arith.constant 0 : index
    %100 = vector.load %arg9[%c0_85, %c0_86] : memref<40x320xbf16, #tpu.memory_space<vmem>>, vector<40x320xbf16>
    %cst_87 = arith.constant dense<0.000000e+00> : vector<4x320xf32>
    %101 = tpu.matmul %99, %100, %cst_87 {dimension_numbers = #tpu.dot_dimension_numbers<[1], [0], [0], [1], [0, 0, 1, 1], [], []>} : vector<4x40xbf16>, vector<40x320xbf16>, vector<4x320xf32> -> vector<4x320xf32>
    %102 = arith.addf %87, %101 : vector<4x320xf32>
    %103 = vector.shape_cast %102 : vector<4x320xf32> to vector<4x16x20xf32>
    %104 = vector.extract_strided_slice %103 {offsets = [0, 0, 0], sizes = [4, 16, 16], strides = [1, 1, 1]} : vector<4x16x20xf32> to vector<4x16x16xf32>
    %105 = vector.shape_cast %104 : vector<4x16x16xf32> to vector<4x256xf32>
    %c0_88 = arith.constant 0 : index
    %c0_89 = arith.constant 0 : index
    %106 = vector.load %arg3[%c0_88, %c0_89] : memref<4x1xf32, #tpu.memory_space<vmem>>, vector<4x1xf32>
    %107 = vector.broadcast %106 : vector<4x1xf32> to vector<4x256xf32>
    %108 = arith.addf %105, %107 : vector<4x256xf32>
    %cst_90 = arith.constant dense<0.000000e+00> : vector<4xf32>
    %109 = vector.multi_reduction <add>, %108, %cst_90 [1] : vector<4x256xf32> to vector<4xf32>
    %110 = vector.shape_cast %109 : vector<4xf32> to vector<4x1xf32>
    %cst_91 = arith.constant 3.906250e-03 : f32
    %111 = vector.broadcast %cst_91 : f32 to vector<4x1xf32>
    %112 = arith.mulf %110, %111 : vector<4x1xf32>
    %113 = vector.broadcast %112 : vector<4x1xf32> to vector<4x256xf32>
    %114 = arith.subf %108, %113 : vector<4x256xf32>
    %115 = arith.mulf %114, %114 : vector<4x256xf32>
    %cst_92 = arith.constant dense<0.000000e+00> : vector<4xf32>
    %116 = vector.multi_reduction <add>, %115, %cst_92 [1] : vector<4x256xf32> to vector<4xf32>
    %117 = vector.shape_cast %116 : vector<4xf32> to vector<4x1xf32>
    %cst_93 = arith.constant 3.906250e-03 : f32
    %118 = vector.broadcast %cst_93 : f32 to vector<4x1xf32>
    %119 = arith.mulf %117, %118 : vector<4x1xf32>
    %cst_94 = arith.constant 9.99999974E-6 : f32
    %120 = vector.broadcast %cst_94 : f32 to vector<4x1xf32>
    %121 = arith.addf %119, %120 : vector<4x1xf32>
    %122 = math.rsqrt %121 : vector<4x1xf32>
    %123 = vector.broadcast %122 : vector<4x1xf32> to vector<4x256xf32>
    %124 = arith.mulf %114, %123 : vector<4x256xf32>
    %cst_95 = arith.constant 0.000000e+00 : f32
    %125 = vector.broadcast %cst_95 : f32 to vector<4x256xf32>
    %126 = arith.maximumf %124, %125 : vector<4x256xf32>
    %127 = vector.shape_cast %126 : vector<4x256xf32> to vector<4x16x16xf32>
    %128 = vector.extract_strided_slice %127 {offsets = [0, 0, 2], sizes = [4, 16, 1], strides = [1, 1, 1]} : vector<4x16x16xf32> to vector<4x16x1xf32>
    %129 = vector.extract_strided_slice %127 {offsets = [0, 0, 1], sizes = [4, 16, 1], strides = [1, 1, 1]} : vector<4x16x16xf32> to vector<4x16x1xf32>
    %130 = tpu.concatenate %128, %129 in 2 : vector<4x16x1xf32>, vector<4x16x1xf32> -> vector<4x16x2xf32>
    %131 = vector.extract_strided_slice %127 {offsets = [0, 0, 14], sizes = [4, 16, 1], strides = [1, 1, 1]} : vector<4x16x16xf32> to vector<4x16x1xf32>
    %132 = vector.extract_strided_slice %127 {offsets = [0, 0, 13], sizes = [4, 16, 1], strides = [1, 1, 1]} : vector<4x16x16xf32> to vector<4x16x1xf32>
    %133 = tpu.concatenate %131, %132 in 2 : vector<4x16x1xf32>, vector<4x16x1xf32> -> vector<4x16x2xf32>
    %134 = tpu.concatenate %130, %127, %133 in 2 : vector<4x16x2xf32>, vector<4x16x16xf32>, vector<4x16x2xf32> -> vector<4x16x20xf32>
    %135 = arith.truncf %134 : vector<4x16x20xf32> to vector<4x16x20xbf16>
    %136 = vector.shape_cast %135 : vector<4x16x20xbf16> to vector<4x320xbf16>
    %c0_96 = arith.constant 0 : index
    %c40_97 = arith.constant 40 : index
    %137 = vector.load %arg8[%c0_96, %c40_97] : memref<8x404xbf16, #tpu.memory_space<vmem>>, vector<4x320xbf16>
    tpu.vector_store %arg8[%c0_96, %c40_97], %136 {strides = array<i32>} : memref<8x404xbf16, #tpu.memory_space<vmem>>, vector<4x320xbf16>,
    %138 = vector.extract_strided_slice %135 {offsets = [0, 2, 0], sizes = [4, 1, 20], strides = [1, 1, 1]} : vector<4x16x20xbf16> to vector<4x1x20xbf16>
    %139 = vector.shape_cast %138 : vector<4x1x20xbf16> to vector<4x20xbf16>
    %c0_98 = arith.constant 0 : index
    %c0_99 = arith.constant 0 : index
    %140 = vector.load %arg8[%c0_98, %c0_99] : memref<8x404xbf16, #tpu.memory_space<vmem>>, vector<4x20xbf16>
    tpu.vector_store %arg8[%c0_98, %c0_99], %139 {strides = array<i32>} : memref<8x404xbf16, #tpu.memory_space<vmem>>, vector<4x20xbf16>,
    %141 = vector.extract_strided_slice %135 {offsets = [0, 1, 0], sizes = [4, 1, 20], strides = [1, 1, 1]} : vector<4x16x20xbf16> to vector<4x1x20xbf16>
    %142 = vector.shape_cast %141 : vector<4x1x20xbf16> to vector<4x20xbf16>
    %c0_100 = arith.constant 0 : index
    %c20_101 = arith.constant 20 : index
    %143 = vector.load %arg8[%c0_100, %c20_101] : memref<8x404xbf16, #tpu.memory_space<vmem>>, vector<4x20xbf16>
    tpu.vector_store %arg8[%c0_100, %c20_101], %142 {strides = array<i32>} : memref<8x404xbf16, #tpu.memory_space<vmem>>, vector<4x20xbf16>,
    %144 = vector.extract_strided_slice %135 {offsets = [0, 14, 0], sizes = [4, 1, 20], strides = [1, 1, 1]} : vector<4x16x20xbf16> to vector<4x1x20xbf16>
    %145 = vector.shape_cast %144 : vector<4x1x20xbf16> to vector<4x20xbf16>
    %c0_102 = arith.constant 0 : index
    %c360_103 = arith.constant 360 : index
    %146 = vector.load %arg8[%c0_102, %c360_103] : memref<8x404xbf16, #tpu.memory_space<vmem>>, vector<4x20xbf16>
    tpu.vector_store %arg8[%c0_102, %c360_103], %145 {strides = array<i32>} : memref<8x404xbf16, #tpu.memory_space<vmem>>, vector<4x20xbf16>,
    %147 = vector.extract_strided_slice %135 {offsets = [0, 13, 0], sizes = [4, 1, 20], strides = [1, 1, 1]} : vector<4x16x20xbf16> to vector<4x1x20xbf16>
    %148 = vector.shape_cast %147 : vector<4x1x20xbf16> to vector<4x20xbf16>
    %c0_104 = arith.constant 0 : index
    %c380_105 = arith.constant 380 : index
    %149 = vector.load %arg8[%c0_104, %c380_105] : memref<8x404xbf16, #tpu.memory_space<vmem>>, vector<4x20xbf16>
    tpu.vector_store %arg8[%c0_104, %c380_105], %148 {strides = array<i32>} : memref<8x404xbf16, #tpu.memory_space<vmem>>, vector<4x20xbf16>,
    %c0_106 = arith.constant 0 : index
    %c0_107 = arith.constant 0 : index
    %150 = vector.load %arg8[%c0_106, %c0_107] : memref<8x404xbf16, #tpu.memory_space<vmem>>, vector<8x324xbf16>
    %151 = vector.extract_strided_slice %150 {offsets = [0, 0], sizes = [8, 320], strides = [1, 1]} : vector<8x324xbf16> to vector<8x320xbf16>
    %c0_108 = arith.constant 0 : index
    %c0_109 = arith.constant 0 : index
    %152 = vector.load %arg9[%c0_108, %c0_109] : memref<40x320xbf16, #tpu.memory_space<vmem>>, vector<8x320xbf16>
    tpu.vector_store %arg9[%c0_108, %c0_109], %151 {strides = array<i32>} : memref<40x320xbf16, #tpu.memory_space<vmem>>, vector<8x320xbf16>,
    %153 = vector.extract_strided_slice %150 {offsets = [0, 1], sizes = [8, 320], strides = [1, 1]} : vector<8x324xbf16> to vector<8x320xbf16>
    %c8_110 = arith.constant 8 : index
    %c0_111 = arith.constant 0 : index
    %154 = vector.load %arg9[%c8_110, %c0_111] : memref<40x320xbf16, #tpu.memory_space<vmem>>, vector<8x320xbf16>
    tpu.vector_store %arg9[%c8_110, %c0_111], %153 {strides = array<i32>} : memref<40x320xbf16, #tpu.memory_space<vmem>>, vector<8x320xbf16>,
    %155 = vector.extract_strided_slice %150 {offsets = [0, 2], sizes = [8, 320], strides = [1, 1]} : vector<8x324xbf16> to vector<8x320xbf16>
    %c16_112 = arith.constant 16 : index
    %c0_113 = arith.constant 0 : index
    %156 = vector.load %arg9[%c16_112, %c0_113] : memref<40x320xbf16, #tpu.memory_space<vmem>>, vector<8x320xbf16>
    tpu.vector_store %arg9[%c16_112, %c0_113], %155 {strides = array<i32>} : memref<40x320xbf16, #tpu.memory_space<vmem>>, vector<8x320xbf16>,
    %157 = vector.extract_strided_slice %150 {offsets = [0, 3], sizes = [8, 320], strides = [1, 1]} : vector<8x324xbf16> to vector<8x320xbf16>
    %c24_114 = arith.constant 24 : index
    %c0_115 = arith.constant 0 : index
    %158 = vector.load %arg9[%c24_114, %c0_115] : memref<40x320xbf16, #tpu.memory_space<vmem>>, vector<8x320xbf16>
    tpu.vector_store %arg9[%c24_114, %c0_115], %157 {strides = array<i32>} : memref<40x320xbf16, #tpu.memory_space<vmem>>, vector<8x320xbf16>,
    %159 = vector.extract_strided_slice %150 {offsets = [0, 4], sizes = [8, 320], strides = [1, 1]} : vector<8x324xbf16> to vector<8x320xbf16>
    %c32_116 = arith.constant 32 : index
    %c0_117 = arith.constant 0 : index
    %160 = vector.load %arg9[%c32_116, %c0_117] : memref<40x320xbf16, #tpu.memory_space<vmem>>, vector<8x320xbf16>
    tpu.vector_store %arg9[%c32_116, %c0_117], %159 {strides = array<i32>} : memref<40x320xbf16, #tpu.memory_space<vmem>>, vector<8x320xbf16>,
    %c0_118 = arith.constant 0 : index
    %c0_119 = arith.constant 0 : index
    %161 = vector.load %arg4[%c0_118, %c0_119] : memref<4x200xbf16, #tpu.memory_space<vmem>>, vector<4x40xbf16>
    %c0_120 = arith.constant 0 : index
    %c0_121 = arith.constant 0 : index
    %162 = vector.load %arg9[%c0_120, %c0_121] : memref<40x320xbf16, #tpu.memory_space<vmem>>, vector<40x320xbf16>
    %cst_122 = arith.constant dense<0.000000e+00> : vector<4x320xf32>
    %163 = tpu.matmul %161, %162, %cst_122 {dimension_numbers = #tpu.dot_dimension_numbers<[1], [0], [0], [1], [0, 0, 1, 1], [], []>} : vector<4x40xbf16>, vector<40x320xbf16>, vector<4x320xf32> -> vector<4x320xf32>
    %c0_123 = arith.constant 0 : index
    %c20_124 = arith.constant 20 : index
    %164 = vector.load %arg8[%c0_123, %c20_124] : memref<8x404xbf16, #tpu.memory_space<vmem>>, vector<8x324xbf16>
    %165 = vector.extract_strided_slice %164 {offsets = [0, 0], sizes = [8, 320], strides = [1, 1]} : vector<8x324xbf16> to vector<8x320xbf16>
    %c0_125 = arith.constant 0 : index
    %c0_126 = arith.constant 0 : index
    %166 = vector.load %arg9[%c0_125, %c0_126] : memref<40x320xbf16, #tpu.memory_space<vmem>>, vector<8x320xbf16>
    tpu.vector_store %arg9[%c0_125, %c0_126], %165 {strides = array<i32>} : memref<40x320xbf16, #tpu.memory_space<vmem>>, vector<8x320xbf16>,
    %167 = vector.extract_strided_slice %164 {offsets = [0, 1], sizes = [8, 320], strides = [1, 1]} : vector<8x324xbf16> to vector<8x320xbf16>
    %c8_127 = arith.constant 8 : index
    %c0_128 = arith.constant 0 : index
    %168 = vector.load %arg9[%c8_127, %c0_128] : memref<40x320xbf16, #tpu.memory_space<vmem>>, vector<8x320xbf16>
    tpu.vector_store %arg9[%c8_127, %c0_128], %167 {strides = array<i32>} : memref<40x320xbf16, #tpu.memory_space<vmem>>, vector<8x320xbf16>,
    %169 = vector.extract_strided_slice %164 {offsets = [0, 2], sizes = [8, 320], strides = [1, 1]} : vector<8x324xbf16> to vector<8x320xbf16>
    %c16_129 = arith.constant 16 : index
    %c0_130 = arith.constant 0 : index
    %170 = vector.load %arg9[%c16_129, %c0_130] : memref<40x320xbf16, #tpu.memory_space<vmem>>, vector<8x320xbf16>
    tpu.vector_store %arg9[%c16_129, %c0_130], %169 {strides = array<i32>} : memref<40x320xbf16, #tpu.memory_space<vmem>>, vector<8x320xbf16>,
    %171 = vector.extract_strided_slice %164 {offsets = [0, 3], sizes = [8, 320], strides = [1, 1]} : vector<8x324xbf16> to vector<8x320xbf16>
    %c24_131 = arith.constant 24 : index
    %c0_132 = arith.constant 0 : index
    %172 = vector.load %arg9[%c24_131, %c0_132] : memref<40x320xbf16, #tpu.memory_space<vmem>>, vector<8x320xbf16>
    tpu.vector_store %arg9[%c24_131, %c0_132], %171 {strides = array<i32>} : memref<40x320xbf16, #tpu.memory_space<vmem>>, vector<8x320xbf16>,
    %173 = vector.extract_strided_slice %164 {offsets = [0, 4], sizes = [8, 320], strides = [1, 1]} : vector<8x324xbf16> to vector<8x320xbf16>
    %c32_133 = arith.constant 32 : index
    %c0_134 = arith.constant 0 : index
    %174 = vector.load %arg9[%c32_133, %c0_134] : memref<40x320xbf16, #tpu.memory_space<vmem>>, vector<8x320xbf16>
    tpu.vector_store %arg9[%c32_133, %c0_134], %173 {strides = array<i32>} : memref<40x320xbf16, #tpu.memory_space<vmem>>, vector<8x320xbf16>,
    %c0_135 = arith.constant 0 : index
    %c40_136 = arith.constant 40 : index
    %175 = vector.load %arg4[%c0_135, %c40_136] : memref<4x200xbf16, #tpu.memory_space<vmem>>, vector<4x40xbf16>
    %c0_137 = arith.constant 0 : index
    %c0_138 = arith.constant 0 : index
    %176 = vector.load %arg9[%c0_137, %c0_138] : memref<40x320xbf16, #tpu.memory_space<vmem>>, vector<40x320xbf16>
    %cst_139 = arith.constant dense<0.000000e+00> : vector<4x320xf32>
    %177 = tpu.matmul %175, %176, %cst_139 {dimension_numbers = #tpu.dot_dimension_numbers<[1], [0], [0], [1], [0, 0, 1, 1], [], []>} : vector<4x40xbf16>, vector<40x320xbf16>, vector<4x320xf32> -> vector<4x320xf32>
    %178 = arith.addf %163, %177 : vector<4x320xf32>
    %c0_140 = arith.constant 0 : index
    %c40_141 = arith.constant 40 : index
    %179 = vector.load %arg8[%c0_140, %c40_141] : memref<8x404xbf16, #tpu.memory_space<vmem>>, vector<8x324xbf16>
    %180 = vector.extract_strided_slice %179 {offsets = [0, 0], sizes = [8, 320], strides = [1, 1]} : vector<8x324xbf16> to vector<8x320xbf16>
    %c0_142 = arith.constant 0 : index
    %c0_143 = arith.constant 0 : index
    %181 = vector.load %arg9[%c0_142, %c0_143] : memref<40x320xbf16, #tpu.memory_space<vmem>>, vector<8x320xbf16>
    tpu.vector_store %arg9[%c0_142, %c0_143], %180 {strides = array<i32>} : memref<40x320xbf16, #tpu.memory_space<vmem>>, vector<8x320xbf16>,
    %182 = vector.extract_strided_slice %179 {offsets = [0, 1], sizes = [8, 320], strides = [1, 1]} : vector<8x324xbf16> to vector<8x320xbf16>
    %c8_144 = arith.constant 8 : index
    %c0_145 = arith.constant 0 : index
    %183 = vector.load %arg9[%c8_144, %c0_145] : memref<40x320xbf16, #tpu.memory_space<vmem>>, vector<8x320xbf16>
    tpu.vector_store %arg9[%c8_144, %c0_145], %182 {strides = array<i32>} : memref<40x320xbf16, #tpu.memory_space<vmem>>, vector<8x320xbf16>,
    %184 = vector.extract_strided_slice %179 {offsets = [0, 2], sizes = [8, 320], strides = [1, 1]} : vector<8x324xbf16> to vector<8x320xbf16>
    %c16_146 = arith.constant 16 : index
    %c0_147 = arith.constant 0 : index
    %185 = vector.load %arg9[%c16_146, %c0_147] : memref<40x320xbf16, #tpu.memory_space<vmem>>, vector<8x320xbf16>
    tpu.vector_store %arg9[%c16_146, %c0_147], %184 {strides = array<i32>} : memref<40x320xbf16, #tpu.memory_space<vmem>>, vector<8x320xbf16>,
    %186 = vector.extract_strided_slice %179 {offsets = [0, 3], sizes = [8, 320], strides = [1, 1]} : vector<8x324xbf16> to vector<8x320xbf16>
    %c24_148 = arith.constant 24 : index
    %c0_149 = arith.constant 0 : index
    %187 = vector.load %arg9[%c24_148, %c0_149] : memref<40x320xbf16, #tpu.memory_space<vmem>>, vector<8x320xbf16>
    tpu.vector_store %arg9[%c24_148, %c0_149], %186 {strides = array<i32>} : memref<40x320xbf16, #tpu.memory_space<vmem>>, vector<8x320xbf16>,
    %188 = vector.extract_strided_slice %179 {offsets = [0, 4], sizes = [8, 320], strides = [1, 1]} : vector<8x324xbf16> to vector<8x320xbf16>
    %c32_150 = arith.constant 32 : index
    %c0_151 = arith.constant 0 : index
    %189 = vector.load %arg9[%c32_150, %c0_151] : memref<40x320xbf16, #tpu.memory_space<vmem>>, vector<8x320xbf16>
    tpu.vector_store %arg9[%c32_150, %c0_151], %188 {strides = array<i32>} : memref<40x320xbf16, #tpu.memory_space<vmem>>, vector<8x320xbf16>,
    %c0_152 = arith.constant 0 : index
    %c80_153 = arith.constant 80 : index
    %190 = vector.load %arg4[%c0_152, %c80_153] : memref<4x200xbf16, #tpu.memory_space<vmem>>, vector<4x40xbf16>
    %c0_154 = arith.constant 0 : index
    %c0_155 = arith.constant 0 : index
    %191 = vector.load %arg9[%c0_154, %c0_155] : memref<40x320xbf16, #tpu.memory_space<vmem>>, vector<40x320xbf16>
    %cst_156 = arith.constant dense<0.000000e+00> : vector<4x320xf32>
    %192 = tpu.matmul %190, %191, %cst_156 {dimension_numbers = #tpu.dot_dimension_numbers<[1], [0], [0], [1], [0, 0, 1, 1], [], []>} : vector<4x40xbf16>, vector<40x320xbf16>, vector<4x320xf32> -> vector<4x320xf32>
    %193 = arith.addf %178, %192 : vector<4x320xf32>
    %c0_157 = arith.constant 0 : index
    %c60_158 = arith.constant 60 : index
    %194 = vector.load %arg8[%c0_157, %c60_158] : memref<8x404xbf16, #tpu.memory_space<vmem>>, vector<8x324xbf16>
    %195 = vector.extract_strided_slice %194 {offsets = [0, 0], sizes = [8, 320], strides = [1, 1]} : vector<8x324xbf16> to vector<8x320xbf16>
    %c0_159 = arith.constant 0 : index
    %c0_160 = arith.constant 0 : index
    %196 = vector.load %arg9[%c0_159, %c0_160] : memref<40x320xbf16, #tpu.memory_space<vmem>>, vector<8x320xbf16>
    tpu.vector_store %arg9[%c0_159, %c0_160], %195 {strides = array<i32>} : memref<40x320xbf16, #tpu.memory_space<vmem>>, vector<8x320xbf16>,
    %197 = vector.extract_strided_slice %194 {offsets = [0, 1], sizes = [8, 320], strides = [1, 1]} : vector<8x324xbf16> to vector<8x320xbf16>
    %c8_161 = arith.constant 8 : index
    %c0_162 = arith.constant 0 : index
    %198 = vector.load %arg9[%c8_161, %c0_162] : memref<40x320xbf16, #tpu.memory_space<vmem>>, vector<8x320xbf16>
    tpu.vector_store %arg9[%c8_161, %c0_162], %197 {strides = array<i32>} : memref<40x320xbf16, #tpu.memory_space<vmem>>, vector<8x320xbf16>,
    %199 = vector.extract_strided_slice %194 {offsets = [0, 2], sizes = [8, 320], strides = [1, 1]} : vector<8x324xbf16> to vector<8x320xbf16>
    %c16_163 = arith.constant 16 : index
    %c0_164 = arith.constant 0 : index
    %200 = vector.load %arg9[%c16_163, %c0_164] : memref<40x320xbf16, #tpu.memory_space<vmem>>, vector<8x320xbf16>
    tpu.vector_store %arg9[%c16_163, %c0_164], %199 {strides = array<i32>} : memref<40x320xbf16, #tpu.memory_space<vmem>>, vector<8x320xbf16>,
    %201 = vector.extract_strided_slice %194 {offsets = [0, 3], sizes = [8, 320], strides = [1, 1]} : vector<8x324xbf16> to vector<8x320xbf16>
    %c24_165 = arith.constant 24 : index
    %c0_166 = arith.constant 0 : index
    %202 = vector.load %arg9[%c24_165, %c0_166] : memref<40x320xbf16, #tpu.memory_space<vmem>>, vector<8x320xbf16>
    tpu.vector_store %arg9[%c24_165, %c0_166], %201 {strides = array<i32>} : memref<40x320xbf16, #tpu.memory_space<vmem>>, vector<8x320xbf16>,
    %203 = vector.extract_strided_slice %194 {offsets = [0, 4], sizes = [8, 320], strides = [1, 1]} : vector<8x324xbf16> to vector<8x320xbf16>
    %c32_167 = arith.constant 32 : index
    %c0_168 = arith.constant 0 : index
    %204 = vector.load %arg9[%c32_167, %c0_168] : memref<40x320xbf16, #tpu.memory_space<vmem>>, vector<8x320xbf16>
    tpu.vector_store %arg9[%c32_167, %c0_168], %203 {strides = array<i32>} : memref<40x320xbf16, #tpu.memory_space<vmem>>, vector<8x320xbf16>,
    %c0_169 = arith.constant 0 : index
    %c120_170 = arith.constant 120 : index
    %205 = vector.load %arg4[%c0_169, %c120_170] : memref<4x200xbf16, #tpu.memory_space<vmem>>, vector<4x40xbf16>
    %c0_171 = arith.constant 0 : index
    %c0_172 = arith.constant 0 : index
    %206 = vector.load %arg9[%c0_171, %c0_172] : memref<40x320xbf16, #tpu.memory_space<vmem>>, vector<40x320xbf16>
    %cst_173 = arith.constant dense<0.000000e+00> : vector<4x320xf32>
    %207 = tpu.matmul %205, %206, %cst_173 {dimension_numbers = #tpu.dot_dimension_numbers<[1], [0], [0], [1], [0, 0, 1, 1], [], []>} : vector<4x40xbf16>, vector<40x320xbf16>, vector<4x320xf32> -> vector<4x320xf32>
    %208 = arith.addf %193, %207 : vector<4x320xf32>
    %c0_174 = arith.constant 0 : index
    %c80_175 = arith.constant 80 : index
    %209 = vector.load %arg8[%c0_174, %c80_175] : memref<8x404xbf16, #tpu.memory_space<vmem>>, vector<8x324xbf16>
    %210 = vector.extract_strided_slice %209 {offsets = [0, 0], sizes = [8, 320], strides = [1, 1]} : vector<8x324xbf16> to vector<8x320xbf16>
    %c0_176 = arith.constant 0 : index
    %c0_177 = arith.constant 0 : index
    %211 = vector.load %arg9[%c0_176, %c0_177] : memref<40x320xbf16, #tpu.memory_space<vmem>>, vector<8x320xbf16>
    tpu.vector_store %arg9[%c0_176, %c0_177], %210 {strides = array<i32>} : memref<40x320xbf16, #tpu.memory_space<vmem>>, vector<8x320xbf16>,
    %212 = vector.extract_strided_slice %209 {offsets = [0, 1], sizes = [8, 320], strides = [1, 1]} : vector<8x324xbf16> to vector<8x320xbf16>
    %c8_178 = arith.constant 8 : index
    %c0_179 = arith.constant 0 : index
    %213 = vector.load %arg9[%c8_178, %c0_179] : memref<40x320xbf16, #tpu.memory_space<vmem>>, vector<8x320xbf16>
    tpu.vector_store %arg9[%c8_178, %c0_179], %212 {strides = array<i32>} : memref<40x320xbf16, #tpu.memory_space<vmem>>, vector<8x320xbf16>,
    %214 = vector.extract_strided_slice %209 {offsets = [0, 2], sizes = [8, 320], strides = [1, 1]} : vector<8x324xbf16> to vector<8x320xbf16>
    %c16_180 = arith.constant 16 : index
    %c0_181 = arith.constant 0 : index
    %215 = vector.load %arg9[%c16_180, %c0_181] : memref<40x320xbf16, #tpu.memory_space<vmem>>, vector<8x320xbf16>
    tpu.vector_store %arg9[%c16_180, %c0_181], %214 {strides = array<i32>} : memref<40x320xbf16, #tpu.memory_space<vmem>>, vector<8x320xbf16>,
    %216 = vector.extract_strided_slice %209 {offsets = [0, 3], sizes = [8, 320], strides = [1, 1]} : vector<8x324xbf16> to vector<8x320xbf16>
    %c24_182 = arith.constant 24 : index
    %c0_183 = arith.constant 0 : index
    %217 = vector.load %arg9[%c24_182, %c0_183] : memref<40x320xbf16, #tpu.memory_space<vmem>>, vector<8x320xbf16>
    tpu.vector_store %arg9[%c24_182, %c0_183], %216 {strides = array<i32>} : memref<40x320xbf16, #tpu.memory_space<vmem>>, vector<8x320xbf16>,
    %218 = vector.extract_strided_slice %209 {offsets = [0, 4], sizes = [8, 320], strides = [1, 1]} : vector<8x324xbf16> to vector<8x320xbf16>
    %c32_184 = arith.constant 32 : index
    %c0_185 = arith.constant 0 : index
    %219 = vector.load %arg9[%c32_184, %c0_185] : memref<40x320xbf16, #tpu.memory_space<vmem>>, vector<8x320xbf16>
    tpu.vector_store %arg9[%c32_184, %c0_185], %218 {strides = array<i32>} : memref<40x320xbf16, #tpu.memory_space<vmem>>, vector<8x320xbf16>,
    %c0_186 = arith.constant 0 : index
    %c160_187 = arith.constant 160 : index
    %220 = vector.load %arg4[%c0_186, %c160_187] : memref<4x200xbf16, #tpu.memory_space<vmem>>, vector<4x40xbf16>
    %c0_188 = arith.constant 0 : index
    %c0_189 = arith.constant 0 : index
    %221 = vector.load %arg9[%c0_188, %c0_189] : memref<40x320xbf16, #tpu.memory_space<vmem>>, vector<40x320xbf16>
    %cst_190 = arith.constant dense<0.000000e+00> : vector<4x320xf32>
    %222 = tpu.matmul %220, %221, %cst_190 {dimension_numbers = #tpu.dot_dimension_numbers<[1], [0], [0], [1], [0, 0, 1, 1], [], []>} : vector<4x40xbf16>, vector<40x320xbf16>, vector<4x320xf32> -> vector<4x320xf32>
    %223 = arith.addf %208, %222 : vector<4x320xf32>
    %224 = vector.shape_cast %223 : vector<4x320xf32> to vector<4x16x20xf32>
    %225 = vector.extract_strided_slice %224 {offsets = [0, 0, 0], sizes = [4, 16, 16], strides = [1, 1, 1]} : vector<4x16x20xf32> to vector<4x16x16xf32>
    %226 = vector.shape_cast %225 : vector<4x16x16xf32> to vector<4x256xf32>
    %c0_191 = arith.constant 0 : index
    %c0_192 = arith.constant 0 : index
    %227 = vector.load %arg5[%c0_191, %c0_192] : memref<4x1xf32, #tpu.memory_space<vmem>>, vector<4x1xf32>
    %228 = vector.broadcast %227 : vector<4x1xf32> to vector<4x256xf32>
    %229 = arith.addf %226, %228 : vector<4x256xf32>
    %cst_193 = arith.constant dense<0.000000e+00> : vector<4xf32>
    %230 = vector.multi_reduction <add>, %229, %cst_193 [1] : vector<4x256xf32> to vector<4xf32>
    %231 = vector.shape_cast %230 : vector<4xf32> to vector<4x1xf32>
    %cst_194 = arith.constant 3.906250e-03 : f32
    %232 = vector.broadcast %cst_194 : f32 to vector<4x1xf32>
    %233 = arith.mulf %231, %232 : vector<4x1xf32>
    %234 = vector.broadcast %233 : vector<4x1xf32> to vector<4x256xf32>
    %235 = arith.subf %229, %234 : vector<4x256xf32>
    %236 = arith.mulf %235, %235 : vector<4x256xf32>
    %cst_195 = arith.constant dense<0.000000e+00> : vector<4xf32>
    %237 = vector.multi_reduction <add>, %236, %cst_195 [1] : vector<4x256xf32> to vector<4xf32>
    %238 = vector.shape_cast %237 : vector<4xf32> to vector<4x1xf32>
    %cst_196 = arith.constant 3.906250e-03 : f32
    %239 = vector.broadcast %cst_196 : f32 to vector<4x1xf32>
    %240 = arith.mulf %238, %239 : vector<4x1xf32>
    %cst_197 = arith.constant 9.99999974E-6 : f32
    %241 = vector.broadcast %cst_197 : f32 to vector<4x1xf32>
    %242 = arith.addf %240, %241 : vector<4x1xf32>
    %243 = math.rsqrt %242 : vector<4x1xf32>
    %244 = vector.broadcast %243 : vector<4x1xf32> to vector<4x256xf32>
    %245 = arith.mulf %235, %244 : vector<4x256xf32>
    %c0_198 = arith.constant 0 : index
    %246 = memref.load %arg6[%c0_198] : memref<1xf32, #tpu.memory_space<smem>>
    %247 = vector.broadcast %246 : f32 to vector<4x256xf32>
    %248 = arith.mulf %247, %245 : vector<4x256xf32>
    %249 = arith.addf %5, %248 : vector<4x256xf32>
    %c0_199 = arith.constant 0 : index
    %c0_200 = arith.constant 0 : index
    %c0_201 = arith.constant 0 : index
    %250 = vector.load %arg7[%c0_199, %c0_200, %c0_201] : memref<1x4x256xf32, #tpu.memory_space<vmem>>, vector<1x4x256xf32>
    %251 = vector.shape_cast %250 : vector<1x4x256xf32> to vector<4x256xf32>
    %252 = vector.shape_cast %249 : vector<4x256xf32> to vector<1x4x256xf32>
    tpu.vector_store %arg7[%c0_199, %c0_200, %c0_201], %252 {strides = array<i32>} : memref<1x4x256xf32, #tpu.memory_space<vmem>>, vector<1x4x256xf32>,
    return
  }
  func.func @transform_0(%arg0: i32) -> (i32, i32, i32) {
    %c0_i32 = arith.constant 0 : i32
    %c0_i32_0 = arith.constant 0 : i32
    %c0_i32_1 = arith.constant 0 : i32
    return %arg0, %c0_i32, %c0_i32_0 : i32, i32, i32
  }
  func.func @transform_1(%arg0: i32) -> (i32, i32) {
    %c0_i32 = arith.constant 0 : i32
    %c0_i32_0 = arith.constant 0 : i32
    %c0_i32_1 = arith.constant 0 : i32
    return %c0_i32, %c0_i32_0 : i32, i32
  }
  func.func @transform_2(%arg0: i32) -> (i32, i32) {
    %c0_i32 = arith.constant 0 : i32
    %c0_i32_0 = arith.constant 0 : i32
    %c0_i32_1 = arith.constant 0 : i32
    return %c0_i32, %c0_i32_0 : i32, i32
  }
  func.func @transform_3(%arg0: i32) -> (i32, i32) {
    %c0_i32 = arith.constant 0 : i32
    %c0_i32_0 = arith.constant 0 : i32
    %c0_i32_1 = arith.constant 0 : i32
    return %c0_i32, %c0_i32_0 : i32, i32
  }
  func.func @transform_4(%arg0: i32) -> (i32, i32) {
    %c0_i32 = arith.constant 0 : i32
    %c0_i32_0 = arith.constant 0 : i32
    %c0_i32_1 = arith.constant 0 : i32
    return %c0_i32, %c0_i32_0 : i32, i32
  }
  func.func @transform_5(%arg0: i32) -> i32 {
    %c0_i32 = arith.constant 0 : i32
    %c0_i32_0 = arith.constant 0 : i32
    return %c0_i32 : i32
  }
  func.func @transform_6(%arg0: i32) -> (i32, i32, i32) {
    %c0_i32 = arith.constant 0 : i32
    %c0_i32_0 = arith.constant 0 : i32
    %c0_i32_1 = arith.constant 0 : i32
    return %arg0, %c0_i32, %c0_i32_0 : i32, i32, i32
  }
}

</mosaic_0001>

<llo_original>
// kernel: tpu_custom_call.1
$region0: #{tpu_custom_call.1}
  #allocation0 [shape = 'u32[]', space=smem, size = 0x4, offset = 0x4, fixed_abs, tag = 'smem constant byte address 0x4 - core index']
  #allocation1 [shape = 'u32[72,128]{1,0:T(1,128)}', space=vmem, size = 0x9000, scoped, tag = 'internal scratch']
  #allocation2 [shape = 'bf16[8,404]{1,0:T(8,128)(2,1)}', space=vmem, size = 0x2000, scoped, tag = 'scratch operand']
  #allocation3 [shape = 'bf16[40,320]{1,0:T(8,128)(2,1)}', space=vmem, size = 0x7800, scoped, tag = 'scratch operand']
  #allocation4 [shape = 'f32[1]{0:T(128)S(6)}', space=smem, size = 0x200, scoped, tag = 'scoped memory for tpu_custom_call.1']
  %s0 = inlined_call_operand.hbm [shape: f32[2,4,256], index: 0, kind: input, shape index: {}]
  %s1 = inlined_call_operand.vmem [shape: bf16[4,200], index: 1, kind: input, shape index: {}]
  %s2 = inlined_call_operand.vmem [shape: f32[4,1], index: 2, kind: input, shape index: {}]
  %s3 = inlined_call_operand.vmem [shape: bf16[4,200], index: 3, kind: input, shape index: {}]
  %s4 = inlined_call_operand.vmem [shape: f32[4,1], index: 4, kind: input, shape index: {}]
  %s5 = inlined_call_operand.<no memory space> [shape: f32[1], index: 5, kind: input, shape index: {}]
  %s6 = inlined_call_operand.hbm [shape: f32[2,4,256], index: 6, kind: output, shape index: {}]
  %s7 = sld [smem:[#allocation0]]
  $region61: #{tpu_custom_call.1} parent=0
    _
  %s9 = ssub.s32 1, %s7
  %s10 = scalar_select 0, %s9, %s7
  %11 = sst [smem:[#allocation4]] %s5
  $region1: #{tpu_custom_call.1} parent=0
    #allocation5 [shape = 'u8[8192]{0}', space=vmem, size = 0x2000, scoped, tag = 'input window, operand 0']
    #allocation6 [shape = 's32[2]{0}', space=sflag, size = 0x8, scoped, tag = 'scoped memory for tpu_custom_call.1']
    #allocation7 [shape = 's32[2]{0}', space=sflag, size = 0x8, scoped, tag = 'scoped memory for tpu_custom_call.1']
    #allocation8 [shape = 'u8[8192]{0}', space=vmem, size = 0x2000, scoped, tag = 'output window, operand 0']
    %12 = vsyncpa [#allocation6], 0
    %s13 = scalar_lea.sflag [#allocation6], 1
    %14 = vsyncpa %s13, 0
    %15 = vsyncpa [#allocation7], 0
    %s16 = scalar_lea.sflag [#allocation7], 1
    %17 = vsyncpa %s16, 0
    loop: start=0, step=1, limit=4
    $region2: #{tpu_custom_call.1} parent=1 // loop_pre_header
      _
    $region3: #{tpu_custom_call.1} parent=1 // loop_header
      %s19 = sphi 0, %s23
      %p20 = scmp.ge.s32.totalorder %s19, 4
      %s29 = sphi 0, %s31
      %s32 = sphi 0, %s29
      %s33 = sphi 0, %s32
      %s49 = sphi 0, %s33
      %s53 = sphi 0, %s53
      %s55 = sphi 0, %s53
      %s56 = sphi 0, %s55
      %s70 = sphi 0, %s56
      %s74 = sphi 0, %s74
      %s76 = sphi 0, %s74
      %s77 = sphi 0, %s76
      %s91 = sphi 0, %s77
      %s95 = sphi 0, %s95
      %s97 = sphi 0, %s95
      %s98 = sphi 0, %s97
      %s112 = sphi 0, %s98
      %s116 = sphi 0, %s116
      %s118 = sphi 0, %s116
      %s119 = sphi 0, %s118
      %s133 = sphi 0, %s119
      %s137 = sphi 0, %s137
      %s139 = sphi 0, %s137
      %s140 = sphi 0, %s139
      %s154 = sphi 0, %s140
      %s160 = sphi 0, %s162
      %s163 = sphi 0, %s160
      %s164 = sphi 0, %s163
      %s180 = sphi 0, %s164
    $region4: #{tpu_custom_call.1} parent=1 // loop_header_branch
      %22 = sbr.rel (%p20) target = $region8
    $region5: #{tpu_custom_call.1} parent=1 // loop_body
      %s24 = ssub.s32 %s19, 1
      %s25 = ssub.s32 %s19, 2
      %s26 = sadd.s32 %s19, 1
      %s27 = ssub.s32 %s19, %s26
      %p28 = scmp.eq.s32.totalorder %s27, 0
      %s30 = sadd.s32 %s29, 1
      %s31 = scalar_select %p28, %s29, %s30
      %p34 = pneg %p28
      %p35 = scmp.eq.s32.totalorder %s19, 1
      %p36 = por %p34, %p35
      %p37 = scmp.ne.s32.totalorder %s29, %s32
      %p38 = scmp.eq.s32.totalorder %s19, 0
      %p39 = por %p37, %p38
      %p40 = scmp.ne.s32.totalorder %s29, %s32
      %p41 = scmp.eq.s32.totalorder %s24, 1
      %p42 = por %p40, %p41
      %p43 = scmp.ne.s32.totalorder %s32, %s33
      %p44 = scmp.eq.s32.totalorder %s24, 0
      %p45 = por %p43, %p44
      %p46 = scmp.ne.s32.totalorder %s32, %s33
      %p47 = scmp.eq.s32.totalorder %s25, 1
      %p48 = por %p46, %p47
      %p50 = scmp.ne.s32.totalorder %s33, %s49
      %p51 = scmp.eq.s32.totalorder %s25, 0
      %p52 = por %p50, %p51
      %s54 = sadd.s32 %s53, 1
      %p57 = scmp.eq.s32.totalorder %s19, 1
      %p58 = scmp.ne.s32.totalorder %s53, %s55
      %p59 = scmp.eq.s32.totalorder %s19, 0
      %p60 = por %p58, %p59
      %p61 = scmp.ne.s32.totalorder %s53, %s55
      %p62 = scmp.eq.s32.totalorder %s24, 1
      %p63 = por %p61, %p62
      %p64 = scmp.ne.s32.totalorder %s55, %s56
      %p65 = scmp.eq.s32.totalorder %s24, 0
      %p66 = por %p64, %p65
      %p67 = scmp.ne.s32.totalorder %s55, %s56
      %p68 = scmp.eq.s32.totalorder %s25, 1
      %p69 = por %p67, %p68
      %p71 = scmp.ne.s32.totalorder %s56, %s70
      %p72 = scmp.eq.s32.totalorder %s25, 0
      %p73 = por %p71, %p72
      %s75 = sadd.s32 %s74, 1
      %p78 = scmp.eq.s32.totalorder %s19, 1
      %p79 = scmp.ne.s32.totalorder %s74, %s76
      %p80 = scmp.eq.s32.totalorder %s19, 0
      %p81 = por %p79, %p80
      %p82 = scmp.ne.s32.totalorder %s74, %s76
      %p83 = scmp.eq.s32.totalorder %s24, 1
      %p84 = por %p82, %p83
      %p85 = scmp.ne.s32.totalorder %s76, %s77
      %p86 = scmp.eq.s32.totalorder %s24, 0
      %p87 = por %p85, %p86
      %p88 = scmp.ne.s32.totalorder %s76, %s77
      %p89 = scmp.eq.s32.totalorder %s25, 1
      %p90 = por %p88, %p89
      %p92 = scmp.ne.s32.totalorder %s77, %s91
      %p93 = scmp.eq.s32.totalorder %s25, 0
      %p94 = por %p92, %p93
      %s96 = sadd.s32 %s95, 1
      %p99 = scmp.eq.s32.totalorder %s19, 1
      %p100 = scmp.ne.s32.totalorder %s95, %s97
      %p101 = scmp.eq.s32.totalorder %s19, 0
      %p102 = por %p100, %p101
      %p103 = scmp.ne.s32.totalorder %s95, %s97
      %p104 = scmp.eq.s32.totalorder %s24, 1
      %p105 = por %p103, %p104
      %p106 = scmp.ne.s32.totalorder %s97, %s98
      %p107 = scmp.eq.s32.totalorder %s24, 0
      %p108 = por %p106, %p107
      %p109 = scmp.ne.s32.totalorder %s97, %s98
      %p110 = scmp.eq.s32.totalorder %s25, 1
      %p111 = por %p109, %p110
      %p113 = scmp.ne.s32.totalorder %s98, %s112
      %p114 = scmp.eq.s32.totalorder %s25, 0
      %p115 = por %p113, %p114
      %s117 = sadd.s32 %s116, 1
      %p120 = scmp.eq.s32.totalorder %s19, 1
      %p121 = scmp.ne.s32.totalorder %s116, %s118
      %p122 = scmp.eq.s32.totalorder %s19, 0
      %p123 = por %p121, %p122
      %p124 = scmp.ne.s32.totalorder %s116, %s118
      %p125 = scmp.eq.s32.totalorder %s24, 1
      %p126 = por %p124, %p125
      %p127 = scmp.ne.s32.totalorder %s118, %s119
      %p128 = scmp.eq.s32.totalorder %s24, 0
      %p129 = por %p127, %p128
      %p130 = scmp.ne.s32.totalorder %s118, %s119
      %p131 = scmp.eq.s32.totalorder %s25, 1
      %p132 = por %p130, %p131
      %p134 = scmp.ne.s32.totalorder %s119, %s133
      %p135 = scmp.eq.s32.totalorder %s25, 0
      %p136 = por %p134, %p135
      %s138 = sadd.s32 %s137, 1
      %p141 = scmp.eq.s32.totalorder %s19, 1
      %p142 = scmp.ne.s32.totalorder %s137, %s139
      %p143 = scmp.eq.s32.totalorder %s19, 0
      %p144 = por %p142, %p143
      %p145 = scmp.ne.s32.totalorder %s137, %s139
      %p146 = scmp.eq.s32.totalorder %s24, 1
      %p147 = por %p145, %p146
      %p148 = scmp.ne.s32.totalorder %s139, %s140
      %p149 = scmp.eq.s32.totalorder %s24, 0
      %p150 = por %p148, %p149
      %p151 = scmp.ne.s32.totalorder %s139, %s140
      %p152 = scmp.eq.s32.totalorder %s25, 1
      %p153 = por %p151, %p152
      %p155 = scmp.ne.s32.totalorder %s140, %s154
      %p156 = scmp.eq.s32.totalorder %s25, 0
      %p157 = por %p155, %p156
      %s158 = ssub.s32 %s19, %s26
      %p159 = scmp.eq.s32.totalorder %s158, 0
      %s161 = sadd.s32 %s160, 1
      %s162 = scalar_select %p159, %s160, %s161
      %p165 = pneg %p159
      %p166 = scmp.eq.s32.totalorder %s19, 1
      %p167 = por %p165, %p166
      %p168 = scmp.ne.s32.totalorder %s160, %s163
      %p169 = scmp.eq.s32.totalorder %s19, 0
      %p170 = por %p168, %p169
      %p171 = scmp.ne.s32.totalorder %s160, %s163
      %p172 = scmp.eq.s32.totalorder %s24, 1
      %p173 = por %p171, %p172
      %p174 = scmp.ne.s32.totalorder %s163, %s164
      %p175 = scmp.eq.s32.totalorder %s24, 0
      %p176 = por %p174, %p175
      %p177 = scmp.ne.s32.totalorder %s163, %s164
      %p178 = scmp.eq.s32.totalorder %s25, 1
      %p179 = por %p177, %p178
      %p181 = scmp.ne.s32.totalorder %s164, %s180
      %p182 = scmp.eq.s32.totalorder %s25, 0
      %p183 = por %p181, %p182
      %p184 = scmp.le.s32.totalorder 1, %s19
      %p185 = scmp.lt.s32.totalorder %s19, 3
      %p186 = pnand %p184, %p185
      %p187 = pneg %p186
      // Predicated region
      $region9: #{tpu_custom_call.1} parent=5 // pred_check
        _
      $region10: #{tpu_custom_call.1} parent=5 // pred_check_branch
        %189 = sbr.rel (%p186) target = $region12
      $region11: #{tpu_custom_call.1} parent=5 // pred_region
        %s190 = ssub.s32 %s19, 1
        // Predicated region
        $region13: #{tpu_custom_call.1} parent=11 // pred_check
          %p191 = pneg %p66
        $region14: #{tpu_custom_call.1} parent=11 // pred_check_branch
          %193 = sbr.rel (%p191) target = $region16
        $region15: #{tpu_custom_call.1} parent=11 // pred_region
          _
        $region16: #{tpu_custom_call.1} parent=11 // pred_fallthru
          _
        // Predicated region
        $region17: #{tpu_custom_call.1} parent=11 // pred_check
          %p194 = pneg %p87
        $region18: #{tpu_custom_call.1} parent=11 // pred_check_branch
          %196 = sbr.rel (%p194) target = $region20
        $region19: #{tpu_custom_call.1} parent=11 // pred_region
          _
        $region20: #{tpu_custom_call.1} parent=11 // pred_fallthru
          _
        // Predicated region
        $region21: #{tpu_custom_call.1} parent=11 // pred_check
          %p197 = pneg %p108
        $region22: #{tpu_custom_call.1} parent=11 // pred_check_branch
          %199 = sbr.rel (%p197) target = $region24
        $region23: #{tpu_custom_call.1} parent=11 // pred_region
          _
        $region24: #{tpu_custom_call.1} parent=11 // pred_fallthru
          _
        // Predicated region
        $region25: #{tpu_custom_call.1} parent=11 // pred_check
          %p200 = pneg %p129
        $region26: #{tpu_custom_call.1} parent=11 // pred_check_branch
          %202 = sbr.rel (%p200) target = $region28
        $region27: #{tpu_custom_call.1} parent=11 // pred_region
          _
        $region28: #{tpu_custom_call.1} parent=11 // pred_fallthru
          _
        // Predicated region
        $region29: #{tpu_custom_call.1} parent=11 // pred_check
          %p203 = pneg %p150
        $region30: #{tpu_custom_call.1} parent=11 // pred_check_branch
          %205 = sbr.rel (%p203) target = $region32
        $region31: #{tpu_custom_call.1} parent=11 // pred_region
          _
        $region32: #{tpu_custom_call.1} parent=11 // pred_fallthru
          _
      $region12: #{tpu_custom_call.1} parent=5 // pred_fallthru
        _
      %p206 = scmp.lt.s32.totalorder %s19, 2
      // Predicated region
      $region33: #{tpu_custom_call.1} parent=5 // pred_check
        %p207 = pneg %p206
      $region34: #{tpu_custom_call.1} parent=5 // pred_check_branch
        %209 = sbr.rel (%p207) target = $region36
      $region35: #{tpu_custom_call.1} parent=5 // pred_region
        // Predicated region
        $region37: #{tpu_custom_call.1} parent=35 // pred_check
          %p210 = pneg %p39
        $region38: #{tpu_custom_call.1} parent=35 // pred_check_branch
          %212 = sbr.rel (%p210) target = $region40
        $region39: #{tpu_custom_call.1} parent=35 // pred_region
          %s213 = sand.u32 %s29, 1
          %s214 = scalar_lea.sflag [#allocation6], %s213
          %s215 = sand.u32 %s29, 1
          %s216 = smul.addr %s215, 8
          %s217 = scalar_lea.vmem [#allocation5], %s216
          %219 = vsyncadd %s214, 0
          %s220 = smul.addr %s19, 2
          %s221 = smul.addr %s220, 4
          %s222 = scalar_lea.hbm %s0, %s221
          %s224 = sshll.u32 %s222, 4
          %s225 = int_to_ptr.hbm [resolvable:$true] %s224
          %s226 = sshll.u32 %s217, 4
          %s227 = int_to_ptr.vmem [resolvable:$true] %s226
          %229 = dma.hbm_to_vmem [thread:$0]  %s225, 128, %s227, %s214
        $region40: #{tpu_custom_call.1} parent=35 // pred_fallthru
          _
      $region36: #{tpu_custom_call.1} parent=5 // pred_fallthru
        _
      %p230 = scmp.le.s32.totalorder 1, %s19
      %p231 = scmp.lt.s32.totalorder %s19, 3
      %p232 = pnand %p230, %p231
      %p233 = pneg %p232
      // Predicated region
      $region41: #{tpu_custom_call.1} parent=5 // pred_check
        _
      $region42: #{tpu_custom_call.1} parent=5 // pred_check_branch
        %235 = sbr.rel (%p232) target = $region44
      $region43: #{tpu_custom_call.1} parent=5 // pred_region
        %s236 = ssub.s32 %s19, 1
        %s237 = sand.u32 %s32, 1
        %s238 = scalar_lea.sflag [#allocation6], %s237
        %s239 = sand.u32 %s32, 1
        %s240 = smul.addr %s239, 8
        %s241 = scalar_lea.vmem [#allocation5], %s240
        // Predicated region
        $region45: #{tpu_custom_call.1} parent=43 // pred_check
          %p242 = pneg %p45
        $region46: #{tpu_custom_call.1} parent=43 // pred_check_branch
          %244 = sbr.rel (%p242) target = $region48
        $region47: #{tpu_custom_call.1} parent=43 // pred_region
          %246 = dma.done %s238, 128
        $region48: #{tpu_custom_call.1} parent=43 // pred_fallthru
          _
        %s247 = sand.u32 %s32, 1
        %s248 = scalar_lea.sflag [#allocation6], %s247
        %s249 = sand.u32 %s32, 1
        %s250 = smul.addr %s249, 8
        %s251 = scalar_lea.vmem [#allocation5], %s250
        %p252 = pneg %p45
        %p253 = pneg %p42
        %p254 = pneg %p66
        %p255 = pneg %p63
        %p256 = pneg %p87
        %p257 = pneg %p84
        %p258 = pneg %p108
        %p259 = pneg %p105
        %p260 = pneg %p129
        %p261 = pneg %p126
        %p262 = pneg %p150
        %p263 = pneg %p147
        %p264 = pneg %p176
        %p265 = pneg %p173
        %s266 = sand.u32 %s163, 1
        %s267 = scalar_lea.sflag [#allocation7], %s266
        %s268 = sand.u32 %s163, 1
        %s269 = smul.addr %s268, 8
        %s270 = scalar_lea.vmem [#allocation8], %s269
        %vm272 = vcmask 158848
        %273 = vst.msk [vmem:[#allocation2 + $0xc] sm:$0xf] %vm272, 0
        %274 = vst [vmem:[#allocation2] sm:$0xcc] 0
        %vm275 = vcmask 1043458
        %vm276 = vcmask 162822
        %vm277 = vmor %vm276, %vm275
        %278 = vst.msk [vmem:[#allocation2 + $0x8] sm:$0xcc] %vm277, 0
        %v279 = vld [vmem:[%s241] sm:$0xff]
        %v281 = vrot.slane %v279, 4
        %283 = vrot.lane.b32.xlu0 %v279, 112
        %v284 = vpop.permute.xlu0 %283
        %v285 = vrot.slane %v284, 4
        %287 = vrot.lane.b32.xlu0 %v279, 96
        %v288 = vpop.permute.xlu0 %287
        %v289 = vrot.slane %v288, 4
        %291 = vrot.lane.b32.xlu0 %v279, 80
        %v292 = vpop.permute.xlu0 %291
        %v293 = vrot.slane %v292, 4
        %295 = vrot.lane.b32.xlu0 %v279, 64
        %v296 = vpop.permute.xlu0 %295
        %v297 = vrot.slane %v296, 4
        %299 = vrot.lane.b32.xlu0 %v279, 48
        %v300 = vpop.permute.xlu0 %299
        %v301 = vrot.slane %v300, 4
        %303 = vrot.lane.b32.xlu0 %v279, 32
        %v304 = vpop.permute.xlu0 %303
        %v305 = vrot.slane %v304, 4
        %307 = vrot.lane.b32.xlu0 %v279, 16
        %v308 = vpop.permute.xlu0 %307
        %v309 = vrot.slane %v308, 4
        %v318 = vrot.slane %v288, 4
        %vm319 = vcmask 1047556
        %v320 = vsel %vm319, %v318, %v279
        %v322 = vunpack.c.l.s4 1983009808
        %v323 = vunpack.c.0.s8 %v322
        %v324 = vperm.slane %v320, %v323
        %v325 = vrot.slane %v292, 4
        %v326 = vsel %vm319, %v325, %v284
        %v328 = vunpack.c.l.s4 1983009808
        %v329 = vunpack.c.0.s8 %v328
        %v330 = vperm.slane %v326, %v329
        %v331 = vrot.slane %v330, 4
        %v332 = vsel %vm319, %v331, %v324
        %v333 = vrot.slane %v324, 4
        %v334 = vsel %vm319, %v330, %v333
        %v336 = vunpack.c.l.s4 1934713408
        %v337 = vunpack.c.0.s8 %v336
        %v338 = vperm.slane %v332, %v337
        %v340 = vunpack.c.l.s4 1934713408
        %v341 = vunpack.c.0.s8 %v340
        %v342 = vperm.slane %v334, %v341
        %v343 = vrot.slane %v338, 4
        %v344 = vsel %vm319, 0.0, %v343
        %v345 = vrot.slane %v342, 4
        %v346 = vsel %vm319, 0.0, %v345
        %v347 = vrot.slane %v304, 4
        %v348 = vsel %vm319, %v347, %v296
        %v350 = vunpack.c.l.s4 1983009808
        %v351 = vunpack.c.0.s8 %v350
        %v352 = vperm.slane %v348, %v351
        %v353 = vrot.slane %v308, 4
        %v354 = vsel %vm319, %v353, %v300
        %v356 = vunpack.c.l.s4 1983009808
        %v357 = vunpack.c.0.s8 %v356
        %v358 = vperm.slane %v354, %v357
        %v359 = vrot.slane %v358, 4
        %v360 = vsel %vm319, %v359, %v352
        %v361 = vrot.slane %v352, 4
        %v362 = vsel %vm319, %v358, %v361
        %v364 = vunpack.c.l.s4 1934713408
        %v365 = vunpack.c.0.s8 %v364
        %v366 = vperm.slane %v360, %v365
        %v368 = vunpack.c.l.s4 1934713408
        %v369 = vunpack.c.0.s8 %v368
        %v370 = vperm.slane %v362, %v369
        %v371 = vrot.slane %v366, 4
        %v372 = vsel %vm319, 0.0, %v371
        %v373 = vrot.slane %v370, 4
        %v374 = vsel %vm319, 0.0, %v373
        %v375 = vrot.slane %v289, 4
        %v376 = vsel %vm319, %v375, %v281
        %v378 = vunpack.c.l.s4 1983009808
        %v379 = vunpack.c.0.s8 %v378
        %v380 = vperm.slane %v376, %v379
        %v381 = vrot.slane %v293, 4
        %v382 = vsel %vm319, %v381, %v285
        %v384 = vunpack.c.l.s4 1983009808
        %v385 = vunpack.c.0.s8 %v384
        %v386 = vperm.slane %v382, %v385
        %v387 = vrot.slane %v386, 4
        %v388 = vsel %vm319, %v387, %v380
        %v389 = vrot.slane %v380, 4
        %v390 = vsel %vm319, %v386, %v389
        %v392 = vunpack.c.l.s4 1934713408
        %v393 = vunpack.c.0.s8 %v392
        %v394 = vperm.slane %v388, %v393
        %v396 = vunpack.c.l.s4 1934713408
        %v397 = vunpack.c.0.s8 %v396
        %v398 = vperm.slane %v390, %v397
        %v399 = vrot.slane %v394, 4
        %v400 = vsel %vm319, 0.0, %v399
        %v401 = vrot.slane %v398, 4
        %v402 = vsel %vm319, 0.0, %v401
        %v403 = vrot.slane %v305, 4
        %v404 = vsel %vm319, %v403, %v297
        %v406 = vunpack.c.l.s4 1983009808
        %v407 = vunpack.c.0.s8 %v406
        %v408 = vperm.slane %v404, %v407
        %v409 = vrot.slane %v309, 4
        %v410 = vsel %vm319, %v409, %v301
        %v412 = vunpack.c.l.s4 1983009808
        %v413 = vunpack.c.0.s8 %v412
        %v414 = vperm.slane %v410, %v413
        %v415 = vrot.slane %v414, 4
        %v416 = vsel %vm319, %v415, %v408
        %v417 = vrot.slane %v408, 4
        %v418 = vsel %vm319, %v414, %v417
        %v420 = vunpack.c.l.s4 1934713408
        %v421 = vunpack.c.0.s8 %v420
        %v422 = vperm.slane %v416, %v421
        %v424 = vunpack.c.l.s4 1934713408
        %v425 = vunpack.c.0.s8 %v424
        %v426 = vperm.slane %v418, %v425
        %v427 = vrot.slane %v422, 4
        %v428 = vsel %vm319, 0.0, %v427
        %v429 = vrot.slane %v426, 4
        %v430 = vsel %vm319, 0.0, %v429
        %447 = vst [vmem:[#allocation1] ss:$2 sm:$0xff] %v338
        %s448 = scalar_lea.vmem [#allocation1], 1
        %449 = vst [vmem:[%s448] ss:$2 sm:$0xff] %v366
        %s450 = scalar_lea.vmem [#allocation1], 16
        %451 = vst [vmem:[%s450] ss:$2 sm:$0xff] %v394
        %s452 = scalar_lea.vmem [#allocation1], 17
        %453 = vst [vmem:[%s452] ss:$2 sm:$0xff] %v422
        %v454 = vld.sshfl [vmem:[#allocation1] sm:$0xff pattern:$0x75316420]
        %v455 = vld.sshfl [vmem:[#allocation1 + $0x10] sm:$0xff pattern:$0x75316420]
        %s456 = scalar_lea.vmem [#allocation1], 32
        %457 = vst [vmem:[%s456] ss:$2 sm:$0xff] %v344
        %s458 = scalar_lea.vmem [#allocation1], 33
        %459 = vst [vmem:[%s458] ss:$2 sm:$0xff] %v372
        %s460 = scalar_lea.vmem [#allocation1], 48
        %461 = vst [vmem:[%s460] ss:$2 sm:$0xff] %v400
        %s462 = scalar_lea.vmem [#allocation1], 49
        %463 = vst [vmem:[%s462] ss:$2 sm:$0xff] %v428
        %v464 = vld.sshfl [vmem:[#allocation1 + $0x20] sm:$0xff pattern:$0x75316420]
        %v465 = vld.sshfl [vmem:[#allocation1 + $0x30] sm:$0xff pattern:$0x75316420]
        %466 = vst [vmem:[#allocation1] ss:$2 sm:$0xff] %v342
        %467 = vst [vmem:[%s448] ss:$2 sm:$0xff] %v370
        %468 = vst [vmem:[%s450] ss:$2 sm:$0xff] %v398
        %469 = vst [vmem:[%s452] ss:$2 sm:$0xff] %v426
        %v470 = vld.sshfl [vmem:[#allocation1] sm:$0xff pattern:$0x75316420]
        %v471 = vld.sshfl [vmem:[#allocation1 + $0x10] sm:$0xff pattern:$0x75316420]
        %472 = vst [vmem:[%s456] ss:$2 sm:$0xff] %v346
        %473 = vst [vmem:[%s458] ss:$2 sm:$0xff] %v374
        %474 = vst [vmem:[%s460] ss:$2 sm:$0xff] %v402
        %475 = vst [vmem:[%s462] ss:$2 sm:$0xff] %v430
        %v476 = vld.sshfl [vmem:[#allocation1 + $0x20] sm:$0xff pattern:$0x75316420]
        %v477 = vld.sshfl [vmem:[#allocation1 + $0x30] sm:$0xff pattern:$0x75316420]
        %478 = vrot.lane.b32.xlu0 %v454, 126
        %v479 = vpop.permute.xlu0 %478
        %480 = vrot.lane.b32.xlu0 %v455, 126
        %v481 = vpop.permute.xlu0 %480
        %482 = vrot.lane.b32.xlu0 %v464, 126
        %v483 = vpop.permute.xlu0 %482
        %484 = vrot.lane.b32.xlu0 %v465, 126
        %v485 = vpop.permute.xlu0 %484
        %486 = vrot.lane.b32.xlu0 %v470, 126
        %v487 = vpop.permute.xlu0 %486
        %488 = vrot.lane.b32.xlu0 %v471, 126
        %v489 = vpop.permute.xlu0 %488
        %490 = vrot.lane.b32.xlu0 %v476, 126
        %v491 = vpop.permute.xlu0 %490
        %492 = vrot.lane.b32.xlu0 %v477, 126
        %v493 = vpop.permute.xlu0 %492
        %502 = vst [vmem:[#allocation1] ss:$2 sm:$0xff] %v338
        %s503 = scalar_lea.vmem [#allocation1], 1
        %504 = vst [vmem:[%s503] ss:$2 sm:$0xff] %v366
        %s505 = scalar_lea.vmem [#allocation1], 16
        %506 = vst [vmem:[%s505] ss:$2 sm:$0xff] %v394
        %s507 = scalar_lea.vmem [#allocation1], 17
        %508 = vst [vmem:[%s507] ss:$2 sm:$0xff] %v422
        %v509 = vld.sshfl [vmem:[#allocation1] sm:$0xff pattern:$0x75316420]
        %v510 = vld.sshfl [vmem:[#allocation1 + $0x10] sm:$0xff pattern:$0x75316420]
        %s511 = scalar_lea.vmem [#allocation1], 32
        %512 = vst [vmem:[%s511] ss:$2 sm:$0xff] %v344
        %s513 = scalar_lea.vmem [#allocation1], 33
        %514 = vst [vmem:[%s513] ss:$2 sm:$0xff] %v372
        %s515 = scalar_lea.vmem [#allocation1], 48
        %516 = vst [vmem:[%s515] ss:$2 sm:$0xff] %v400
        %s517 = scalar_lea.vmem [#allocation1], 49
        %518 = vst [vmem:[%s517] ss:$2 sm:$0xff] %v428
        %v519 = vld.sshfl [vmem:[#allocation1 + $0x20] sm:$0xff pattern:$0x75316420]
        %v520 = vld.sshfl [vmem:[#allocation1 + $0x30] sm:$0xff pattern:$0x75316420]
        %521 = vst [vmem:[#allocation1] ss:$2 sm:$0xff] %v342
        %522 = vst [vmem:[%s503] ss:$2 sm:$0xff] %v370
        %523 = vst [vmem:[%s505] ss:$2 sm:$0xff] %v398
        %524 = vst [vmem:[%s507] ss:$2 sm:$0xff] %v426
        %v525 = vld.sshfl [vmem:[#allocation1] sm:$0xff pattern:$0x75316420]
        %v526 = vld.sshfl [vmem:[#allocation1 + $0x10] sm:$0xff pattern:$0x75316420]
        %527 = vst [vmem:[%s511] ss:$2 sm:$0xff] %v346
        %528 = vst [vmem:[%s513] ss:$2 sm:$0xff] %v374
        %529 = vst [vmem:[%s515] ss:$2 sm:$0xff] %v402
        %530 = vst [vmem:[%s517] ss:$2 sm:$0xff] %v430
        %v531 = vld.sshfl [vmem:[#allocation1 + $0x20] sm:$0xff pattern:$0x75316420]
        %v532 = vld.sshfl [vmem:[#allocation1 + $0x30] sm:$0xff pattern:$0x75316420]
        %vm541 = vcmask 7168
        %v542 = vsel %vm541, %v479, %v509
        %v543 = vsel %vm541, %v481, %v510
        %v544 = vsel %vm541, %v483, %v519
        %v545 = vsel %vm541, %v485, %v520
        %v546 = vsel %vm541, %v487, %v525
        %v547 = vsel %vm541, %v489, %v526
        %v548 = vsel %vm541, %v491, %v531
        %v549 = vsel %vm541, %v493, %v532
        %550 = vst [vmem:[#allocation1] ss:$2 sm:$0xff] %v338
        %s551 = scalar_lea.vmem [#allocation1], 1
        %552 = vst [vmem:[%s551] ss:$2 sm:$0xff] %v366
        %s553 = scalar_lea.vmem [#allocation1], 16
        %554 = vst [vmem:[%s553] ss:$2 sm:$0xff] %v394
        %s555 = scalar_lea.vmem [#allocation1], 17
        %556 = vst [vmem:[%s555] ss:$2 sm:$0xff] %v422
        %v557 = vld.sshfl [vmem:[#allocation1] sm:$0xff pattern:$0x75316420]
        %v558 = vld.sshfl [vmem:[#allocation1 + $0x10] sm:$0xff pattern:$0x75316420]
        %s559 = scalar_lea.vmem [#allocation1], 32
        %560 = vst [vmem:[%s559] ss:$2 sm:$0xff] %v344
        %s561 = scalar_lea.vmem [#allocation1], 33
        %562 = vst [vmem:[%s561] ss:$2 sm:$0xff] %v372
        %s563 = scalar_lea.vmem [#allocation1], 48
        %564 = vst [vmem:[%s563] ss:$2 sm:$0xff] %v400
        %s565 = scalar_lea.vmem [#allocation1], 49
        %566 = vst [vmem:[%s565] ss:$2 sm:$0xff] %v428
        %v567 = vld.sshfl [vmem:[#allocation1 + $0x20] sm:$0xff pattern:$0x75316420]
        %v568 = vld.sshfl [vmem:[#allocation1 + $0x30] sm:$0xff pattern:$0x75316420]
        %569 = vst [vmem:[#allocation1] ss:$2 sm:$0xff] %v342
        %570 = vst [vmem:[%s551] ss:$2 sm:$0xff] %v370
        %571 = vst [vmem:[%s553] ss:$2 sm:$0xff] %v398
        %572 = vst [vmem:[%s555] ss:$2 sm:$0xff] %v426
        %v573 = vld.sshfl [vmem:[#allocation1] sm:$0xff pattern:$0x75316420]
        %v574 = vld.sshfl [vmem:[#allocation1 + $0x10] sm:$0xff pattern:$0x75316420]
        %575 = vst [vmem:[%s559] ss:$2 sm:$0xff] %v346
        %576 = vst [vmem:[%s561] ss:$2 sm:$0xff] %v374
        %577 = vst [vmem:[%s563] ss:$2 sm:$0xff] %v402
        %578 = vst [vmem:[%s565] ss:$2 sm:$0xff] %v430
        %v579 = vld.sshfl [vmem:[#allocation1 + $0x20] sm:$0xff pattern:$0x75316420]
        %v580 = vld.sshfl [vmem:[#allocation1 + $0x30] sm:$0xff pattern:$0x75316420]
        %581 = vrot.lane.b32.xlu0 %v557, 114
        %v582 = vpop.permute.xlu0 %581
        %583 = vrot.lane.b32.xlu0 %v558, 114
        %v584 = vpop.permute.xlu0 %583
        %585 = vrot.lane.b32.xlu0 %v567, 114
        %v586 = vpop.permute.xlu0 %585
        %587 = vrot.lane.b32.xlu0 %v568, 114
        %v588 = vpop.permute.xlu0 %587
        %589 = vrot.lane.b32.xlu0 %v573, 114
        %v590 = vpop.permute.xlu0 %589
        %591 = vrot.lane.b32.xlu0 %v574, 114
        %v592 = vpop.permute.xlu0 %591
        %593 = vrot.lane.b32.xlu0 %v579, 114
        %v594 = vpop.permute.xlu0 %593
        %595 = vrot.lane.b32.xlu0 %v580, 114
        %v596 = vpop.permute.xlu0 %595
        %605 = vst [vmem:[#allocation1] ss:$2 sm:$0xff] %v338
        %s606 = scalar_lea.vmem [#allocation1], 1
        %607 = vst [vmem:[%s606] ss:$2 sm:$0xff] %v366
        %s608 = scalar_lea.vmem [#allocation1], 16
        %609 = vst [vmem:[%s608] ss:$2 sm:$0xff] %v394
        %s610 = scalar_lea.vmem [#allocation1], 17
        %611 = vst [vmem:[%s610] ss:$2 sm:$0xff] %v422
        %v612 = vld.sshfl [vmem:[#allocation1] sm:$0xff pattern:$0x75316420]
        %v613 = vld.sshfl [vmem:[#allocation1 + $0x10] sm:$0xff pattern:$0x75316420]
        %s614 = scalar_lea.vmem [#allocation1], 32
        %615 = vst [vmem:[%s614] ss:$2 sm:$0xff] %v344
        %s616 = scalar_lea.vmem [#allocation1], 33
        %617 = vst [vmem:[%s616] ss:$2 sm:$0xff] %v372
        %s618 = scalar_lea.vmem [#allocation1], 48
        %619 = vst [vmem:[%s618] ss:$2 sm:$0xff] %v400
        %s620 = scalar_lea.vmem [#allocation1], 49
        %621 = vst [vmem:[%s620] ss:$2 sm:$0xff] %v428
        %v622 = vld.sshfl [vmem:[#allocation1 + $0x20] sm:$0xff pattern:$0x75316420]
        %v623 = vld.sshfl [vmem:[#allocation1 + $0x30] sm:$0xff pattern:$0x75316420]
        %624 = vst [vmem:[#allocation1] ss:$2 sm:$0xff] %v342
        %625 = vst [vmem:[%s606] ss:$2 sm:$0xff] %v370
        %626 = vst [vmem:[%s608] ss:$2 sm:$0xff] %v398
        %627 = vst [vmem:[%s610] ss:$2 sm:$0xff] %v426
        %v628 = vld.sshfl [vmem:[#allocation1] sm:$0xff pattern:$0x75316420]
        %v629 = vld.sshfl [vmem:[#allocation1 + $0x10] sm:$0xff pattern:$0x75316420]
        %630 = vst [vmem:[%s614] ss:$2 sm:$0xff] %v346
        %631 = vst [vmem:[%s616] ss:$2 sm:$0xff] %v374
        %632 = vst [vmem:[%s618] ss:$2 sm:$0xff] %v402
        %633 = vst [vmem:[%s620] ss:$2 sm:$0xff] %v430
        %v634 = vld.sshfl [vmem:[#allocation1 + $0x20] sm:$0xff pattern:$0x75316420]
        %v635 = vld.sshfl [vmem:[#allocation1 + $0x30] sm:$0xff pattern:$0x75316420]
        %636 = vrot.lane.b32.xlu0 %v612, 116
        %v637 = vpop.permute.xlu0 %636
        %638 = vrot.lane.b32.xlu0 %v613, 116
        %v639 = vpop.permute.xlu0 %638
        %640 = vrot.lane.b32.xlu0 %v622, 116
        %v641 = vpop.permute.xlu0 %640
        %642 = vrot.lane.b32.xlu0 %v623, 116
        %v643 = vpop.permute.xlu0 %642
        %644 = vrot.lane.b32.xlu0 %v628, 116
        %v645 = vpop.permute.xlu0 %644
        %646 = vrot.lane.b32.xlu0 %v629, 116
        %v647 = vpop.permute.xlu0 %646
        %648 = vrot.lane.b32.xlu0 %v634, 116
        %v649 = vpop.permute.xlu0 %648
        %650 = vrot.lane.b32.xlu0 %v635, 116
        %v651 = vpop.permute.xlu0 %650
        %v660 = vsel %vm541, %v582, %v637
        %v661 = vsel %vm541, %v584, %v639
        %v662 = vsel %vm541, %v586, %v641
        %v663 = vsel %vm541, %v588, %v643
        %v664 = vsel %vm541, %v590, %v645
        %v665 = vsel %vm541, %v592, %v647
        %v666 = vsel %vm541, %v594, %v649
        %v667 = vsel %vm541, %v596, %v651
        %668 = vst [vmem:[#allocation1] ss:$2 sm:$0xff] %v338
        %s669 = scalar_lea.vmem [#allocation1], 1
        %670 = vst [vmem:[%s669] ss:$2 sm:$0xff] %v366
        %s671 = scalar_lea.vmem [#allocation1], 16
        %672 = vst [vmem:[%s671] ss:$2 sm:$0xff] %v394
        %s673 = scalar_lea.vmem [#allocation1], 17
        %674 = vst [vmem:[%s673] ss:$2 sm:$0xff] %v422
        %v675 = vld.sshfl [vmem:[#allocation1] sm:$0xff pattern:$0x75316420]
        %v676 = vld.sshfl [vmem:[#allocation1 + $0x10] sm:$0xff pattern:$0x75316420]
        %s677 = scalar_lea.vmem [#allocation1], 32
        %678 = vst [vmem:[%s677] ss:$2 sm:$0xff] %v344
        %s679 = scalar_lea.vmem [#allocation1], 33
        %680 = vst [vmem:[%s679] ss:$2 sm:$0xff] %v372
        %s681 = scalar_lea.vmem [#allocation1], 48
        %682 = vst [vmem:[%s681] ss:$2 sm:$0xff] %v400
        %s683 = scalar_lea.vmem [#allocation1], 49
        %684 = vst [vmem:[%s683] ss:$2 sm:$0xff] %v428
        %v685 = vld.sshfl [vmem:[#allocation1 + $0x20] sm:$0xff pattern:$0x75316420]
        %v686 = vld.sshfl [vmem:[#allocation1 + $0x30] sm:$0xff pattern:$0x75316420]
        %687 = vst [vmem:[#allocation1] ss:$2 sm:$0xff] %v342
        %688 = vst [vmem:[%s669] ss:$2 sm:$0xff] %v370
        %689 = vst [vmem:[%s671] ss:$2 sm:$0xff] %v398
        %690 = vst [vmem:[%s673] ss:$2 sm:$0xff] %v426
        %v691 = vld.sshfl [vmem:[#allocation1] sm:$0xff pattern:$0x75316420]
        %v692 = vld.sshfl [vmem:[#allocation1 + $0x10] sm:$0xff pattern:$0x75316420]
        %693 = vst [vmem:[%s677] ss:$2 sm:$0xff] %v346
        %694 = vst [vmem:[%s679] ss:$2 sm:$0xff] %v374
        %695 = vst [vmem:[%s681] ss:$2 sm:$0xff] %v402
        %696 = vst [vmem:[%s683] ss:$2 sm:$0xff] %v430
        %v697 = vld.sshfl [vmem:[#allocation1 + $0x20] sm:$0xff pattern:$0x75316420]
        %v698 = vld.sshfl [vmem:[#allocation1 + $0x30] sm:$0xff pattern:$0x75316420]
        %699 = vrot.lane.b32.xlu0 %v675, 2
        %v700 = vpop.permute.xlu0 %699
        %701 = vrot.lane.b32.xlu0 %v676, 2
        %v702 = vpop.permute.xlu0 %701
        %703 = vrot.lane.b32.xlu0 %v685, 2
        %v704 = vpop.permute.xlu0 %703
        %705 = vrot.lane.b32.xlu0 %v686, 2
        %v706 = vpop.permute.xlu0 %705
        %707 = vrot.lane.b32.xlu0 %v691, 2
        %v708 = vpop.permute.xlu0 %707
        %709 = vrot.lane.b32.xlu0 %v692, 2
        %v710 = vpop.permute.xlu0 %709
        %711 = vrot.lane.b32.xlu0 %v697, 2
        %v712 = vpop.permute.xlu0 %711
        %713 = vrot.lane.b32.xlu0 %v698, 2
        %v714 = vpop.permute.xlu0 %713
        %731 = vrot.lane.b32.xlu0 %v660, 18
        %v732 = vpop.permute.xlu0 %731
        %733 = vrot.lane.b32.xlu0 %v661, 18
        %v734 = vpop.permute.xlu0 %733
        %735 = vrot.lane.b32.xlu0 %v662, 18
        %v736 = vpop.permute.xlu0 %735
        %737 = vrot.lane.b32.xlu0 %v663, 18
        %v738 = vpop.permute.xlu0 %737
        %739 = vrot.lane.b32.xlu0 %v664, 18
        %v740 = vpop.permute.xlu0 %739
        %741 = vrot.lane.b32.xlu0 %v665, 18
        %v742 = vpop.permute.xlu0 %741
        %743 = vrot.lane.b32.xlu0 %v666, 18
        %v744 = vpop.permute.xlu0 %743
        %745 = vrot.lane.b32.xlu0 %v667, 18
        %v746 = vpop.permute.xlu0 %745
        %vm755 = vcmask 15360
        %v756 = vsel %vm755, %v542, %v700
        %v757 = vsel %vm755, %v543, %v702
        %v758 = vsel %vm755, %v544, %v704
        %v759 = vsel %vm755, %v545, %v706
        %v760 = vsel %vm755, %v546, %v708
        %v761 = vsel %vm755, %v547, %v710
        %v762 = vsel %vm755, %v548, %v712
        %v763 = vsel %vm755, %v549, %v714
        %vm764 = vcmask 146432
        %v765 = vsel %vm764, %v756, %v732
        %v766 = vsel %vm764, %v757, %v734
        %v767 = vsel %vm764, %v758, %v736
        %v768 = vsel %vm764, %v759, %v738
        %v769 = vsel %vm764, %v760, %v740
        %v770 = vsel %vm764, %v761, %v742
        %v771 = vsel %vm764, %v762, %v744
        %v772 = vsel %vm764, %v763, %v746
        %v773 = vpack.c.bf16 %v765, %v765
        %v774 = vpack.c.bf16 %v766, %v766
        %v775 = vpack.c.bf16 %v767, %v767
        %v776 = vpack.c.bf16 %v768, %v768
        %v777 = vpack.c.bf16 %v769, %v769
        %v778 = vpack.c.bf16 %v770, %v770
        %v779 = vpack.c.bf16 %v771, %v771
        %v780 = vpack.c.bf16 %v772, %v772
        %v783 = vpack.i.b16 %v775, %v773
        %v784 = vshrl.u32 %v773, 16
        %v785 = vshrl.u32 %v775, 16
        %v786 = vpack.i.b16 %v785, %v784
        %v789 = vpack.i.b16 %v779, %v777
        %v790 = vshrl.u32 %v777, 16
        %v791 = vshrl.u32 %v779, 16
        %v792 = vpack.i.b16 %v791, %v790
        %v795 = vpack.i.b16 %v776, %v774
        %v796 = vshrl.u32 %v774, 16
        %v797 = vshrl.u32 %v776, 16
        %v798 = vpack.i.b16 %v797, %v796
        %v801 = vpack.i.b16 %v780, %v778
        %v802 = vshrl.u32 %v778, 16
        %v803 = vshrl.u32 %v780, 16
        %v804 = vpack.i.b16 %v803, %v802
        %v807 = vunpack.c.l.s4 1983009808
        %v808 = vunpack.c.0.s8 %v807
        %v809 = vperm.slane %v783, %v808
        %v812 = vunpack.c.l.s4 1983009808
        %v813 = vunpack.c.0.s8 %v812
        %v814 = vperm.slane %v789, %v813
        %v815 = vrot.slane %v814, 4
        %vm816 = vcmask 1047556
        %v817 = vsel %vm816, %v815, %v809
        %v818 = vrot.slane %v809, 4
        %v819 = vsel %vm816, %v814, %v818
        %v821 = vunpack.c.l.s4 1934713408
        %v822 = vunpack.c.0.s8 %v821
        %v823 = vperm.slane %v817, %v822
        %v825 = vunpack.c.l.s4 1934713408
        %v826 = vunpack.c.0.s8 %v825
        %v827 = vperm.slane %v819, %v826
        %v828 = vrot.slane %v823, 4
        %v829 = vsel %vm816, 0, %v828
        %v830 = vrot.slane %v827, 4
        %v831 = vsel %vm816, 0, %v830
        %v834 = vunpack.c.l.s4 1983009808
        %v835 = vunpack.c.0.s8 %v834
        %v836 = vperm.slane %v786, %v835
        %v839 = vunpack.c.l.s4 1983009808
        %v840 = vunpack.c.0.s8 %v839
        %v841 = vperm.slane %v792, %v840
        %v842 = vrot.slane %v841, 4
        %v843 = vsel %vm816, %v842, %v836
        %v844 = vrot.slane %v836, 4
        %v845 = vsel %vm816, %v841, %v844
        %v847 = vunpack.c.l.s4 1934713408
        %v848 = vunpack.c.0.s8 %v847
        %v849 = vperm.slane %v843, %v848
        %v851 = vunpack.c.l.s4 1934713408
        %v852 = vunpack.c.0.s8 %v851
        %v853 = vperm.slane %v845, %v852
        %v854 = vrot.slane %v849, 4
        %v855 = vsel %vm816, 0, %v854
        %v856 = vrot.slane %v853, 4
        %v857 = vsel %vm816, 0, %v856
        %v860 = vunpack.c.l.s4 1983009808
        %v861 = vunpack.c.0.s8 %v860
        %v862 = vperm.slane %v795, %v861
        %v865 = vunpack.c.l.s4 1983009808
        %v866 = vunpack.c.0.s8 %v865
        %v867 = vperm.slane %v801, %v866
        %v868 = vrot.slane %v867, 4
        %v869 = vsel %vm816, %v868, %v862
        %v870 = vrot.slane %v862, 4
        %v871 = vsel %vm816, %v867, %v870
        %v873 = vunpack.c.l.s4 1934713408
        %v874 = vunpack.c.0.s8 %v873
        %v875 = vperm.slane %v869, %v874
        %v877 = vunpack.c.l.s4 1934713408
        %v878 = vunpack.c.0.s8 %v877
        %v879 = vperm.slane %v871, %v878
        %v880 = vrot.slane %v875, 4
        %v881 = vsel %vm816, 0, %v880
        %v882 = vrot.slane %v879, 4
        %v883 = vsel %vm816, 0, %v882
        %v886 = vunpack.c.l.s4 1983009808
        %v887 = vunpack.c.0.s8 %v886
        %v888 = vperm.slane %v798, %v887
        %v891 = vunpack.c.l.s4 1983009808
        %v892 = vunpack.c.0.s8 %v891
        %v893 = vperm.slane %v804, %v892
        %v894 = vrot.slane %v893, 4
        %v895 = vsel %vm816, %v894, %v888
        %v896 = vrot.slane %v888, 4
        %v897 = vsel %vm816, %v893, %v896
        %v899 = vunpack.c.l.s4 1934713408
        %v900 = vunpack.c.0.s8 %v899
        %v901 = vperm.slane %v895, %v900
        %v903 = vunpack.c.l.s4 1934713408
        %v904 = vunpack.c.0.s8 %v903
        %v905 = vperm.slane %v897, %v904
        %v906 = vrot.slane %v901, 4
        %v907 = vsel %vm816, 0, %v906
        %v908 = vrot.slane %v905, 4
        %v909 = vsel %vm816, 0, %v908
        %v911 = vunpack.c.l.b16 %v849
        %v912 = vpack.c.b16 %v911, %v911
        %913 = vrot.lane.b32.xlu0 %v912, 20
        %v914 = vpop.permute.xlu0 %913
        %v916 = vunpack.c.l.b16 %v829
        %v917 = vpack.c.b16 %v916, %v916
        %918 = vrot.lane.b32.xlu0 %v917, 40
        %v919 = vpop.permute.xlu0 %918
        %v921 = vunpack.c.l.b16 %v855
        %v922 = vpack.c.b16 %v921, %v921
        %923 = vrot.lane.b32.xlu0 %v922, 60
        %v924 = vpop.permute.xlu0 %923
        %v926 = vunpack.c.l.b16 %v827
        %v927 = vpack.c.b16 %v926, %v926
        %928 = vrot.lane.b32.xlu0 %v927, 80
        %v929 = vpop.permute.xlu0 %928
        %v931 = vunpack.c.l.b16 %v853
        %v932 = vpack.c.b16 %v931, %v931
        %933 = vrot.lane.b32.xlu0 %v932, 100
        %v934 = vpop.permute.xlu0 %933
        %v936 = vunpack.c.l.b16 %v831
        %v937 = vpack.c.b16 %v936, %v936
        %938 = vrot.lane.b32.xlu0 %v937, 120
        %v939 = vpop.permute.xlu0 %938
        %v941 = vunpack.c.l.b16 %v857
        %v942 = vpack.c.b16 %v941, %v941
        %943 = vrot.lane.b32.xlu0 %v942, 12
        %v944 = vpop.permute.xlu0 %943
        %v946 = vunpack.c.l.b16 %v875
        %v947 = vpack.c.b16 %v946, %v946
        %948 = vrot.lane.b32.xlu0 %v947, 32
        %v949 = vpop.permute.xlu0 %948
        %v951 = vunpack.c.l.b16 %v901
        %v952 = vpack.c.b16 %v951, %v951
        %953 = vrot.lane.b32.xlu0 %v952, 52
        %v954 = vpop.permute.xlu0 %953
        %v956 = vunpack.c.l.b16 %v881
        %v957 = vpack.c.b16 %v956, %v956
        %958 = vrot.lane.b32.xlu0 %v957, 72
        %v959 = vpop.permute.xlu0 %958
        %v961 = vunpack.c.l.b16 %v907
        %v962 = vpack.c.b16 %v961, %v961
        %963 = vrot.lane.b32.xlu0 %v962, 92
        %v964 = vpop.permute.xlu0 %963
        %v966 = vunpack.c.l.b16 %v879
        %v967 = vpack.c.b16 %v966, %v966
        %968 = vrot.lane.b32.xlu0 %v967, 112
        %v969 = vpop.permute.xlu0 %968
        %v971 = vunpack.c.l.b16 %v905
        %v972 = vpack.c.b16 %v971, %v971
        %973 = vrot.lane.b32.xlu0 %v972, 4
        %v974 = vpop.permute.xlu0 %973
        %v976 = vunpack.c.l.b16 %v883
        %v977 = vpack.c.b16 %v976, %v976
        %978 = vrot.lane.b32.xlu0 %v977, 24
        %v979 = vpop.permute.xlu0 %978
        %v981 = vunpack.c.l.b16 %v909
        %v982 = vpack.c.b16 %v981, %v981
        %983 = vrot.lane.b32.xlu0 %v982, 44
        %v984 = vpop.permute.xlu0 %983
        %vm985 = vcmask 162816
        %v988 = vsel %vm985, %v823, %v914
        %vm989 = vcmask 326656
        %v991 = vsel %vm989, %v988, %v919
        %vm992 = vcmask 490496
        %v994 = vsel %vm992, %v991, %v924
        %vm995 = vcmask 654336
        %v997 = vsel %vm995, %v994, %v929
        %vm998 = vcmask 818176
        %v1000 = vsel %vm998, %v997, %v934
        %vm1001 = vcmask 982016
        %v1003 = vsel %vm1001, %v1000, %v939
        %vm1004 = vcmask 97280
        %v1006 = vsel %vm1004, %v939, %v944
        %vm1007 = vcmask 261120
        %v1009 = vsel %vm1007, %v1006, %v949
        %vm1010 = vcmask 424960
        %v1012 = vsel %vm1010, %v1009, %v954
        %vm1013 = vcmask 588800
        %v1015 = vsel %vm1013, %v1012, %v959
        %vm1016 = vcmask 752640
        %v1018 = vsel %vm1016, %v1015, %v964
        %vm1019 = vcmask 916480
        %v1021 = vsel %vm1019, %v1018, %v969
        %vm1022 = vcmask 31744
        %v1024 = vsel %vm1022, %v969, %v974
        %vm1025 = vcmask 195584
        %v1027 = vsel %vm1025, %v1024, %v979
        %vm1028 = vcmask 359424
        %v1030 = vsel %vm1028, %v1027, %v984
        %v1034 = vunpack.c.l.b16 %v1003
        %v1035 = vunpack.c.l.b16 %v1021
        %v1036 = vunpack.c.l.b16 %v1030
        %v1037 = vpack.c.b16 %v1035, %v1034
        %v1038 = vpack.c.b16 %v1036, %v1036
        %1039 = vrot.lane.b32.xlu0 %v1037, 40
        %v1040 = vpop.permute.xlu0 %1039
        %1041 = vrot.lane.b32.xlu0 %v1038, 40
        %v1042 = vpop.permute.xlu0 %1041
        %v1043 = vrot.slane %v1040, 4
        %vm1044 = vcmask 326656
        %v1045 = vsel %vm1044, %v1043, %v1040
        %v1046 = vsel %vm1044, %v1043, %v1042
        %vm1049 = vcmask 1041728
        %vm1050 = vcmask 1045508
        %vm1051 = vmor %vm1050, %vm1049
        %1052 = vst.msk [vmem:[#allocation2] sm:$0x33] %vm1051, %v1045
        %vm1053 = vcmask 844800
        %1054 = vst.msk [vmem:[#allocation2 + $0x8] sm:$0x3] %vm1053, %v1046
        %v1059 = vunpack.c.l.b16 %v773
        %v1060 = vunpack.c.l.b16 %v775
        %v1061 = vunpack.c.l.b16 %v777
        %v1062 = vunpack.c.l.b16 %v779
        %v1063 = vrot.slane %v1059, 2
        %v1064 = vrot.slane %v1060, 1
        %vm1065 = vcmask 1041409
        %v1066 = vsel %vm1065, %v1064, %v1063
        %vm1067 = vcmask 1042434
        %v1068 = vsel %vm1067, %v1061, %v1066
        %v1069 = vrot.slane %v1062, 7
        %vm1070 = vcmask 1043459
        %v1071 = vsel %vm1070, %v1069, %v1068
        %v1072 = vpack.c.b16 %v1071, %v1071
        %vm1074 = vcmask 156672
        %1075 = vst.msk [vmem:[#allocation2] sm:$0x3] %vm1074, %v1072
        %v1076 = vrot.slane %v1059, 1
        %v1077 = vsel %vm1065, %v1060, %v1076
        %v1078 = vrot.slane %v1061, 7
        %v1079 = vsel %vm1067, %v1078, %v1077
        %v1080 = vrot.slane %v1062, 6
        %v1081 = vsel %vm1070, %v1080, %v1079
        %v1082 = vpack.c.b16 %v1081, %v1081
        %1083 = vrot.lane.b32.xlu0 %v1082, 20
        %v1084 = vpop.permute.xlu0 %1083
        %vm1086 = vcmask 320672
        %1087 = vst.msk [vmem:[#allocation2] sm:$0x3] %vm1086, %v1084
        %v1092 = vunpack.c.l.b16 %v774
        %v1093 = vunpack.c.l.b16 %v776
        %v1094 = vunpack.c.l.b16 %v778
        %v1095 = vunpack.c.l.b16 %v780
        %v1096 = vrot.slane %v1092, 6
        %v1097 = vrot.slane %v1093, 5
        %v1098 = vsel %vm1065, %v1097, %v1096
        %v1099 = vrot.slane %v1094, 4
        %v1100 = vsel %vm1067, %v1099, %v1098
        %v1101 = vrot.slane %v1095, 3
        %v1102 = vsel %vm1070, %v1101, %v1100
        %v1103 = vpack.c.b16 %v1102, %v1102
        %1104 = vrot.lane.b32.xlu0 %v1103, 104
        %v1105 = vpop.permute.xlu0 %1104
        %vm1107 = vcmask 1009472
        %1108 = vst.msk [vmem:[#allocation2 + $0x8] sm:$0x3] %vm1107, %v1105
        %v1109 = vrot.slane %v1092, 5
        %v1110 = vrot.slane %v1093, 4
        %v1111 = vsel %vm1065, %v1110, %v1109
        %v1112 = vrot.slane %v1094, 3
        %v1113 = vsel %vm1067, %v1112, %v1111
        %v1114 = vrot.slane %v1095, 2
        %v1115 = vsel %vm1070, %v1114, %v1113
        %v1116 = vpack.c.b16 %v1115, %v1115
        %1117 = vrot.lane.b32.xlu0 %v1116, 124
        %v1118 = vpop.permute.xlu0 %1117
        %v1119 = vrot.slane %v1118, 4
        %vm1120 = vcmask 1014784
        %v1121 = vsel %vm1120, %v1119, %v1118
        %vm1123 = vcmask 1042400
        %vm1124 = vcmask 128004
        %vm1125 = vmor %vm1124, %vm1123
        %1126 = vst.msk [vmem:[#allocation2 + $0x8] sm:$0x33] %vm1125, %v1121
        %v1127 = vld [vmem:[#allocation2] sm:$0xff]
        %v1128 = vld [vmem:[#allocation2 + $0x8] sm:$0xf]
        %1129 = vst [vmem:[#allocation3] sm:$0xff] %v1127
        %vm1130 = vcmask 519168
        %1131 = vst.msk [vmem:[#allocation3 + $0x8] sm:$0xf] %vm1130, %v1128
        %1134 = vrot.lane.b32.xlu0 %v1127, 127
        %v1135 = vpop.permute.xlu0 %1134
        %1136 = vrot.lane.b32.xlu0 %v1128, 127
        %v1137 = vpop.permute.xlu0 %1136
        %v1138 = vrot.slane %v1135, 4
        %v1139 = vrot.slane %v1137, 4
        %vm1140 = vcmask 1043456
        %v1141 = vsel %vm1140, %v1138, %v1139
        %vm1142 = vcmask 1039360
        %v1143 = vsel %vm1142, %v1135, %v1141
        %1146 = vst [vmem:[#allocation3 + $0xc] sm:$0xff] %v1143
        %1147 = vst.msk [vmem:[#allocation3 + $0x14] sm:$0xf] %vm1130, %v1137
        %1148 = vrot.lane.b32.xlu0 %v1127, 126
        %v1149 = vpop.permute.xlu0 %1148
        %1150 = vrot.lane.b32.xlu0 %v1128, 126
        %v1151 = vpop.permute.xlu0 %1150
        %v1152 = vrot.slane %v1149, 4
        %v1153 = vrot.slane %v1151, 4
        %v1154 = vsel %vm1140, %v1152, %v1153
        %vm1155 = vcmask 1031168
        %v1156 = vsel %vm1155, %v1149, %v1154
        %1159 = vst [vmem:[#allocation3 + $0x18] sm:$0xff] %v1156
        %1160 = vst.msk [vmem:[#allocation3 + $0x20] sm:$0xf] %vm1130, %v1151
        %1161 = vrot.lane.b32.xlu0 %v1127, 125
        %v1162 = vpop.permute.xlu0 %1161
        %1163 = vrot.lane.b32.xlu0 %v1128, 125
        %v1164 = vpop.permute.xlu0 %1163
        %v1165 = vrot.slane %v1162, 4
        %v1166 = vrot.slane %v1164, 4
        %v1167 = vsel %vm1140, %v1165, %v1166
        %vm1168 = vcmask 1022976
        %v1169 = vsel %vm1168, %v1162, %v1167
        %1172 = vst [vmem:[#allocation3 + $0x24] sm:$0xff] %v1169
        %1173 = vst.msk [vmem:[#allocation3 + $0x2c] sm:$0xf] %vm1130, %v1164
        %1174 = vrot.lane.b32.xlu0 %v1127, 124
        %v1175 = vpop.permute.xlu0 %1174
        %1176 = vrot.lane.b32.xlu0 %v1128, 124
        %v1177 = vpop.permute.xlu0 %1176
        %v1178 = vrot.slane %v1175, 4
        %v1179 = vrot.slane %v1177, 4
        %v1180 = vsel %vm1140, %v1178, %v1179
        %v1181 = vsel %vm1120, %v1175, %v1180
        %1184 = vst [vmem:[#allocation3 + $0x30] sm:$0xff] %v1181
        %1185 = vst.msk [vmem:[#allocation3 + $0x38] sm:$0xf] %vm1130, %v1177
        %v1186 = vld [vmem:[%s1] sm:$0x3]
        %v1187 = vld [vmem:[#allocation3] sm:$0xff]
        %v1188 = vld [vmem:[#allocation3 + $0x8] sm:$0xf]
        %v1189 = vld [vmem:[#allocation3 + $0xc] sm:$0xff]
        %v1190 = vld [vmem:[#allocation3 + $0x14] sm:$0xf]
        %v1191 = vld [vmem:[#allocation3 + $0x18] sm:$0xff]
        %v1192 = vld [vmem:[#allocation3 + $0x20] sm:$0xf]
        %v1193 = vld [vmem:[#allocation3 + $0x24] sm:$0xff]
        %v1194 = vld [vmem:[#allocation3 + $0x2c] sm:$0xf]
        %v1195 = vld [vmem:[#allocation3 + $0x30] sm:$0xff]
        %v1196 = vld [vmem:[#allocation3 + $0x38] sm:$0xf]
        %v1197 = vld [vmem:[#allocation2] sm:$0xff]
        %v1198 = vld [vmem:[#allocation2 + $0x8] sm:$0xf]
        %1201 = vrot.lane.b32.xlu0 %v1197, 108
        %v1202 = vpop.permute.xlu0 %1201
        %1203 = vrot.lane.b32.xlu0 %v1198, 108
        %v1204 = vpop.permute.xlu0 %1203
        %v1205 = vrot.slane %v1202, 4
        %v1206 = vrot.slane %v1204, 4
        %v1207 = vsel %vm1140, %v1205, %v1206
        %vm1208 = vcmask 883712
        %v1209 = vsel %vm1208, %v1202, %v1207
        %1212 = vst [vmem:[#allocation3] sm:$0xff] %v1209
        %1213 = vst.msk [vmem:[#allocation3 + $0x8] sm:$0xf] %vm1130, %v1204
        %1214 = vrot.lane.b32.xlu0 %v1197, 107
        %v1215 = vpop.permute.xlu0 %1214
        %1216 = vrot.lane.b32.xlu0 %v1198, 107
        %v1217 = vpop.permute.xlu0 %1216
        %v1218 = vrot.slane %v1215, 4
        %v1219 = vrot.slane %v1217, 4
        %v1220 = vsel %vm1140, %v1218, %v1219
        %vm1221 = vcmask 875520
        %v1222 = vsel %vm1221, %v1215, %v1220
        %1225 = vst [vmem:[#allocation3 + $0xc] sm:$0xff] %v1222
        %1226 = vst.msk [vmem:[#allocation3 + $0x14] sm:$0xf] %vm1130, %v1217
        %1227 = vrot.lane.b32.xlu0 %v1197, 106
        %v1228 = vpop.permute.xlu0 %1227
        %1229 = vrot.lane.b32.xlu0 %v1198, 106
        %v1230 = vpop.permute.xlu0 %1229
        %v1231 = vrot.slane %v1228, 4
        %v1232 = vrot.slane %v1230, 4
        %v1233 = vsel %vm1140, %v1231, %v1232
        %vm1234 = vcmask 867328
        %v1235 = vsel %vm1234, %v1228, %v1233
        %1238 = vst [vmem:[#allocation3 + $0x18] sm:$0xff] %v1235
        %1239 = vst.msk [vmem:[#allocation3 + $0x20] sm:$0xf] %vm1130, %v1230
        %1240 = vrot.lane.b32.xlu0 %v1197, 105
        %v1241 = vpop.permute.xlu0 %1240
        %1242 = vrot.lane.b32.xlu0 %v1198, 105
        %v1243 = vpop.permute.xlu0 %1242
        %v1244 = vrot.slane %v1241, 4
        %v1245 = vrot.slane %v1243, 4
        %v1246 = vsel %vm1140, %v1244, %v1245
        %vm1247 = vcmask 859136
        %v1248 = vsel %vm1247, %v1241, %v1246
        %1251 = vst [vmem:[#allocation3 + $0x24] sm:$0xff] %v1248
        %1252 = vst.msk [vmem:[#allocation3 + $0x2c] sm:$0xf] %vm1130, %v1243
        %1253 = vrot.lane.b32.xlu0 %v1197, 104
        %v1254 = vpop.permute.xlu0 %1253
        %1255 = vrot.lane.b32.xlu0 %v1198, 104
        %v1256 = vpop.permute.xlu0 %1255
        %v1257 = vrot.slane %v1254, 4
        %v1258 = vrot.slane %v1256, 4
        %v1259 = vsel %vm1140, %v1257, %v1258
        %vm1260 = vcmask 850944
        %v1261 = vsel %vm1260, %v1254, %v1259
        %1264 = vst [vmem:[#allocation3 + $0x30] sm:$0xff] %v1261
        %1265 = vst.msk [vmem:[#allocation3 + $0x38] sm:$0xf] %vm1130, %v1256
        %v1266 = vld [vmem:[%s1] sm:$0x3]
        %v1267 = vld [vmem:[#allocation3] sm:$0xff]
        %v1268 = vld [vmem:[#allocation3 + $0x8] sm:$0xf]
        %v1269 = vld [vmem:[#allocation3 + $0xc] sm:$0xff]
        %v1270 = vld [vmem:[#allocation3 + $0x14] sm:$0xf]
        %v1271 = vld [vmem:[#allocation3 + $0x18] sm:$0xff]
        %v1272 = vld [vmem:[#allocation3 + $0x20] sm:$0xf]
        %v1273 = vld [vmem:[#allocation3 + $0x24] sm:$0xff]
        %v1274 = vld [vmem:[#allocation3 + $0x2c] sm:$0xf]
        %v1275 = vld [vmem:[#allocation3 + $0x30] sm:$0xff]
        %v1276 = vld [vmem:[#allocation3 + $0x38] sm:$0xf]
        %1278 = vst [vmem:[#allocation1] ss:$4 sm:$0xff] %v1266
        %v1279 = vld.sshfl [vmem:[#allocation1] sm:$0xff pattern:$0x73625140]
        %1281 = vrot.lane.b32.xlu0 %v1279, 88
        %v1282 = vpop.permute.xlu0 %1281
        %v1293 = vunpack.c.l.b16 %v1267
        %v1294 = vunpack.c.h.b16 %v1267
        %v1295 = vunpack.c.l.b16 %v1268
        %v1296 = vunpack.c.l.b16 %v1269
        %v1297 = vunpack.c.h.b16 %v1269
        %v1298 = vunpack.c.l.b16 %v1270
        %v1299 = vunpack.c.l.b16 %v1271
        %v1300 = vunpack.c.h.b16 %v1271
        %v1301 = vunpack.c.l.b16 %v1272
        %v1302 = vunpack.c.l.b16 %v1273
        %v1303 = vunpack.c.h.b16 %v1273
        %v1304 = vunpack.c.l.b16 %v1274
        %v1305 = vunpack.c.l.b16 %v1275
        %v1306 = vunpack.c.h.b16 %v1275
        %v1307 = vunpack.c.l.b16 %v1276
        %v1308 = vpack.c.b16 %v1296, %v1293
        %v1309 = vpack.c.b16 %v1297, %v1294
        %v1310 = vpack.c.b16 %v1298, %v1295
        %v1311 = vpack.c.b16 %v1302, %v1299
        %v1312 = vpack.c.b16 %v1303, %v1300
        %v1313 = vpack.c.b16 %v1304, %v1301
        %v1314 = vpack.c.b16 %v1305, %v1305
        %v1315 = vpack.c.b16 %v1306, %v1306
        %v1316 = vpack.c.b16 %v1307, %v1307
        %v1324 = vsel %vm989, %v1282, 0
        %vm1326 = vcmask 1043456
        %v1328 = vsel %vm1326, %v1314, 0
        %v1331 = vsel %vm1326, %v1315, 0
        %v1334 = vsel %vm1326, %v1316, 0
        %1336 = vmatpush.bf16.msra.mxu0 0
        %1337 = vmatpush.bf16.msra.mxu0 0
        %1338 = vmatpush.bf16.msra.mxu0 0
        %1339 = vmatpush.bf16.msra.mxu0 0
        %1340 = vmatpush.bf16.msra.mxu0 0
        %1341 = vmatpush.bf16.msra.mxu0 %v1328
        %1342 = vmatpush.bf16.msra.mxu0 %v1311
        %1343 = vmatpush.bf16.msra.mxu0 %v1308
        %1344 = vmatmul.bf16.gmra.mxu0 %v1324
        %v1345 = vpop.f32.mrf.mxu0
        %v1346 = vadd.f32 0.0, %v1345
        %v1347 = vpop.f32.mrf.mxu0
        %1348 = vdwg.mxu0
        %1349 = vmatpush.bf16.msra.mxu0 0
        %1350 = vmatpush.bf16.msra.mxu0 0
        %1351 = vmatpush.bf16.msra.mxu0 0
        %1352 = vmatpush.bf16.msra.mxu0 0
        %1353 = vmatpush.bf16.msra.mxu0 0
        %1354 = vmatpush.bf16.msra.mxu0 %v1331
        %1355 = vmatpush.bf16.msra.mxu0 %v1312
        %1356 = vmatpush.bf16.msra.mxu0 %v1309
        %1357 = vmatmul.bf16.gmra.mxu0 %v1324
        %v1358 = vpop.f32.mrf.mxu0
        %v1359 = vadd.f32 0.0, %v1358
        %v1360 = vpop.f32.mrf.mxu0
        %1361 = vdwg.mxu0
        %1362 = vmatpush.bf16.msra.mxu0 0
        %1363 = vmatpush.bf16.msra.mxu0 0
        %1364 = vmatpush.bf16.msra.mxu0 0
        %1365 = vmatpush.bf16.msra.mxu0 0
        %1366 = vmatpush.bf16.msra.mxu0 0
        %1367 = vmatpush.bf16.msra.mxu0 %v1334
        %1368 = vmatpush.bf16.msra.mxu0 %v1313
        %1369 = vmatpush.bf16.msra.mxu0 %v1310
        %1370 = vmatmul.bf16.gmra.mxu0 %v1324
        %v1371 = vpop.f32.mrf.mxu0
        %v1372 = vadd.f32 0.0, %v1371
        %v1373 = vpop.f32.mrf.mxu0
        %1374 = vdwg.mxu0
        %v1385 = vunpack.c.l.b16 %v1187
        %v1386 = vunpack.c.h.b16 %v1187
        %v1387 = vunpack.c.l.b16 %v1188
        %v1388 = vunpack.c.l.b16 %v1189
        %v1389 = vunpack.c.h.b16 %v1189
        %v1390 = vunpack.c.l.b16 %v1190
        %v1391 = vunpack.c.l.b16 %v1191
        %v1392 = vunpack.c.h.b16 %v1191
        %v1393 = vunpack.c.l.b16 %v1192
        %v1394 = vunpack.c.l.b16 %v1193
        %v1395 = vunpack.c.h.b16 %v1193
        %v1396 = vunpack.c.l.b16 %v1194
        %v1397 = vunpack.c.l.b16 %v1195
        %v1398 = vunpack.c.h.b16 %v1195
        %v1399 = vunpack.c.l.b16 %v1196
        %v1400 = vpack.c.b16 %v1388, %v1385
        %v1401 = vpack.c.b16 %v1389, %v1386
        %v1402 = vpack.c.b16 %v1390, %v1387
        %v1403 = vpack.c.b16 %v1394, %v1391
        %v1404 = vpack.c.b16 %v1395, %v1392
        %v1405 = vpack.c.b16 %v1396, %v1393
        %v1406 = vpack.c.b16 %v1397, %v1397
        %v1407 = vpack.c.b16 %v1398, %v1398
        %v1408 = vpack.c.b16 %v1399, %v1399
        %v1416 = vsel %vm989, %v1186, 0
        %v1419 = vsel %vm1326, %v1406, 0
        %v1422 = vsel %vm1326, %v1407, 0
        %v1425 = vsel %vm1326, %v1408, 0
        %1427 = vmatpush.bf16.msra.mxu0 0
        %1428 = vmatpush.bf16.msra.mxu0 0
        %1429 = vmatpush.bf16.msra.mxu0 0
        %1430 = vmatpush.bf16.msra.mxu0 0
        %1431 = vmatpush.bf16.msra.mxu0 0
        %1432 = vmatpush.bf16.msra.mxu0 %v1419
        %1433 = vmatpush.bf16.msra.mxu0 %v1403
        %1434 = vmatpush.bf16.msra.mxu0 %v1400
        %1435 = vmatmul.bf16.gmra.mxu0 %v1416
        %v1436 = vpop.f32.mrf.mxu0
        %v1437 = vadd.f32 %v1346, %v1436
        %v1438 = vpop.f32.mrf.mxu0
        %1439 = vdwg.mxu0
        %1440 = vmatpush.bf16.msra.mxu0 0
        %1441 = vmatpush.bf16.msra.mxu0 0
        %1442 = vmatpush.bf16.msra.mxu0 0
        %1443 = vmatpush.bf16.msra.mxu0 0
        %1444 = vmatpush.bf16.msra.mxu0 0
        %1445 = vmatpush.bf16.msra.mxu0 %v1422
        %1446 = vmatpush.bf16.msra.mxu0 %v1404
        %1447 = vmatpush.bf16.msra.mxu0 %v1401
        %1448 = vmatmul.bf16.gmra.mxu0 %v1416
        %v1449 = vpop.f32.mrf.mxu0
        %v1450 = vadd.f32 %v1359, %v1449
        %v1451 = vpop.f32.mrf.mxu0
        %1452 = vdwg.mxu0
        %1453 = vmatpush.bf16.msra.mxu0 0
        %1454 = vmatpush.bf16.msra.mxu0 0
        %1455 = vmatpush.bf16.msra.mxu0 0
        %1456 = vmatpush.bf16.msra.mxu0 0
        %1457 = vmatpush.bf16.msra.mxu0 0
        %1458 = vmatpush.bf16.msra.mxu0 %v1425
        %1459 = vmatpush.bf16.msra.mxu0 %v1405
        %1460 = vmatpush.bf16.msra.mxu0 %v1402
        %1461 = vmatmul.bf16.gmra.mxu0 %v1416
        %v1462 = vpop.f32.mrf.mxu0
        %v1463 = vadd.f32 %v1372, %v1462
        %v1464 = vpop.f32.mrf.mxu0
        %1465 = vdwg.mxu0
        %v1466 = vld [vmem:[#allocation2] sm:$0xff]
        %v1467 = vld [vmem:[#allocation2 + $0x8] sm:$0xf]
        %1470 = vrot.lane.b32.xlu0 %v1466, 88
        %v1471 = vpop.permute.xlu0 %1470
        %1472 = vrot.lane.b32.xlu0 %v1467, 88
        %v1473 = vpop.permute.xlu0 %1472
        %v1474 = vrot.slane %v1471, 4
        %v1475 = vrot.slane %v1473, 4
        %v1476 = vsel %vm1140, %v1474, %v1475
        %vm1477 = vcmask 719872
        %v1478 = vsel %vm1477, %v1471, %v1476
        %1481 = vst [vmem:[#allocation3] sm:$0xff] %v1478
        %1482 = vst.msk [vmem:[#allocation3 + $0x8] sm:$0xf] %vm1130, %v1473
        %1483 = vrot.lane.b32.xlu0 %v1466, 87
        %v1484 = vpop.permute.xlu0 %1483
        %1485 = vrot.lane.b32.xlu0 %v1467, 87
        %v1486 = vpop.permute.xlu0 %1485
        %v1487 = vrot.slane %v1484, 4
        %v1488 = vrot.slane %v1486, 4
        %v1489 = vsel %vm1140, %v1487, %v1488
        %vm1490 = vcmask 711680
        %v1491 = vsel %vm1490, %v1484, %v1489
        %1494 = vst [vmem:[#allocation3 + $0xc] sm:$0xff] %v1491
        %1495 = vst.msk [vmem:[#allocation3 + $0x14] sm:$0xf] %vm1130, %v1486
        %1496 = vrot.lane.b32.xlu0 %v1466, 86
        %v1497 = vpop.permute.xlu0 %1496
        %1498 = vrot.lane.b32.xlu0 %v1467, 86
        %v1499 = vpop.permute.xlu0 %1498
        %v1500 = vrot.slane %v1497, 4
        %v1501 = vrot.slane %v1499, 4
        %v1502 = vsel %vm1140, %v1500, %v1501
        %vm1503 = vcmask 703488
        %v1504 = vsel %vm1503, %v1497, %v1502
        %1507 = vst [vmem:[#allocation3 + $0x18] sm:$0xff] %v1504
        %1508 = vst.msk [vmem:[#allocation3 + $0x20] sm:$0xf] %vm1130, %v1499
        %1509 = vrot.lane.b32.xlu0 %v1466, 85
        %v1510 = vpop.permute.xlu0 %1509
        %1511 = vrot.lane.b32.xlu0 %v1467, 85
        %v1512 = vpop.permute.xlu0 %1511
        %v1513 = vrot.slane %v1510, 4
        %v1514 = vrot.slane %v1512, 4
        %v1515 = vsel %vm1140, %v1513, %v1514
        %vm1516 = vcmask 695296
        %v1517 = vsel %vm1516, %v1510, %v1515
        %1520 = vst [vmem:[#allocation3 + $0x24] sm:$0xff] %v1517
        %1521 = vst.msk [vmem:[#allocation3 + $0x2c] sm:$0xf] %vm1130, %v1512
        %1522 = vrot.lane.b32.xlu0 %v1466, 84
        %v1523 = vpop.permute.xlu0 %1522
        %1524 = vrot.lane.b32.xlu0 %v1467, 84
        %v1525 = vpop.permute.xlu0 %1524
        %v1526 = vrot.slane %v1523, 4
        %v1527 = vrot.slane %v1525, 4
        %v1528 = vsel %vm1140, %v1526, %v1527
        %vm1529 = vcmask 687104
        %v1530 = vsel %vm1529, %v1523, %v1528
        %1533 = vst [vmem:[#allocation3 + $0x30] sm:$0xff] %v1530
        %1534 = vst.msk [vmem:[#allocation3 + $0x38] sm:$0xf] %vm1130, %v1525
        %v1535 = vld [vmem:[%s1] sm:$0x3]
        %v1536 = vld [vmem:[#allocation3] sm:$0xff]
        %v1537 = vld [vmem:[#allocation3 + $0x8] sm:$0xf]
        %v1538 = vld [vmem:[#allocation3 + $0xc] sm:$0xff]
        %v1539 = vld [vmem:[#allocation3 + $0x14] sm:$0xf]
        %v1540 = vld [vmem:[#allocation3 + $0x18] sm:$0xff]
        %v1541 = vld [vmem:[#allocation3 + $0x20] sm:$0xf]
        %v1542 = vld [vmem:[#allocation3 + $0x24] sm:$0xff]
        %v1543 = vld [vmem:[#allocation3 + $0x2c] sm:$0xf]
        %v1544 = vld [vmem:[#allocation3 + $0x30] sm:$0xff]
        %v1545 = vld [vmem:[#allocation3 + $0x38] sm:$0xf]
        %1547 = vst [vmem:[#allocation1] ss:$4 sm:$0xff] %v1535
        %v1548 = vld.sshfl [vmem:[#allocation1] sm:$0xff pattern:$0x73625140]
        %1550 = vrot.lane.b32.xlu0 %v1548, 48
        %v1551 = vpop.permute.xlu0 %1550
        %v1562 = vunpack.c.l.b16 %v1536
        %v1563 = vunpack.c.h.b16 %v1536
        %v1564 = vunpack.c.l.b16 %v1537
        %v1565 = vunpack.c.l.b16 %v1538
        %v1566 = vunpack.c.h.b16 %v1538
        %v1567 = vunpack.c.l.b16 %v1539
        %v1568 = vunpack.c.l.b16 %v1540
        %v1569 = vunpack.c.h.b16 %v1540
        %v1570 = vunpack.c.l.b16 %v1541
        %v1571 = vunpack.c.l.b16 %v1542
        %v1572 = vunpack.c.h.b16 %v1542
        %v1573 = vunpack.c.l.b16 %v1543
        %v1574 = vunpack.c.l.b16 %v1544
        %v1575 = vunpack.c.h.b16 %v1544
        %v1576 = vunpack.c.l.b16 %v1545
        %v1577 = vpack.c.b16 %v1565, %v1562
        %v1578 = vpack.c.b16 %v1566, %v1563
        %v1579 = vpack.c.b16 %v1567, %v1564
        %v1580 = vpack.c.b16 %v1571, %v1568
        %v1581 = vpack.c.b16 %v1572, %v1569
        %v1582 = vpack.c.b16 %v1573, %v1570
        %v1583 = vpack.c.b16 %v1574, %v1574
        %v1584 = vpack.c.b16 %v1575, %v1575
        %v1585 = vpack.c.b16 %v1576, %v1576
        %v1593 = vsel %vm989, %v1551, 0
        %v1596 = vsel %vm1326, %v1583, 0
        %v1599 = vsel %vm1326, %v1584, 0
        %v1602 = vsel %vm1326, %v1585, 0
        %1604 = vmatpush.bf16.msra.mxu0 0
        %1605 = vmatpush.bf16.msra.mxu0 0
        %1606 = vmatpush.bf16.msra.mxu0 0
        %1607 = vmatpush.bf16.msra.mxu0 0
        %1608 = vmatpush.bf16.msra.mxu0 0
        %1609 = vmatpush.bf16.msra.mxu0 %v1596
        %1610 = vmatpush.bf16.msra.mxu0 %v1580
        %1611 = vmatpush.bf16.msra.mxu0 %v1577
        %1612 = vmatmul.bf16.gmra.mxu0 %v1593
        %v1613 = vpop.f32.mrf.mxu0
        %v1614 = vadd.f32 0.0, %v1613
        %v1615 = vpop.f32.mrf.mxu0
        %1616 = vdwg.mxu0
        %1617 = vmatpush.bf16.msra.mxu0 0
        %1618 = vmatpush.bf16.msra.mxu0 0
        %1619 = vmatpush.bf16.msra.mxu0 0
        %1620 = vmatpush.bf16.msra.mxu0 0
        %1621 = vmatpush.bf16.msra.mxu0 0
        %1622 = vmatpush.bf16.msra.mxu0 %v1599
        %1623 = vmatpush.bf16.msra.mxu0 %v1581
        %1624 = vmatpush.bf16.msra.mxu0 %v1578
        %1625 = vmatmul.bf16.gmra.mxu0 %v1593
        %v1626 = vpop.f32.mrf.mxu0
        %v1627 = vadd.f32 0.0, %v1626
        %v1628 = vpop.f32.mrf.mxu0
        %1629 = vdwg.mxu0
        %1630 = vmatpush.bf16.msra.mxu0 0
        %1631 = vmatpush.bf16.msra.mxu0 0
        %1632 = vmatpush.bf16.msra.mxu0 0
        %1633 = vmatpush.bf16.msra.mxu0 0
        %1634 = vmatpush.bf16.msra.mxu0 0
        %1635 = vmatpush.bf16.msra.mxu0 %v1602
        %1636 = vmatpush.bf16.msra.mxu0 %v1582
        %1637 = vmatpush.bf16.msra.mxu0 %v1579
        %1638 = vmatmul.bf16.gmra.mxu0 %v1593
        %v1639 = vpop.f32.mrf.mxu0
        %v1640 = vadd.f32 0.0, %v1639
        %v1641 = vpop.f32.mrf.mxu0
        %1642 = vdwg.mxu0
        %v1643 = vadd.f32 %v1437, %v1614
        %v1644 = vadd.f32 %v1450, %v1627
        %v1645 = vadd.f32 %v1463, %v1640
        %v1646 = vld [vmem:[#allocation2] sm:$0xff]
        %v1647 = vld [vmem:[#allocation2 + $0x8] sm:$0xf]
        %1650 = vrot.lane.b32.xlu0 %v1646, 68
        %v1651 = vpop.permute.xlu0 %1650
        %1652 = vrot.lane.b32.xlu0 %v1647, 68
        %v1653 = vpop.permute.xlu0 %1652
        %v1654 = vrot.slane %v1651, 4
        %v1655 = vrot.slane %v1653, 4
        %v1656 = vsel %vm1140, %v1654, %v1655
        %vm1657 = vcmask 556032
        %v1658 = vsel %vm1657, %v1651, %v1656
        %1661 = vst [vmem:[#allocation3] sm:$0xff] %v1658
        %1662 = vst.msk [vmem:[#allocation3 + $0x8] sm:$0xf] %vm1130, %v1653
        %1663 = vrot.lane.b32.xlu0 %v1646, 67
        %v1664 = vpop.permute.xlu0 %1663
        %1665 = vrot.lane.b32.xlu0 %v1647, 67
        %v1666 = vpop.permute.xlu0 %1665
        %v1667 = vrot.slane %v1664, 4
        %v1668 = vrot.slane %v1666, 4
        %v1669 = vsel %vm1140, %v1667, %v1668
        %vm1670 = vcmask 547840
        %v1671 = vsel %vm1670, %v1664, %v1669
        %1674 = vst [vmem:[#allocation3 + $0xc] sm:$0xff] %v1671
        %1675 = vst.msk [vmem:[#allocation3 + $0x14] sm:$0xf] %vm1130, %v1666
        %1676 = vrot.lane.b32.xlu0 %v1646, 66
        %v1677 = vpop.permute.xlu0 %1676
        %1678 = vrot.lane.b32.xlu0 %v1647, 66
        %v1679 = vpop.permute.xlu0 %1678
        %v1680 = vrot.slane %v1677, 4
        %v1681 = vrot.slane %v1679, 4
        %v1682 = vsel %vm1140, %v1680, %v1681
        %vm1683 = vcmask 539648
        %v1684 = vsel %vm1683, %v1677, %v1682
        %1687 = vst [vmem:[#allocation3 + $0x18] sm:$0xff] %v1684
        %1688 = vst.msk [vmem:[#allocation3 + $0x20] sm:$0xf] %vm1130, %v1679
        %1689 = vrot.lane.b32.xlu0 %v1646, 65
        %v1690 = vpop.permute.xlu0 %1689
        %1691 = vrot.lane.b32.xlu0 %v1647, 65
        %v1692 = vpop.permute.xlu0 %1691
        %v1693 = vrot.slane %v1690, 4
        %v1694 = vrot.slane %v1692, 4
        %v1695 = vsel %vm1140, %v1693, %v1694
        %vm1696 = vcmask 531456
        %v1697 = vsel %vm1696, %v1690, %v1695
        %1700 = vst [vmem:[#allocation3 + $0x24] sm:$0xff] %v1697
        %1701 = vst.msk [vmem:[#allocation3 + $0x2c] sm:$0xf] %vm1130, %v1692
        %1702 = vrot.lane.b32.xlu0 %v1646, 64
        %v1703 = vpop.permute.xlu0 %1702
        %1704 = vrot.lane.b32.xlu0 %v1647, 64
        %v1705 = vpop.permute.xlu0 %1704
        %v1706 = vrot.slane %v1703, 4
        %v1707 = vrot.slane %v1705, 4
        %v1708 = vsel %vm1140, %v1706, %v1707
        %vm1709 = vcmask 523264
        %v1710 = vsel %vm1709, %v1703, %v1708
        %1713 = vst [vmem:[#allocation3 + $0x30] sm:$0xff] %v1710
        %1714 = vst.msk [vmem:[#allocation3 + $0x38] sm:$0xf] %vm1130, %v1705
        %v1715 = vld [vmem:[%s1] sm:$0xf]
        %v1716 = vld [vmem:[#allocation3] sm:$0xff]
        %v1717 = vld [vmem:[#allocation3 + $0x8] sm:$0xf]
        %v1718 = vld [vmem:[#allocation3 + $0xc] sm:$0xff]
        %v1719 = vld [vmem:[#allocation3 + $0x14] sm:$0xf]
        %v1720 = vld [vmem:[#allocation3 + $0x18] sm:$0xff]
        %v1721 = vld [vmem:[#allocation3 + $0x20] sm:$0xf]
        %v1722 = vld [vmem:[#allocation3 + $0x24] sm:$0xff]
        %v1723 = vld [vmem:[#allocation3 + $0x2c] sm:$0xf]
        %v1724 = vld [vmem:[#allocation3 + $0x30] sm:$0xff]
        %v1725 = vld [vmem:[#allocation3 + $0x38] sm:$0xf]
        %1727 = vst [vmem:[#allocation1] ss:$4 sm:$0xff] %v1715
        %v1728 = vld.sshfl [vmem:[#allocation1] sm:$0xff pattern:$0x73625140]
        %v1730 = vld.sshfl [vmem:[#allocation1 + $0x8] sm:$0xff pattern:$0x73625140]
        %1732 = vrot.lane.b32.xlu0 %v1728, 8
        %v1733 = vpop.permute.xlu0 %1732
        %1734 = vrot.lane.b32.xlu0 %v1730, 8
        %v1735 = vpop.permute.xlu0 %1734
        %vm1736 = vcmask 64512
        %v1737 = vsel %vm1736, %v1733, %v1735
        %v1748 = vunpack.c.l.b16 %v1716
        %v1749 = vunpack.c.h.b16 %v1716
        %v1750 = vunpack.c.l.b16 %v1717
        %v1751 = vunpack.c.l.b16 %v1718
        %v1752 = vunpack.c.h.b16 %v1718
        %v1753 = vunpack.c.l.b16 %v1719
        %v1754 = vunpack.c.l.b16 %v1720
        %v1755 = vunpack.c.h.b16 %v1720
        %v1756 = vunpack.c.l.b16 %v1721
        %v1757 = vunpack.c.l.b16 %v1722
        %v1758 = vunpack.c.h.b16 %v1722
        %v1759 = vunpack.c.l.b16 %v1723
        %v1760 = vunpack.c.l.b16 %v1724
        %v1761 = vunpack.c.h.b16 %v1724
        %v1762 = vunpack.c.l.b16 %v1725
        %v1763 = vpack.c.b16 %v1751, %v1748
        %v1764 = vpack.c.b16 %v1752, %v1749
        %v1765 = vpack.c.b16 %v1753, %v1750
        %v1766 = vpack.c.b16 %v1757, %v1754
        %v1767 = vpack.c.b16 %v1758, %v1755
        %v1768 = vpack.c.b16 %v1759, %v1756
        %v1769 = vpack.c.b16 %v1760, %v1760
        %v1770 = vpack.c.b16 %v1761, %v1761
        %v1771 = vpack.c.b16 %v1762, %v1762
        %v1779 = vsel %vm989, %v1737, 0
        %v1782 = vsel %vm1326, %v1769, 0
        %v1785 = vsel %vm1326, %v1770, 0
        %v1788 = vsel %vm1326, %v1771, 0
        %1790 = vmatpush.bf16.msra.mxu0 0
        %1791 = vmatpush.bf16.msra.mxu0 0
        %1792 = vmatpush.bf16.msra.mxu0 0
        %1793 = vmatpush.bf16.msra.mxu0 0
        %1794 = vmatpush.bf16.msra.mxu0 0
        %1795 = vmatpush.bf16.msra.mxu0 %v1782
        %1796 = vmatpush.bf16.msra.mxu0 %v1766
        %1797 = vmatpush.bf16.msra.mxu0 %v1763
        %1798 = vmatmul.bf16.gmra.mxu0 %v1779
        %v1799 = vpop.f32.mrf.mxu0
        %v1800 = vadd.f32 0.0, %v1799
        %v1801 = vpop.f32.mrf.mxu0
        %1802 = vdwg.mxu0
        %1803 = vmatpush.bf16.msra.mxu0 0
        %1804 = vmatpush.bf16.msra.mxu0 0
        %1805 = vmatpush.bf16.msra.mxu0 0
        %1806 = vmatpush.bf16.msra.mxu0 0
        %1807 = vmatpush.bf16.msra.mxu0 0
        %1808 = vmatpush.bf16.msra.mxu0 %v1785
        %1809 = vmatpush.bf16.msra.mxu0 %v1767
        %1810 = vmatpush.bf16.msra.mxu0 %v1764
        %1811 = vmatmul.bf16.gmra.mxu0 %v1779
        %v1812 = vpop.f32.mrf.mxu0
        %v1813 = vadd.f32 0.0, %v1812
        %v1814 = vpop.f32.mrf.mxu0
        %1815 = vdwg.mxu0
        %1816 = vmatpush.bf16.msra.mxu0 0
        %1817 = vmatpush.bf16.msra.mxu0 0
        %1818 = vmatpush.bf16.msra.mxu0 0
        %1819 = vmatpush.bf16.msra.mxu0 0
        %1820 = vmatpush.bf16.msra.mxu0 0
        %1821 = vmatpush.bf16.msra.mxu0 %v1788
        %1822 = vmatpush.bf16.msra.mxu0 %v1768
        %1823 = vmatpush.bf16.msra.mxu0 %v1765
        %1824 = vmatmul.bf16.gmra.mxu0 %v1779
        %v1825 = vpop.f32.mrf.mxu0
        %v1826 = vadd.f32 0.0, %v1825
        %v1827 = vpop.f32.mrf.mxu0
        %1828 = vdwg.mxu0
        %v1829 = vadd.f32 %v1643, %v1800
        %v1830 = vadd.f32 %v1644, %v1813
        %v1831 = vadd.f32 %v1645, %v1826
        %v1832 = vld [vmem:[#allocation2] sm:$0xff]
        %v1833 = vld [vmem:[#allocation2 + $0x8] sm:$0xff]
        %1836 = vrot.lane.b32.xlu0 %v1832, 48
        %v1837 = vpop.permute.xlu0 %1836
        %1838 = vrot.lane.b32.xlu0 %v1833, 48
        %v1839 = vpop.permute.xlu0 %1838
        %v1840 = vrot.slane %v1837, 4
        %v1841 = vrot.slane %v1839, 4
        %v1842 = vsel %vm1140, %v1840, %v1841
        %vm1843 = vcmask 392192
        %v1844 = vsel %vm1843, %v1837, %v1842
        %v1845 = vsel %vm1843, %v1839, %v1841
        %1848 = vst [vmem:[#allocation3] sm:$0xff] %v1844
        %1849 = vst.msk [vmem:[#allocation3 + $0x8] sm:$0xf] %vm1130, %v1845
        %1850 = vrot.lane.b32.xlu0 %v1832, 47
        %v1851 = vpop.permute.xlu0 %1850
        %1852 = vrot.lane.b32.xlu0 %v1833, 47
        %v1853 = vpop.permute.xlu0 %1852
        %v1854 = vrot.slane %v1851, 4
        %v1855 = vrot.slane %v1853, 4
        %v1856 = vsel %vm1140, %v1854, %v1855
        %vm1857 = vcmask 384000
        %v1858 = vsel %vm1857, %v1851, %v1856
        %v1859 = vsel %vm1857, %v1853, %v1855
        %1862 = vst [vmem:[#allocation3 + $0xc] sm:$0xff] %v1858
        %1863 = vst.msk [vmem:[#allocation3 + $0x14] sm:$0xf] %vm1130, %v1859
        %1864 = vrot.lane.b32.xlu0 %v1832, 46
        %v1865 = vpop.permute.xlu0 %1864
        %1866 = vrot.lane.b32.xlu0 %v1833, 46
        %v1867 = vpop.permute.xlu0 %1866
        %v1868 = vrot.slane %v1865, 4
        %v1869 = vrot.slane %v1867, 4
        %v1870 = vsel %vm1140, %v1868, %v1869
        %vm1871 = vcmask 375808
        %v1872 = vsel %vm1871, %v1865, %v1870
        %v1873 = vsel %vm1871, %v1867, %v1869
        %1876 = vst [vmem:[#allocation3 + $0x18] sm:$0xff] %v1872
        %1877 = vst.msk [vmem:[#allocation3 + $0x20] sm:$0xf] %vm1130, %v1873
        %1878 = vrot.lane.b32.xlu0 %v1832, 45
        %v1879 = vpop.permute.xlu0 %1878
        %1880 = vrot.lane.b32.xlu0 %v1833, 45
        %v1881 = vpop.permute.xlu0 %1880
        %v1882 = vrot.slane %v1879, 4
        %v1883 = vrot.slane %v1881, 4
        %v1884 = vsel %vm1140, %v1882, %v1883
        %vm1885 = vcmask 367616
        %v1886 = vsel %vm1885, %v1879, %v1884
        %v1887 = vsel %vm1885, %v1881, %v1883
        %1890 = vst [vmem:[#allocation3 + $0x24] sm:$0xff] %v1886
        %1891 = vst.msk [vmem:[#allocation3 + $0x2c] sm:$0xf] %vm1130, %v1887
        %1892 = vrot.lane.b32.xlu0 %v1832, 44
        %v1893 = vpop.permute.xlu0 %1892
        %1894 = vrot.lane.b32.xlu0 %v1833, 44
        %v1895 = vpop.permute.xlu0 %1894
        %v1896 = vrot.slane %v1893, 4
        %v1897 = vrot.slane %v1895, 4
        %v1898 = vsel %vm1140, %v1896, %v1897
        %vm1899 = vcmask 359424
        %v1900 = vsel %vm1899, %v1893, %v1898
        %v1901 = vsel %vm1899, %v1895, %v1897
        %1904 = vst [vmem:[#allocation3 + $0x30] sm:$0xff] %v1900
        %1905 = vst.msk [vmem:[#allocation3 + $0x38] sm:$0xf] %vm1130, %v1901
        %v1906 = vld [vmem:[%s1 + $0x2] sm:$0x3]
        %v1907 = vld [vmem:[#allocation3] sm:$0xff]
        %v1908 = vld [vmem:[#allocation3 + $0x8] sm:$0xf]
        %v1909 = vld [vmem:[#allocation3 + $0xc] sm:$0xff]
        %v1910 = vld [vmem:[#allocation3 + $0x14] sm:$0xf]
        %v1911 = vld [vmem:[#allocation3 + $0x18] sm:$0xff]
        %v1912 = vld [vmem:[#allocation3 + $0x20] sm:$0xf]
        %v1913 = vld [vmem:[#allocation3 + $0x24] sm:$0xff]
        %v1914 = vld [vmem:[#allocation3 + $0x2c] sm:$0xf]
        %v1915 = vld [vmem:[#allocation3 + $0x30] sm:$0xff]
        %v1916 = vld [vmem:[#allocation3 + $0x38] sm:$0xf]
        %1918 = vst [vmem:[#allocation1] ss:$4 sm:$0xff] %v1906
        %v1919 = vld.sshfl [vmem:[#allocation1] sm:$0xff pattern:$0x73625140]
        %1921 = vrot.lane.b32.xlu0 %v1919, 96
        %v1922 = vpop.permute.xlu0 %1921
        %v1933 = vunpack.c.l.b16 %v1907
        %v1934 = vunpack.c.h.b16 %v1907
        %v1935 = vunpack.c.l.b16 %v1908
        %v1936 = vunpack.c.l.b16 %v1909
        %v1937 = vunpack.c.h.b16 %v1909
        %v1938 = vunpack.c.l.b16 %v1910
        %v1939 = vunpack.c.l.b16 %v1911
        %v1940 = vunpack.c.h.b16 %v1911
        %v1941 = vunpack.c.l.b16 %v1912
        %v1942 = vunpack.c.l.b16 %v1913
        %v1943 = vunpack.c.h.b16 %v1913
        %v1944 = vunpack.c.l.b16 %v1914
        %v1945 = vunpack.c.l.b16 %v1915
        %v1946 = vunpack.c.h.b16 %v1915
        %v1947 = vunpack.c.l.b16 %v1916
        %v1948 = vpack.c.b16 %v1936, %v1933
        %v1949 = vpack.c.b16 %v1937, %v1934
        %v1950 = vpack.c.b16 %v1938, %v1935
        %v1951 = vpack.c.b16 %v1942, %v1939
        %v1952 = vpack.c.b16 %v1943, %v1940
        %v1953 = vpack.c.b16 %v1944, %v1941
        %v1954 = vpack.c.b16 %v1945, %v1945
        %v1955 = vpack.c.b16 %v1946, %v1946
        %v1956 = vpack.c.b16 %v1947, %v1947
        %v1964 = vsel %vm989, %v1922, 0
        %v1967 = vsel %vm1326, %v1954, 0
        %v1970 = vsel %vm1326, %v1955, 0
        %v1973 = vsel %vm1326, %v1956, 0
        %1975 = vmatpush.bf16.msra.mxu0 0
        %1976 = vmatpush.bf16.msra.mxu0 0
        %1977 = vmatpush.bf16.msra.mxu0 0
        %1978 = vmatpush.bf16.msra.mxu0 0
        %1979 = vmatpush.bf16.msra.mxu0 0
        %1980 = vmatpush.bf16.msra.mxu0 %v1967
        %1981 = vmatpush.bf16.msra.mxu0 %v1951
        %1982 = vmatpush.bf16.msra.mxu0 %v1948
        %1983 = vmatmul.bf16.gmra.mxu0 %v1964
        %v1984 = vpop.f32.mrf.mxu0
        %v1985 = vadd.f32 0.0, %v1984
        %v1986 = vpop.f32.mrf.mxu0
        %1987 = vdwg.mxu0
        %1988 = vmatpush.bf16.msra.mxu0 0
        %1989 = vmatpush.bf16.msra.mxu0 0
        %1990 = vmatpush.bf16.msra.mxu0 0
        %1991 = vmatpush.bf16.msra.mxu0 0
        %1992 = vmatpush.bf16.msra.mxu0 0
        %1993 = vmatpush.bf16.msra.mxu0 %v1970
        %1994 = vmatpush.bf16.msra.mxu0 %v1952
        %1995 = vmatpush.bf16.msra.mxu0 %v1949
        %1996 = vmatmul.bf16.gmra.mxu0 %v1964
        %v1997 = vpop.f32.mrf.mxu0
        %v1998 = vadd.f32 0.0, %v1997
        %v1999 = vpop.f32.mrf.mxu0
        %2000 = vdwg.mxu0
        %2001 = vmatpush.bf16.msra.mxu0 0
        %2002 = vmatpush.bf16.msra.mxu0 0
        %2003 = vmatpush.bf16.msra.mxu0 0
        %2004 = vmatpush.bf16.msra.mxu0 0
        %2005 = vmatpush.bf16.msra.mxu0 0
        %2006 = vmatpush.bf16.msra.mxu0 %v1973
        %2007 = vmatpush.bf16.msra.mxu0 %v1953
        %2008 = vmatpush.bf16.msra.mxu0 %v1950
        %2009 = vmatmul.bf16.gmra.mxu0 %v1964
        %v2010 = vpop.f32.mrf.mxu0
        %v2011 = vadd.f32 0.0, %v2010
        %v2012 = vpop.f32.mrf.mxu0
        %2013 = vdwg.mxu0
        %v2014 = vadd.f32 %v1829, %v1985
        %v2015 = vadd.f32 %v1830, %v1998
        %v2016 = vadd.f32 %v1831, %v2011
        %2018 = vrot.lane.b32.xlu0 %v2014, 108
        %v2019 = vpop.permute.xlu0 %2018
        %2021 = vrot.lane.b32.xlu0 %v2014, 88
        %v2022 = vpop.permute.xlu0 %2021
        %2024 = vrot.lane.b32.xlu0 %v2014, 68
        %v2025 = vpop.permute.xlu0 %2024
        %2027 = vrot.lane.b32.xlu0 %v2014, 48
        %v2028 = vpop.permute.xlu0 %2027
        %2030 = vrot.lane.b32.xlu0 %v2014, 28
        %v2031 = vpop.permute.xlu0 %2030
        %2034 = vrot.lane.b32.xlu0 %v2014, 8
        %v2035 = vpop.permute.xlu0 %2034
        %2036 = vrot.lane.b32.xlu0 %v2015, 8
        %v2037 = vpop.permute.xlu0 %2036
        %vm2038 = vcmask 64512
        %v2039 = vsel %vm2038, %v2035, %v2037
        %2041 = vrot.lane.b32.xlu0 %v2015, 116
        %v2042 = vpop.permute.xlu0 %2041
        %2044 = vrot.lane.b32.xlu0 %v2015, 96
        %v2045 = vpop.permute.xlu0 %2044
        %2047 = vrot.lane.b32.xlu0 %v2015, 76
        %v2048 = vpop.permute.xlu0 %2047
        %2050 = vrot.lane.b32.xlu0 %v2015, 56
        %v2051 = vpop.permute.xlu0 %2050
        %2053 = vrot.lane.b32.xlu0 %v2015, 36
        %v2054 = vpop.permute.xlu0 %2053
        %2057 = vrot.lane.b32.xlu0 %v2015, 16
        %v2058 = vpop.permute.xlu0 %2057
        %2059 = vrot.lane.b32.xlu0 %v2016, 16
        %v2060 = vpop.permute.xlu0 %2059
        %vm2061 = vcmask 130048
        %v2062 = vsel %vm2061, %v2058, %v2060
        %2064 = vrot.lane.b32.xlu0 %v2016, 124
        %v2065 = vpop.permute.xlu0 %2064
        %2067 = vrot.lane.b32.xlu0 %v2016, 104
        %v2068 = vpop.permute.xlu0 %2067
        %2070 = vrot.lane.b32.xlu0 %v2016, 84
        %v2071 = vpop.permute.xlu0 %2070
        %v2073 = vrot.slane %v2022, 4
        %v2074 = vsel %vm319, %v2073, %v2014
        %v2076 = vunpack.c.l.s4 1983009808
        %v2077 = vunpack.c.0.s8 %v2076
        %v2078 = vperm.slane %v2074, %v2077
        %v2079 = vrot.slane %v2025, 4
        %v2080 = vsel %vm319, %v2079, %v2019
        %v2082 = vunpack.c.l.s4 1983009808
        %v2083 = vunpack.c.0.s8 %v2082
        %v2084 = vperm.slane %v2080, %v2083
        %v2085 = vrot.slane %v2039, 4
        %v2086 = vsel %vm319, %v2085, %v2028
        %v2088 = vunpack.c.l.s4 1983009808
        %v2089 = vunpack.c.0.s8 %v2088
        %v2090 = vperm.slane %v2086, %v2089
        %v2091 = vrot.slane %v2042, 4
        %v2092 = vsel %vm319, %v2091, %v2031
        %v2094 = vunpack.c.l.s4 1983009808
        %v2095 = vunpack.c.0.s8 %v2094
        %v2096 = vperm.slane %v2092, %v2095
        %v2097 = vrot.slane %v2084, 4
        %v2098 = vsel %vm319, %v2097, %v2078
        %v2099 = vrot.slane %v2078, 4
        %v2100 = vsel %vm319, %v2084, %v2099
        %v2102 = vunpack.c.l.s4 1934713408
        %v2103 = vunpack.c.0.s8 %v2102
        %v2104 = vperm.slane %v2098, %v2103
        %v2106 = vunpack.c.l.s4 1934713408
        %v2107 = vunpack.c.0.s8 %v2106
        %v2108 = vperm.slane %v2100, %v2107
        %v2109 = vrot.slane %v2096, 4
        %v2110 = vsel %vm319, %v2109, %v2090
        %v2111 = vrot.slane %v2090, 4
        %v2112 = vsel %vm319, %v2096, %v2111
        %v2114 = vunpack.c.l.s4 1934713408
        %v2115 = vunpack.c.0.s8 %v2114
        %v2116 = vperm.slane %v2110, %v2115
        %v2118 = vunpack.c.l.s4 1934713408
        %v2119 = vunpack.c.0.s8 %v2118
        %v2120 = vperm.slane %v2112, %v2119
        %v2121 = vrot.slane %v2116, 4
        %v2122 = vsel %vm319, %v2121, %v2104
        %v2123 = vrot.slane %v2104, 4
        %v2124 = vsel %vm319, %v2116, %v2123
        %v2125 = vrot.slane %v2120, 4
        %v2126 = vsel %vm319, %v2125, %v2108
        %v2127 = vrot.slane %v2108, 4
        %v2128 = vsel %vm319, %v2120, %v2127
        %v2129 = vrot.slane %v2051, 4
        %v2130 = vsel %vm319, %v2129, %v2045
        %v2132 = vunpack.c.l.s4 1983009808
        %v2133 = vunpack.c.0.s8 %v2132
        %v2134 = vperm.slane %v2130, %v2133
        %v2135 = vrot.slane %v2054, 4
        %v2136 = vsel %vm319, %v2135, %v2048
        %v2138 = vunpack.c.l.s4 1983009808
        %v2139 = vunpack.c.0.s8 %v2138
        %v2140 = vperm.slane %v2136, %v2139
        %v2141 = vrot.slane %v2068, 4
        %v2142 = vsel %vm319, %v2141, %v2062
        %v2144 = vunpack.c.l.s4 1983009808
        %v2145 = vunpack.c.0.s8 %v2144
        %v2146 = vperm.slane %v2142, %v2145
        %v2147 = vrot.slane %v2071, 4
        %v2148 = vsel %vm319, %v2147, %v2065
        %v2150 = vunpack.c.l.s4 1983009808
        %v2151 = vunpack.c.0.s8 %v2150
        %v2152 = vperm.slane %v2148, %v2151
        %v2153 = vrot.slane %v2140, 4
        %v2154 = vsel %vm319, %v2153, %v2134
        %v2155 = vrot.slane %v2134, 4
        %v2156 = vsel %vm319, %v2140, %v2155
        %v2158 = vunpack.c.l.s4 1934713408
        %v2159 = vunpack.c.0.s8 %v2158
        %v2160 = vperm.slane %v2154, %v2159
        %v2162 = vunpack.c.l.s4 1934713408
        %v2163 = vunpack.c.0.s8 %v2162
        %v2164 = vperm.slane %v2156, %v2163
        %v2165 = vrot.slane %v2152, 4
        %v2166 = vsel %vm319, %v2165, %v2146
        %v2167 = vrot.slane %v2146, 4
        %v2168 = vsel %vm319, %v2152, %v2167
        %v2170 = vunpack.c.l.s4 1934713408
        %v2171 = vunpack.c.0.s8 %v2170
        %v2172 = vperm.slane %v2166, %v2171
        %v2174 = vunpack.c.l.s4 1934713408
        %v2175 = vunpack.c.0.s8 %v2174
        %v2176 = vperm.slane %v2168, %v2175
        %v2177 = vrot.slane %v2172, 4
        %v2178 = vsel %vm319, %v2177, %v2160
        %v2179 = vrot.slane %v2160, 4
        %v2180 = vsel %vm319, %v2172, %v2179
        %v2181 = vrot.slane %v2176, 4
        %v2182 = vsel %vm319, %v2181, %v2164
        %v2183 = vrot.slane %v2164, 4
        %v2184 = vsel %vm319, %v2176, %v2183
        %v2185 = vrot.slane %v2126, 4
        %v2186 = vsel %vm319, %v2185, %v2122
        %v2187 = vrot.slane %v2122, 4
        %v2188 = vsel %vm319, %v2126, %v2187
        %v2190 = vunpack.c.l.s4 1983009808
        %v2191 = vunpack.c.0.s8 %v2190
        %v2192 = vperm.slane %v2186, %v2191
        %v2194 = vunpack.c.l.s4 1983009808
        %v2195 = vunpack.c.0.s8 %v2194
        %v2196 = vperm.slane %v2188, %v2195
        %v2197 = vrot.slane %v2128, 4
        %v2198 = vsel %vm319, %v2197, %v2124
        %v2199 = vrot.slane %v2124, 4
        %v2200 = vsel %vm319, %v2128, %v2199
        %v2202 = vunpack.c.l.s4 1983009808
        %v2203 = vunpack.c.0.s8 %v2202
        %v2204 = vperm.slane %v2198, %v2203
        %v2206 = vunpack.c.l.s4 1983009808
        %v2207 = vunpack.c.0.s8 %v2206
        %v2208 = vperm.slane %v2200, %v2207
        %v2209 = vrot.slane %v2204, 4
        %v2210 = vsel %vm319, %v2209, %v2192
        %v2211 = vrot.slane %v2192, 4
        %v2212 = vsel %vm319, %v2204, %v2211
        %v2214 = vunpack.c.l.s4 1934713408
        %v2215 = vunpack.c.0.s8 %v2214
        %v2216 = vperm.slane %v2210, %v2215
        %v2218 = vunpack.c.l.s4 1934713408
        %v2219 = vunpack.c.0.s8 %v2218
        %v2220 = vperm.slane %v2212, %v2219
        %v2221 = vrot.slane %v2208, 4
        %v2222 = vsel %vm319, %v2221, %v2196
        %v2223 = vrot.slane %v2196, 4
        %v2224 = vsel %vm319, %v2208, %v2223
        %v2226 = vunpack.c.l.s4 1934713408
        %v2227 = vunpack.c.0.s8 %v2226
        %v2228 = vperm.slane %v2222, %v2227
        %v2230 = vunpack.c.l.s4 1934713408
        %v2231 = vunpack.c.0.s8 %v2230
        %v2232 = vperm.slane %v2224, %v2231
        %v2233 = vrot.slane %v2216, 4
        %v2234 = vsel %vm319, 0.0, %v2233
        %v2235 = vrot.slane %v2220, 4
        %v2236 = vsel %vm319, 0.0, %v2235
        %v2237 = vrot.slane %v2228, 4
        %v2238 = vsel %vm319, 0.0, %v2237
        %v2239 = vrot.slane %v2232, 4
        %v2240 = vsel %vm319, 0.0, %v2239
        %v2241 = vrot.slane %v2182, 4
        %v2242 = vsel %vm319, %v2241, %v2178
        %v2243 = vrot.slane %v2178, 4
        %v2244 = vsel %vm319, %v2182, %v2243
        %v2246 = vunpack.c.l.s4 1983009808
        %v2247 = vunpack.c.0.s8 %v2246
        %v2248 = vperm.slane %v2242, %v2247
        %v2250 = vunpack.c.l.s4 1983009808
        %v2251 = vunpack.c.0.s8 %v2250
        %v2252 = vperm.slane %v2244, %v2251
        %v2253 = vrot.slane %v2184, 4
        %v2254 = vsel %vm319, %v2253, %v2180
        %v2255 = vrot.slane %v2180, 4
        %v2256 = vsel %vm319, %v2184, %v2255
        %v2258 = vunpack.c.l.s4 1983009808
        %v2259 = vunpack.c.0.s8 %v2258
        %v2260 = vperm.slane %v2254, %v2259
        %v2262 = vunpack.c.l.s4 1983009808
        %v2263 = vunpack.c.0.s8 %v2262
        %v2264 = vperm.slane %v2256, %v2263
        %v2265 = vrot.slane %v2260, 4
        %v2266 = vsel %vm319, %v2265, %v2248
        %v2267 = vrot.slane %v2248, 4
        %v2268 = vsel %vm319, %v2260, %v2267
        %v2270 = vunpack.c.l.s4 1934713408
        %v2271 = vunpack.c.0.s8 %v2270
        %v2272 = vperm.slane %v2266, %v2271
        %v2274 = vunpack.c.l.s4 1934713408
        %v2275 = vunpack.c.0.s8 %v2274
        %v2276 = vperm.slane %v2268, %v2275
        %v2277 = vrot.slane %v2264, 4
        %v2278 = vsel %vm319, %v2277, %v2252
        %v2279 = vrot.slane %v2252, 4
        %v2280 = vsel %vm319, %v2264, %v2279
        %v2282 = vunpack.c.l.s4 1934713408
        %v2283 = vunpack.c.0.s8 %v2282
        %v2284 = vperm.slane %v2278, %v2283
        %v2286 = vunpack.c.l.s4 1934713408
        %v2287 = vunpack.c.0.s8 %v2286
        %v2288 = vperm.slane %v2280, %v2287
        %v2289 = vrot.slane %v2272, 4
        %v2290 = vsel %vm319, 0.0, %v2289
        %v2291 = vrot.slane %v2276, 4
        %v2292 = vsel %vm319, 0.0, %v2291
        %v2293 = vrot.slane %v2284, 4
        %v2294 = vsel %vm319, 0.0, %v2293
        %v2295 = vrot.slane %v2288, 4
        %v2296 = vsel %vm319, 0.0, %v2295
        %2298 = vrot.lane.b32.xlu0 %v2234, 16
        %v2299 = vpop.permute.xlu0 %2298
        %2302 = vrot.lane.b32.xlu0 %v2220, 32
        %v2303 = vpop.permute.xlu0 %2302
        %2306 = vrot.lane.b32.xlu0 %v2236, 48
        %v2307 = vpop.permute.xlu0 %2306
        %2310 = vrot.lane.b32.xlu0 %v2228, 64
        %v2311 = vpop.permute.xlu0 %2310
        %2314 = vrot.lane.b32.xlu0 %v2238, 80
        %v2315 = vpop.permute.xlu0 %2314
        %2318 = vrot.lane.b32.xlu0 %v2232, 96
        %v2319 = vpop.permute.xlu0 %2318
        %2322 = vrot.lane.b32.xlu0 %v2240, 112
        %v2323 = vpop.permute.xlu0 %2322
        %2326 = vrot.lane.b32.xlu0 %v2290, 16
        %v2327 = vpop.permute.xlu0 %2326
        %2330 = vrot.lane.b32.xlu0 %v2276, 32
        %v2331 = vpop.permute.xlu0 %2330
        %2334 = vrot.lane.b32.xlu0 %v2292, 48
        %v2335 = vpop.permute.xlu0 %2334
        %2338 = vrot.lane.b32.xlu0 %v2284, 64
        %v2339 = vpop.permute.xlu0 %2338
        %2342 = vrot.lane.b32.xlu0 %v2294, 80
        %v2343 = vpop.permute.xlu0 %2342
        %2346 = vrot.lane.b32.xlu0 %v2288, 96
        %v2347 = vpop.permute.xlu0 %2346
        %2350 = vrot.lane.b32.xlu0 %v2296, 112
        %v2351 = vpop.permute.xlu0 %2350
        %v2353 = vsel %vm2061, %v2216, %v2299
        %v2354 = vsel %vm1007, %v2353, %v2303
        %vm2355 = vcmask 392192
        %v2356 = vsel %vm2355, %v2354, %v2307
        %vm2357 = vcmask 523264
        %v2358 = vsel %vm2357, %v2356, %v2311
        %v2359 = vsel %vm995, %v2358, %v2315
        %vm2360 = vcmask 785408
        %v2361 = vsel %vm2360, %v2359, %v2319
        %v2362 = vsel %vm1019, %v2361, %v2323
        %v2363 = vsel %vm2061, %v2272, %v2327
        %v2364 = vsel %vm1007, %v2363, %v2331
        %v2365 = vsel %vm2355, %v2364, %v2335
        %v2366 = vsel %vm2357, %v2365, %v2339
        %v2367 = vsel %vm995, %v2366, %v2343
        %v2368 = vsel %vm2360, %v2367, %v2347
        %v2369 = vsel %vm1019, %v2368, %v2351
        %v2370 = vld [vmem:[%s2] sm:$0xf]
        %2372 = vset.pattern.permute.xlu0 0
        %2373 = vperm.xlu0 %2372, %v2370
        %v2374 = vpop.permute.xlu0 %2373
        %v2376 = vadd.f32 %v2362, %v2374
        %v2377 = vadd.f32 %v2369, %v2374
        %v2378 = vsel %vm1326, %v2376, 0.0
        %v2379 = vsel %vm1326, %v2377, 0.0
        %v2380 = vadd.f32 %v2378, %v2379
        %2381 = vadd.xlane.f32.xlu0 %v2380
        %v2382 = vpop.xlane.xlu0 %2381
        %v2383 = vmul.f32 %v2382, 0.00390625
        %v2384 = vsub.f32 %v2376, %v2383
        %v2385 = vsub.f32 %v2377, %v2383
        %v2386 = vmul.f32 %v2384, %v2384
        %v2387 = vmul.f32 %v2385, %v2385
        %v2388 = vsel %vm1326, %v2386, 0.0
        %v2389 = vsel %vm1326, %v2387, 0.0
        %v2390 = vadd.f32 %v2388, %v2389
        %2391 = vadd.xlane.f32.xlu0 %v2390
        %v2392 = vpop.xlane.xlu0 %2391
        %v2393 = vmul.f32 %v2392, 0.00390625
        %v2394 = vadd.f32 %v2393, 1e-05
        %v2395 = vrsqrt.pop %v2394
        %v2396 = vmul.f32 %v2395, %v2394
        %v2397 = vmul.f32 %v2396, %v2395
        %v2398 = vmul.f32 0.5, %v2397
        %v2399 = vsub.f32 1.5, %v2398
        %v2400 = vmul.f32 %v2395, %v2399
        %vm2401 = vweird.f32 %v2394
        %vm2402 = vweird.f32 %v2395
        %vm2403 = vmor %vm2401, %vm2402
        %v2404 = vsel %vm2403, %v2395, %v2400
        %v2405 = vmul.f32 %v2384, %v2404
        %v2406 = vmul.f32 %v2385, %v2404
        %v2407 = vmax.f32 %v2405, 0.0
        %v2408 = vmax.f32 %v2406, 0.0
        %2410 = vrot.lane.b32.xlu0 %v2407, 112
        %v2411 = vpop.permute.xlu0 %2410
        %2413 = vrot.lane.b32.xlu0 %v2407, 96
        %v2414 = vpop.permute.xlu0 %2413
        %2416 = vrot.lane.b32.xlu0 %v2407, 80
        %v2417 = vpop.permute.xlu0 %2416
        %2419 = vrot.lane.b32.xlu0 %v2407, 64
        %v2420 = vpop.permute.xlu0 %2419
        %2422 = vrot.lane.b32.xlu0 %v2407, 48
        %v2423 = vpop.permute.xlu0 %2422
        %2425 = vrot.lane.b32.xlu0 %v2407, 32
        %v2426 = vpop.permute.xlu0 %2425
        %2428 = vrot.lane.b32.xlu0 %v2407, 16
        %v2429 = vpop.permute.xlu0 %2428
        %2432 = vrot.lane.b32.xlu0 %v2408, 112
        %v2433 = vpop.permute.xlu0 %2432
        %2435 = vrot.lane.b32.xlu0 %v2408, 96
        %v2436 = vpop.permute.xlu0 %2435
        %2438 = vrot.lane.b32.xlu0 %v2408, 80
        %v2439 = vpop.permute.xlu0 %2438
        %2441 = vrot.lane.b32.xlu0 %v2408, 64
        %v2442 = vpop.permute.xlu0 %2441
        %2444 = vrot.lane.b32.xlu0 %v2408, 48
        %v2445 = vpop.permute.xlu0 %2444
        %2447 = vrot.lane.b32.xlu0 %v2408, 32
        %v2448 = vpop.permute.xlu0 %2447
        %2450 = vrot.lane.b32.xlu0 %v2408, 16
        %v2451 = vpop.permute.xlu0 %2450
        %v2453 = vrot.slane %v2414, 4
        %v2454 = vsel %vm319, %v2453, %v2407
        %v2456 = vunpack.c.l.s4 1983009808
        %v2457 = vunpack.c.0.s8 %v2456
        %v2458 = vperm.slane %v2454, %v2457
        %v2459 = vrot.slane %v2417, 4
        %v2460 = vsel %vm319, %v2459, %v2411
        %v2462 = vunpack.c.l.s4 1983009808
        %v2463 = vunpack.c.0.s8 %v2462
        %v2464 = vperm.slane %v2460, %v2463
        %v2465 = vrot.slane %v2426, 4
        %v2466 = vsel %vm319, %v2465, %v2420
        %v2468 = vunpack.c.l.s4 1983009808
        %v2469 = vunpack.c.0.s8 %v2468
        %v2470 = vperm.slane %v2466, %v2469
        %v2471 = vrot.slane %v2429, 4
        %v2472 = vsel %vm319, %v2471, %v2423
        %v2474 = vunpack.c.l.s4 1983009808
        %v2475 = vunpack.c.0.s8 %v2474
        %v2476 = vperm.slane %v2472, %v2475
        %v2477 = vrot.slane %v2464, 4
        %v2478 = vsel %vm319, %v2477, %v2458
        %v2479 = vrot.slane %v2458, 4
        %v2480 = vsel %vm319, %v2464, %v2479
        %v2482 = vunpack.c.l.s4 1934713408
        %v2483 = vunpack.c.0.s8 %v2482
        %v2484 = vperm.slane %v2478, %v2483
        %v2486 = vunpack.c.l.s4 1934713408
        %v2487 = vunpack.c.0.s8 %v2486
        %v2488 = vperm.slane %v2480, %v2487
        %v2489 = vrot.slane %v2476, 4
        %v2490 = vsel %vm319, %v2489, %v2470
        %v2491 = vrot.slane %v2470, 4
        %v2492 = vsel %vm319, %v2476, %v2491
        %v2494 = vunpack.c.l.s4 1934713408
        %v2495 = vunpack.c.0.s8 %v2494
        %v2496 = vperm.slane %v2490, %v2495
        %v2498 = vunpack.c.l.s4 1934713408
        %v2499 = vunpack.c.0.s8 %v2498
        %v2500 = vperm.slane %v2492, %v2499
        %v2501 = vrot.slane %v2496, 4
        %v2502 = vsel %vm319, %v2501, %v2484
        %v2503 = vrot.slane %v2484, 4
        %v2504 = vsel %vm319, %v2496, %v2503
        %v2505 = vrot.slane %v2500, 4
        %v2506 = vsel %vm319, %v2505, %v2488
        %v2507 = vrot.slane %v2488, 4
        %v2508 = vsel %vm319, %v2500, %v2507
        %v2509 = vrot.slane %v2436, 4
        %v2510 = vsel %vm319, %v2509, %v2408
        %v2512 = vunpack.c.l.s4 1983009808
        %v2513 = vunpack.c.0.s8 %v2512
        %v2514 = vperm.slane %v2510, %v2513
        %v2515 = vrot.slane %v2439, 4
        %v2516 = vsel %vm319, %v2515, %v2433
        %v2518 = vunpack.c.l.s4 1983009808
        %v2519 = vunpack.c.0.s8 %v2518
        %v2520 = vperm.slane %v2516, %v2519
        %v2521 = vrot.slane %v2448, 4
        %v2522 = vsel %vm319, %v2521, %v2442
        %v2524 = vunpack.c.l.s4 1983009808
        %v2525 = vunpack.c.0.s8 %v2524
        %v2526 = vperm.slane %v2522, %v2525
        %v2527 = vrot.slane %v2451, 4
        %v2528 = vsel %vm319, %v2527, %v2445
        %v2530 = vunpack.c.l.s4 1983009808
        %v2531 = vunpack.c.0.s8 %v2530
        %v2532 = vperm.slane %v2528, %v2531
        %v2533 = vrot.slane %v2520, 4
        %v2534 = vsel %vm319, %v2533, %v2514
        %v2535 = vrot.slane %v2514, 4
        %v2536 = vsel %vm319, %v2520, %v2535
        %v2538 = vunpack.c.l.s4 1934713408
        %v2539 = vunpack.c.0.s8 %v2538
        %v2540 = vperm.slane %v2534, %v2539
        %v2542 = vunpack.c.l.s4 1934713408
        %v2543 = vunpack.c.0.s8 %v2542
        %v2544 = vperm.slane %v2536, %v2543
        %v2545 = vrot.slane %v2532, 4
        %v2546 = vsel %vm319, %v2545, %v2526
        %v2547 = vrot.slane %v2526, 4
        %v2548 = vsel %vm319, %v2532, %v2547
        %v2550 = vunpack.c.l.s4 1934713408
        %v2551 = vunpack.c.0.s8 %v2550
        %v2552 = vperm.slane %v2546, %v2551
        %v2554 = vunpack.c.l.s4 1934713408
        %v2555 = vunpack.c.0.s8 %v2554
        %v2556 = vperm.slane %v2548, %v2555
        %v2557 = vrot.slane %v2552, 4
        %v2558 = vsel %vm319, %v2557, %v2540
        %v2559 = vrot.slane %v2540, 4
        %v2560 = vsel %vm319, %v2552, %v2559
        %v2561 = vrot.slane %v2556, 4
        %v2562 = vsel %vm319, %v2561, %v2544
        %v2563 = vrot.slane %v2544, 4
        %v2564 = vsel %vm319, %v2556, %v2563
        %2573 = vrot.lane.b32.xlu0 %v2502, 126
        %v2574 = vpop.permute.xlu0 %2573
        %2575 = vrot.lane.b32.xlu0 %v2558, 126
        %v2576 = vpop.permute.xlu0 %2575
        %2577 = vrot.lane.b32.xlu0 %v2504, 126
        %v2578 = vpop.permute.xlu0 %2577
        %2579 = vrot.lane.b32.xlu0 %v2560, 126
        %v2580 = vpop.permute.xlu0 %2579
        %2581 = vrot.lane.b32.xlu0 %v2506, 126
        %v2582 = vpop.permute.xlu0 %2581
        %2583 = vrot.lane.b32.xlu0 %v2562, 126
        %v2584 = vpop.permute.xlu0 %2583
        %2585 = vrot.lane.b32.xlu0 %v2508, 126
        %v2586 = vpop.permute.xlu0 %2585
        %2587 = vrot.lane.b32.xlu0 %v2564, 126
        %v2588 = vpop.permute.xlu0 %2587
        %v2597 = vsel %vm541, %v2574, %v2502
        %v2598 = vsel %vm541, %v2576, %v2558
        %v2599 = vsel %vm541, %v2578, %v2504
        %v2600 = vsel %vm541, %v2580, %v2560
        %v2601 = vsel %vm541, %v2582, %v2506
        %v2602 = vsel %vm541, %v2584, %v2562
        %v2603 = vsel %vm541, %v2586, %v2508
        %v2604 = vsel %vm541, %v2588, %v2564
        %2605 = vrot.lane.b32.xlu0 %v2502, 114
        %v2606 = vpop.permute.xlu0 %2605
        %2607 = vrot.lane.b32.xlu0 %v2558, 114
        %v2608 = vpop.permute.xlu0 %2607
        %2609 = vrot.lane.b32.xlu0 %v2504, 114
        %v2610 = vpop.permute.xlu0 %2609
        %2611 = vrot.lane.b32.xlu0 %v2560, 114
        %v2612 = vpop.permute.xlu0 %2611
        %2613 = vrot.lane.b32.xlu0 %v2506, 114
        %v2614 = vpop.permute.xlu0 %2613
        %2615 = vrot.lane.b32.xlu0 %v2562, 114
        %v2616 = vpop.permute.xlu0 %2615
        %2617 = vrot.lane.b32.xlu0 %v2508, 114
        %v2618 = vpop.permute.xlu0 %2617
        %2619 = vrot.lane.b32.xlu0 %v2564, 114
        %v2620 = vpop.permute.xlu0 %2619
        %2629 = vrot.lane.b32.xlu0 %v2502, 116
        %v2630 = vpop.permute.xlu0 %2629
        %2631 = vrot.lane.b32.xlu0 %v2558, 116
        %v2632 = vpop.permute.xlu0 %2631
        %2633 = vrot.lane.b32.xlu0 %v2504, 116
        %v2634 = vpop.permute.xlu0 %2633
        %2635 = vrot.lane.b32.xlu0 %v2560, 116
        %v2636 = vpop.permute.xlu0 %2635
        %2637 = vrot.lane.b32.xlu0 %v2506, 116
        %v2638 = vpop.permute.xlu0 %2637
        %2639 = vrot.lane.b32.xlu0 %v2562, 116
        %v2640 = vpop.permute.xlu0 %2639
        %2641 = vrot.lane.b32.xlu0 %v2508, 116
        %v2642 = vpop.permute.xlu0 %2641
        %2643 = vrot.lane.b32.xlu0 %v2564, 116
        %v2644 = vpop.permute.xlu0 %2643
        %v2653 = vsel %vm541, %v2606, %v2630
        %v2654 = vsel %vm541, %v2608, %v2632
        %v2655 = vsel %vm541, %v2610, %v2634
        %v2656 = vsel %vm541, %v2612, %v2636
        %v2657 = vsel %vm541, %v2614, %v2638
        %v2658 = vsel %vm541, %v2616, %v2640
        %v2659 = vsel %vm541, %v2618, %v2642
        %v2660 = vsel %vm541, %v2620, %v2644
        %2661 = vrot.lane.b32.xlu0 %v2502, 2
        %v2662 = vpop.permute.xlu0 %2661
        %2663 = vrot.lane.b32.xlu0 %v2558, 2
        %v2664 = vpop.permute.xlu0 %2663
        %2665 = vrot.lane.b32.xlu0 %v2504, 2
        %v2666 = vpop.permute.xlu0 %2665
        %2667 = vrot.lane.b32.xlu0 %v2560, 2
        %v2668 = vpop.permute.xlu0 %2667
        %2669 = vrot.lane.b32.xlu0 %v2506, 2
        %v2670 = vpop.permute.xlu0 %2669
        %2671 = vrot.lane.b32.xlu0 %v2562, 2
        %v2672 = vpop.permute.xlu0 %2671
        %2673 = vrot.lane.b32.xlu0 %v2508, 2
        %v2674 = vpop.permute.xlu0 %2673
        %2675 = vrot.lane.b32.xlu0 %v2564, 2
        %v2676 = vpop.permute.xlu0 %2675
        %2693 = vrot.lane.b32.xlu0 %v2653, 18
        %v2694 = vpop.permute.xlu0 %2693
        %2695 = vrot.lane.b32.xlu0 %v2654, 18
        %v2696 = vpop.permute.xlu0 %2695
        %2697 = vrot.lane.b32.xlu0 %v2655, 18
        %v2698 = vpop.permute.xlu0 %2697
        %2699 = vrot.lane.b32.xlu0 %v2656, 18
        %v2700 = vpop.permute.xlu0 %2699
        %2701 = vrot.lane.b32.xlu0 %v2657, 18
        %v2702 = vpop.permute.xlu0 %2701
        %2703 = vrot.lane.b32.xlu0 %v2658, 18
        %v2704 = vpop.permute.xlu0 %2703
        %2705 = vrot.lane.b32.xlu0 %v2659, 18
        %v2706 = vpop.permute.xlu0 %2705
        %2707 = vrot.lane.b32.xlu0 %v2660, 18
        %v2708 = vpop.permute.xlu0 %2707
        %v2717 = vsel %vm755, %v2597, %v2662
        %v2718 = vsel %vm755, %v2598, %v2664
        %v2719 = vsel %vm755, %v2599, %v2666
        %v2720 = vsel %vm755, %v2600, %v2668
        %v2721 = vsel %vm755, %v2601, %v2670
        %v2722 = vsel %vm755, %v2602, %v2672
        %v2723 = vsel %vm755, %v2603, %v2674
        %v2724 = vsel %vm755, %v2604, %v2676
        %v2725 = vsel %vm764, %v2717, %v2694
        %v2726 = vsel %vm764, %v2718, %v2696
        %v2727 = vsel %vm764, %v2719, %v2698
        %v2728 = vsel %vm764, %v2720, %v2700
        %v2729 = vsel %vm764, %v2721, %v2702
        %v2730 = vsel %vm764, %v2722, %v2704
        %v2731 = vsel %vm764, %v2723, %v2706
        %v2732 = vsel %vm764, %v2724, %v2708
        %v2733 = vpack.c.bf16 %v2725, %v2725
        %v2734 = vpack.c.bf16 %v2726, %v2726
        %v2735 = vpack.c.bf16 %v2727, %v2727
        %v2736 = vpack.c.bf16 %v2728, %v2728
        %v2737 = vpack.c.bf16 %v2729, %v2729
        %v2738 = vpack.c.bf16 %v2730, %v2730
        %v2739 = vpack.c.bf16 %v2731, %v2731
        %v2740 = vpack.c.bf16 %v2732, %v2732
        %v2743 = vpack.i.b16 %v2735, %v2733
        %v2744 = vshrl.u32 %v2733, 16
        %v2745 = vshrl.u32 %v2735, 16
        %v2746 = vpack.i.b16 %v2745, %v2744
        %v2749 = vpack.i.b16 %v2739, %v2737
        %v2750 = vshrl.u32 %v2737, 16
        %v2751 = vshrl.u32 %v2739, 16
        %v2752 = vpack.i.b16 %v2751, %v2750
        %v2755 = vpack.i.b16 %v2736, %v2734
        %v2756 = vshrl.u32 %v2734, 16
        %v2757 = vshrl.u32 %v2736, 16
        %v2758 = vpack.i.b16 %v2757, %v2756
        %v2761 = vpack.i.b16 %v2740, %v2738
        %v2762 = vshrl.u32 %v2738, 16
        %v2763 = vshrl.u32 %v2740, 16
        %v2764 = vpack.i.b16 %v2763, %v2762
        %v2767 = vunpack.c.l.s4 1983009808
        %v2768 = vunpack.c.0.s8 %v2767
        %v2769 = vperm.slane %v2743, %v2768
        %v2772 = vunpack.c.l.s4 1983009808
        %v2773 = vunpack.c.0.s8 %v2772
        %v2774 = vperm.slane %v2749, %v2773
        %v2775 = vrot.slane %v2774, 4
        %v2776 = vsel %vm816, %v2775, %v2769
        %v2777 = vrot.slane %v2769, 4
        %v2778 = vsel %vm816, %v2774, %v2777
        %v2780 = vunpack.c.l.s4 1934713408
        %v2781 = vunpack.c.0.s8 %v2780
        %v2782 = vperm.slane %v2776, %v2781
        %v2784 = vunpack.c.l.s4 1934713408
        %v2785 = vunpack.c.0.s8 %v2784
        %v2786 = vperm.slane %v2778, %v2785
        %v2787 = vrot.slane %v2782, 4
        %v2788 = vsel %vm816, 0, %v2787
        %v2789 = vrot.slane %v2786, 4
        %v2790 = vsel %vm816, 0, %v2789
        %v2793 = vunpack.c.l.s4 1983009808
        %v2794 = vunpack.c.0.s8 %v2793
        %v2795 = vperm.slane %v2746, %v2794
        %v2798 = vunpack.c.l.s4 1983009808
        %v2799 = vunpack.c.0.s8 %v2798
        %v2800 = vperm.slane %v2752, %v2799
        %v2801 = vrot.slane %v2800, 4
        %v2802 = vsel %vm816, %v2801, %v2795
        %v2803 = vrot.slane %v2795, 4
        %v2804 = vsel %vm816, %v2800, %v2803
        %v2806 = vunpack.c.l.s4 1934713408
        %v2807 = vunpack.c.0.s8 %v2806
        %v2808 = vperm.slane %v2802, %v2807
        %v2810 = vunpack.c.l.s4 1934713408
        %v2811 = vunpack.c.0.s8 %v2810
        %v2812 = vperm.slane %v2804, %v2811
        %v2813 = vrot.slane %v2808, 4
        %v2814 = vsel %vm816, 0, %v2813
        %v2815 = vrot.slane %v2812, 4
        %v2816 = vsel %vm816, 0, %v2815
        %v2819 = vunpack.c.l.s4 1983009808
        %v2820 = vunpack.c.0.s8 %v2819
        %v2821 = vperm.slane %v2755, %v2820
        %v2824 = vunpack.c.l.s4 1983009808
        %v2825 = vunpack.c.0.s8 %v2824
        %v2826 = vperm.slane %v2761, %v2825
        %v2827 = vrot.slane %v2826, 4
        %v2828 = vsel %vm816, %v2827, %v2821
        %v2829 = vrot.slane %v2821, 4
        %v2830 = vsel %vm816, %v2826, %v2829
        %v2832 = vunpack.c.l.s4 1934713408
        %v2833 = vunpack.c.0.s8 %v2832
        %v2834 = vperm.slane %v2828, %v2833
        %v2836 = vunpack.c.l.s4 1934713408
        %v2837 = vunpack.c.0.s8 %v2836
        %v2838 = vperm.slane %v2830, %v2837
        %v2839 = vrot.slane %v2834, 4
        %v2840 = vsel %vm816, 0, %v2839
        %v2841 = vrot.slane %v2838, 4
        %v2842 = vsel %vm816, 0, %v2841
        %v2845 = vunpack.c.l.s4 1983009808
        %v2846 = vunpack.c.0.s8 %v2845
        %v2847 = vperm.slane %v2758, %v2846
        %v2850 = vunpack.c.l.s4 1983009808
        %v2851 = vunpack.c.0.s8 %v2850
        %v2852 = vperm.slane %v2764, %v2851
        %v2853 = vrot.slane %v2852, 4
        %v2854 = vsel %vm816, %v2853, %v2847
        %v2855 = vrot.slane %v2847, 4
        %v2856 = vsel %vm816, %v2852, %v2855
        %v2858 = vunpack.c.l.s4 1934713408
        %v2859 = vunpack.c.0.s8 %v2858
        %v2860 = vperm.slane %v2854, %v2859
        %v2862 = vunpack.c.l.s4 1934713408
        %v2863 = vunpack.c.0.s8 %v2862
        %v2864 = vperm.slane %v2856, %v2863
        %v2865 = vrot.slane %v2860, 4
        %v2866 = vsel %vm816, 0, %v2865
        %v2867 = vrot.slane %v2864, 4
        %v2868 = vsel %vm816, 0, %v2867
        %v2870 = vunpack.c.l.b16 %v2808
        %v2871 = vpack.c.b16 %v2870, %v2870
        %2872 = vrot.lane.b32.xlu0 %v2871, 20
        %v2873 = vpop.permute.xlu0 %2872
        %v2875 = vunpack.c.l.b16 %v2788
        %v2876 = vpack.c.b16 %v2875, %v2875
        %2877 = vrot.lane.b32.xlu0 %v2876, 40
        %v2878 = vpop.permute.xlu0 %2877
        %v2880 = vunpack.c.l.b16 %v2814
        %v2881 = vpack.c.b16 %v2880, %v2880
        %2882 = vrot.lane.b32.xlu0 %v2881, 60
        %v2883 = vpop.permute.xlu0 %2882
        %v2885 = vunpack.c.l.b16 %v2786
        %v2886 = vpack.c.b16 %v2885, %v2885
        %2887 = vrot.lane.b32.xlu0 %v2886, 80
        %v2888 = vpop.permute.xlu0 %2887
        %v2890 = vunpack.c.l.b16 %v2812
        %v2891 = vpack.c.b16 %v2890, %v2890
        %2892 = vrot.lane.b32.xlu0 %v2891, 100
        %v2893 = vpop.permute.xlu0 %2892
        %v2895 = vunpack.c.l.b16 %v2790
        %v2896 = vpack.c.b16 %v2895, %v2895
        %2897 = vrot.lane.b32.xlu0 %v2896, 120
        %v2898 = vpop.permute.xlu0 %2897
        %v2900 = vunpack.c.l.b16 %v2816
        %v2901 = vpack.c.b16 %v2900, %v2900
        %2902 = vrot.lane.b32.xlu0 %v2901, 12
        %v2903 = vpop.permute.xlu0 %2902
        %v2905 = vunpack.c.l.b16 %v2834
        %v2906 = vpack.c.b16 %v2905, %v2905
        %2907 = vrot.lane.b32.xlu0 %v2906, 32
        %v2908 = vpop.permute.xlu0 %2907
        %v2910 = vunpack.c.l.b16 %v2860
        %v2911 = vpack.c.b16 %v2910, %v2910
        %2912 = vrot.lane.b32.xlu0 %v2911, 52
        %v2913 = vpop.permute.xlu0 %2912
        %v2915 = vunpack.c.l.b16 %v2840
        %v2916 = vpack.c.b16 %v2915, %v2915
        %2917 = vrot.lane.b32.xlu0 %v2916, 72
        %v2918 = vpop.permute.xlu0 %2917
        %v2920 = vunpack.c.l.b16 %v2866
        %v2921 = vpack.c.b16 %v2920, %v2920
        %2922 = vrot.lane.b32.xlu0 %v2921, 92
        %v2923 = vpop.permute.xlu0 %2922
        %v2925 = vunpack.c.l.b16 %v2838
        %v2926 = vpack.c.b16 %v2925, %v2925
        %2927 = vrot.lane.b32.xlu0 %v2926, 112
        %v2928 = vpop.permute.xlu0 %2927
        %v2930 = vunpack.c.l.b16 %v2864
        %v2931 = vpack.c.b16 %v2930, %v2930
        %2932 = vrot.lane.b32.xlu0 %v2931, 4
        %v2933 = vpop.permute.xlu0 %2932
        %v2935 = vunpack.c.l.b16 %v2842
        %v2936 = vpack.c.b16 %v2935, %v2935
        %2937 = vrot.lane.b32.xlu0 %v2936, 24
        %v2938 = vpop.permute.xlu0 %2937
        %v2940 = vunpack.c.l.b16 %v2868
        %v2941 = vpack.c.b16 %v2940, %v2940
        %2942 = vrot.lane.b32.xlu0 %v2941, 44
        %v2943 = vpop.permute.xlu0 %2942
        %v2946 = vsel %vm985, %v2782, %v2873
        %v2948 = vsel %vm989, %v2946, %v2878
        %v2950 = vsel %vm992, %v2948, %v2883
        %v2952 = vsel %vm995, %v2950, %v2888
        %v2954 = vsel %vm998, %v2952, %v2893
        %v2956 = vsel %vm1001, %v2954, %v2898
        %v2958 = vsel %vm1004, %v2898, %v2903
        %v2960 = vsel %vm1007, %v2958, %v2908
        %v2962 = vsel %vm1010, %v2960, %v2913
        %v2964 = vsel %vm1013, %v2962, %v2918
        %v2966 = vsel %vm1016, %v2964, %v2923
        %v2968 = vsel %vm1019, %v2966, %v2928
        %v2970 = vsel %vm1022, %v2928, %v2933
        %v2972 = vsel %vm1025, %v2970, %v2938
        %v2974 = vsel %vm1028, %v2972, %v2943
        %v2978 = vunpack.c.l.b16 %v2956
        %v2979 = vunpack.c.l.b16 %v2968
        %v2980 = vunpack.c.l.b16 %v2974
        %v2981 = vpack.c.b16 %v2979, %v2978
        %v2982 = vpack.c.b16 %v2980, %v2980
        %2983 = vrot.lane.b32.xlu0 %v2981, 40
        %v2984 = vpop.permute.xlu0 %2983
        %2985 = vrot.lane.b32.xlu0 %v2982, 40
        %v2986 = vpop.permute.xlu0 %2985
        %v2987 = vrot.slane %v2984, 4
        %v2988 = vsel %vm1044, %v2987, %v2984
        %v2989 = vsel %vm1044, %v2987, %v2986
        %2992 = vst.msk [vmem:[#allocation2] sm:$0x33] %vm1051, %v2988
        %2993 = vst.msk [vmem:[#allocation2 + $0x8] sm:$0x3] %vm1053, %v2989
        %v2998 = vunpack.c.l.b16 %v2733
        %v2999 = vunpack.c.l.b16 %v2735
        %v3000 = vunpack.c.l.b16 %v2737
        %v3001 = vunpack.c.l.b16 %v2739
        %v3002 = vrot.slane %v2998, 2
        %v3003 = vrot.slane %v2999, 1
        %v3004 = vsel %vm1065, %v3003, %v3002
        %v3005 = vsel %vm1067, %v3000, %v3004
        %v3006 = vrot.slane %v3001, 7
        %v3007 = vsel %vm1070, %v3006, %v3005
        %v3008 = vpack.c.b16 %v3007, %v3007
        %3010 = vst.msk [vmem:[#allocation2] sm:$0x3] %vm1074, %v3008
        %v3011 = vrot.slane %v2998, 1
        %v3012 = vsel %vm1065, %v2999, %v3011
        %v3013 = vrot.slane %v3000, 7
        %v3014 = vsel %vm1067, %v3013, %v3012
        %v3015 = vrot.slane %v3001, 6
        %v3016 = vsel %vm1070, %v3015, %v3014
        %v3017 = vpack.c.b16 %v3016, %v3016
        %3018 = vrot.lane.b32.xlu0 %v3017, 20
        %v3019 = vpop.permute.xlu0 %3018
        %3021 = vst.msk [vmem:[#allocation2] sm:$0x3] %vm1086, %v3019
        %v3026 = vunpack.c.l.b16 %v2734
        %v3027 = vunpack.c.l.b16 %v2736
        %v3028 = vunpack.c.l.b16 %v2738
        %v3029 = vunpack.c.l.b16 %v2740
        %v3030 = vrot.slane %v3026, 6
        %v3031 = vrot.slane %v3027, 5
        %v3032 = vsel %vm1065, %v3031, %v3030
        %v3033 = vrot.slane %v3028, 4
        %v3034 = vsel %vm1067, %v3033, %v3032
        %v3035 = vrot.slane %v3029, 3
        %v3036 = vsel %vm1070, %v3035, %v3034
        %v3037 = vpack.c.b16 %v3036, %v3036
        %3038 = vrot.lane.b32.xlu0 %v3037, 104
        %v3039 = vpop.permute.xlu0 %3038
        %3041 = vst.msk [vmem:[#allocation2 + $0x8] sm:$0x3] %vm1107, %v3039
        %v3042 = vrot.slane %v3026, 5
        %v3043 = vrot.slane %v3027, 4
        %v3044 = vsel %vm1065, %v3043, %v3042
        %v3045 = vrot.slane %v3028, 3
        %v3046 = vsel %vm1067, %v3045, %v3044
        %v3047 = vrot.slane %v3029, 2
        %v3048 = vsel %vm1070, %v3047, %v3046
        %v3049 = vpack.c.b16 %v3048, %v3048
        %3050 = vrot.lane.b32.xlu0 %v3049, 124
        %v3051 = vpop.permute.xlu0 %3050
        %v3052 = vrot.slane %v3051, 4
        %v3053 = vsel %vm1120, %v3052, %v3051
        %3055 = vst.msk [vmem:[#allocation2 + $0x8] sm:$0x33] %vm1125, %v3053
        %v3056 = vld [vmem:[#allocation2] sm:$0xff]
        %v3057 = vld [vmem:[#allocation2 + $0x8] sm:$0xf]
        %3058 = vst [vmem:[#allocation3] sm:$0xff] %v3056
        %3059 = vst.msk [vmem:[#allocation3 + $0x8] sm:$0xf] %vm1130, %v3057
        %3062 = vrot.lane.b32.xlu0 %v3056, 127
        %v3063 = vpop.permute.xlu0 %3062
        %3064 = vrot.lane.b32.xlu0 %v3057, 127
        %v3065 = vpop.permute.xlu0 %3064
        %v3066 = vrot.slane %v3063, 4
        %v3067 = vrot.slane %v3065, 4
        %v3068 = vsel %vm1140, %v3066, %v3067
        %v3069 = vsel %vm1142, %v3063, %v3068
        %3072 = vst [vmem:[#allocation3 + $0xc] sm:$0xff] %v3069
        %3073 = vst.msk [vmem:[#allocation3 + $0x14] sm:$0xf] %vm1130, %v3065
        %3074 = vrot.lane.b32.xlu0 %v3056, 126
        %v3075 = vpop.permute.xlu0 %3074
        %3076 = vrot.lane.b32.xlu0 %v3057, 126
        %v3077 = vpop.permute.xlu0 %3076
        %v3078 = vrot.slane %v3075, 4
        %v3079 = vrot.slane %v3077, 4
        %v3080 = vsel %vm1140, %v3078, %v3079
        %v3081 = vsel %vm1155, %v3075, %v3080
        %3084 = vst [vmem:[#allocation3 + $0x18] sm:$0xff] %v3081
        %3085 = vst.msk [vmem:[#allocation3 + $0x20] sm:$0xf] %vm1130, %v3077
        %3086 = vrot.lane.b32.xlu0 %v3056, 125
        %v3087 = vpop.permute.xlu0 %3086
        %3088 = vrot.lane.b32.xlu0 %v3057, 125
        %v3089 = vpop.permute.xlu0 %3088
        %v3090 = vrot.slane %v3087, 4
        %v3091 = vrot.slane %v3089, 4
        %v3092 = vsel %vm1140, %v3090, %v3091
        %v3093 = vsel %vm1168, %v3087, %v3092
        %3096 = vst [vmem:[#allocation3 + $0x24] sm:$0xff] %v3093
        %3097 = vst.msk [vmem:[#allocation3 + $0x2c] sm:$0xf] %vm1130, %v3089
        %3098 = vrot.lane.b32.xlu0 %v3056, 124
        %v3099 = vpop.permute.xlu0 %3098
        %3100 = vrot.lane.b32.xlu0 %v3057, 124
        %v3101 = vpop.permute.xlu0 %3100
        %v3102 = vrot.slane %v3099, 4
        %v3103 = vrot.slane %v3101, 4
        %v3104 = vsel %vm1140, %v3102, %v3103
        %v3105 = vsel %vm1120, %v3099, %v3104
        %3108 = vst [vmem:[#allocation3 + $0x30] sm:$0xff] %v3105
        %3109 = vst.msk [vmem:[#allocation3 + $0x38] sm:$0xf] %vm1130, %v3101
        %v3110 = vld [vmem:[%s3] sm:$0x3]
        %v3111 = vld [vmem:[#allocation3] sm:$0xff]
        %v3112 = vld [vmem:[#allocation3 + $0x8] sm:$0xf]
        %v3113 = vld [vmem:[#allocation3 + $0xc] sm:$0xff]
        %v3114 = vld [vmem:[#allocation3 + $0x14] sm:$0xf]
        %v3115 = vld [vmem:[#allocation3 + $0x18] sm:$0xff]
        %v3116 = vld [vmem:[#allocation3 + $0x20] sm:$0xf]
        %v3117 = vld [vmem:[#allocation3 + $0x24] sm:$0xff]
        %v3118 = vld [vmem:[#allocation3 + $0x2c] sm:$0xf]
        %v3119 = vld [vmem:[#allocation3 + $0x30] sm:$0xff]
        %v3120 = vld [vmem:[#allocation3 + $0x38] sm:$0xf]
        %v3121 = vld [vmem:[#allocation2] sm:$0xff]
        %v3122 = vld [vmem:[#allocation2 + $0x8] sm:$0xf]
        %3125 = vrot.lane.b32.xlu0 %v3121, 108
        %v3126 = vpop.permute.xlu0 %3125
        %3127 = vrot.lane.b32.xlu0 %v3122, 108
        %v3128 = vpop.permute.xlu0 %3127
        %v3129 = vrot.slane %v3126, 4
        %v3130 = vrot.slane %v3128, 4
        %v3131 = vsel %vm1140, %v3129, %v3130
        %v3132 = vsel %vm1208, %v3126, %v3131
        %3135 = vst [vmem:[#allocation3] sm:$0xff] %v3132
        %3136 = vst.msk [vmem:[#allocation3 + $0x8] sm:$0xf] %vm1130, %v3128
        %3137 = vrot.lane.b32.xlu0 %v3121, 107
        %v3138 = vpop.permute.xlu0 %3137
        %3139 = vrot.lane.b32.xlu0 %v3122, 107
        %v3140 = vpop.permute.xlu0 %3139
        %v3141 = vrot.slane %v3138, 4
        %v3142 = vrot.slane %v3140, 4
        %v3143 = vsel %vm1140, %v3141, %v3142
        %v3144 = vsel %vm1221, %v3138, %v3143
        %3147 = vst [vmem:[#allocation3 + $0xc] sm:$0xff] %v3144
        %3148 = vst.msk [vmem:[#allocation3 + $0x14] sm:$0xf] %vm1130, %v3140
        %3149 = vrot.lane.b32.xlu0 %v3121, 106
        %v3150 = vpop.permute.xlu0 %3149
        %3151 = vrot.lane.b32.xlu0 %v3122, 106
        %v3152 = vpop.permute.xlu0 %3151
        %v3153 = vrot.slane %v3150, 4
        %v3154 = vrot.slane %v3152, 4
        %v3155 = vsel %vm1140, %v3153, %v3154
        %v3156 = vsel %vm1234, %v3150, %v3155
        %3159 = vst [vmem:[#allocation3 + $0x18] sm:$0xff] %v3156
        %3160 = vst.msk [vmem:[#allocation3 + $0x20] sm:$0xf] %vm1130, %v3152
        %3161 = vrot.lane.b32.xlu0 %v3121, 105
        %v3162 = vpop.permute.xlu0 %3161
        %3163 = vrot.lane.b32.xlu0 %v3122, 105
        %v3164 = vpop.permute.xlu0 %3163
        %v3165 = vrot.slane %v3162, 4
        %v3166 = vrot.slane %v3164, 4
        %v3167 = vsel %vm1140, %v3165, %v3166
        %v3168 = vsel %vm1247, %v3162, %v3167
        %3171 = vst [vmem:[#allocation3 + $0x24] sm:$0xff] %v3168
        %3172 = vst.msk [vmem:[#allocation3 + $0x2c] sm:$0xf] %vm1130, %v3164
        %3173 = vrot.lane.b32.xlu0 %v3121, 104
        %v3174 = vpop.permute.xlu0 %3173
        %3175 = vrot.lane.b32.xlu0 %v3122, 104
        %v3176 = vpop.permute.xlu0 %3175
        %v3177 = vrot.slane %v3174, 4
        %v3178 = vrot.slane %v3176, 4
        %v3179 = vsel %vm1140, %v3177, %v3178
        %v3180 = vsel %vm1260, %v3174, %v3179
        %3183 = vst [vmem:[#allocation3 + $0x30] sm:$0xff] %v3180
        %3184 = vst.msk [vmem:[#allocation3 + $0x38] sm:$0xf] %vm1130, %v3176
        %v3185 = vld [vmem:[%s3] sm:$0x3]
        %v3186 = vld [vmem:[#allocation3] sm:$0xff]
        %v3187 = vld [vmem:[#allocation3 + $0x8] sm:$0xf]
        %v3188 = vld [vmem:[#allocation3 + $0xc] sm:$0xff]
        %v3189 = vld [vmem:[#allocation3 + $0x14] sm:$0xf]
        %v3190 = vld [vmem:[#allocation3 + $0x18] sm:$0xff]
        %v3191 = vld [vmem:[#allocation3 + $0x20] sm:$0xf]
        %v3192 = vld [vmem:[#allocation3 + $0x24] sm:$0xff]
        %v3193 = vld [vmem:[#allocation3 + $0x2c] sm:$0xf]
        %v3194 = vld [vmem:[#allocation3 + $0x30] sm:$0xff]
        %v3195 = vld [vmem:[#allocation3 + $0x38] sm:$0xf]
        %3197 = vst [vmem:[#allocation1] ss:$4 sm:$0xff] %v3185
        %v3198 = vld.sshfl [vmem:[#allocation1] sm:$0xff pattern:$0x73625140]
        %3200 = vrot.lane.b32.xlu0 %v3198, 88
        %v3201 = vpop.permute.xlu0 %3200
        %v3212 = vunpack.c.l.b16 %v3186
        %v3213 = vunpack.c.h.b16 %v3186
        %v3214 = vunpack.c.l.b16 %v3187
        %v3215 = vunpack.c.l.b16 %v3188
        %v3216 = vunpack.c.h.b16 %v3188
        %v3217 = vunpack.c.l.b16 %v3189
        %v3218 = vunpack.c.l.b16 %v3190
        %v3219 = vunpack.c.h.b16 %v3190
        %v3220 = vunpack.c.l.b16 %v3191
        %v3221 = vunpack.c.l.b16 %v3192
        %v3222 = vunpack.c.h.b16 %v3192
        %v3223 = vunpack.c.l.b16 %v3193
        %v3224 = vunpack.c.l.b16 %v3194
        %v3225 = vunpack.c.h.b16 %v3194
        %v3226 = vunpack.c.l.b16 %v3195
        %v3227 = vpack.c.b16 %v3215, %v3212
        %v3228 = vpack.c.b16 %v3216, %v3213
        %v3229 = vpack.c.b16 %v3217, %v3214
        %v3230 = vpack.c.b16 %v3221, %v3218
        %v3231 = vpack.c.b16 %v3222, %v3219
        %v3232 = vpack.c.b16 %v3223, %v3220
        %v3233 = vpack.c.b16 %v3224, %v3224
        %v3234 = vpack.c.b16 %v3225, %v3225
        %v3235 = vpack.c.b16 %v3226, %v3226
        %v3243 = vsel %vm989, %v3201, 0
        %v3246 = vsel %vm1326, %v3233, 0
        %v3249 = vsel %vm1326, %v3234, 0
        %v3252 = vsel %vm1326, %v3235, 0
        %3254 = vmatpush.bf16.msra.mxu0 0
        %3255 = vmatpush.bf16.msra.mxu0 0
        %3256 = vmatpush.bf16.msra.mxu0 0
        %3257 = vmatpush.bf16.msra.mxu0 0
        %3258 = vmatpush.bf16.msra.mxu0 0
        %3259 = vmatpush.bf16.msra.mxu0 %v3246
        %3260 = vmatpush.bf16.msra.mxu0 %v3230
        %3261 = vmatpush.bf16.msra.mxu0 %v3227
        %3262 = vmatmul.bf16.gmra.mxu0 %v3243
        %v3263 = vpop.f32.mrf.mxu0
        %v3264 = vadd.f32 0.0, %v3263
        %v3265 = vpop.f32.mrf.mxu0
        %3266 = vdwg.mxu0
        %3267 = vmatpush.bf16.msra.mxu0 0
        %3268 = vmatpush.bf16.msra.mxu0 0
        %3269 = vmatpush.bf16.msra.mxu0 0
        %3270 = vmatpush.bf16.msra.mxu0 0
        %3271 = vmatpush.bf16.msra.mxu0 0
        %3272 = vmatpush.bf16.msra.mxu0 %v3249
        %3273 = vmatpush.bf16.msra.mxu0 %v3231
        %3274 = vmatpush.bf16.msra.mxu0 %v3228
        %3275 = vmatmul.bf16.gmra.mxu0 %v3243
        %v3276 = vpop.f32.mrf.mxu0
        %v3277 = vadd.f32 0.0, %v3276
        %v3278 = vpop.f32.mrf.mxu0
        %3279 = vdwg.mxu0
        %3280 = vmatpush.bf16.msra.mxu0 0
        %3281 = vmatpush.bf16.msra.mxu0 0
        %3282 = vmatpush.bf16.msra.mxu0 0
        %3283 = vmatpush.bf16.msra.mxu0 0
        %3284 = vmatpush.bf16.msra.mxu0 0
        %3285 = vmatpush.bf16.msra.mxu0 %v3252
        %3286 = vmatpush.bf16.msra.mxu0 %v3232
        %3287 = vmatpush.bf16.msra.mxu0 %v3229
        %3288 = vmatmul.bf16.gmra.mxu0 %v3243
        %v3289 = vpop.f32.mrf.mxu0
        %v3290 = vadd.f32 0.0, %v3289
        %v3291 = vpop.f32.mrf.mxu0
        %3292 = vdwg.mxu0
        %v3303 = vunpack.c.l.b16 %v3111
        %v3304 = vunpack.c.h.b16 %v3111
        %v3305 = vunpack.c.l.b16 %v3112
        %v3306 = vunpack.c.l.b16 %v3113
        %v3307 = vunpack.c.h.b16 %v3113
        %v3308 = vunpack.c.l.b16 %v3114
        %v3309 = vunpack.c.l.b16 %v3115
        %v3310 = vunpack.c.h.b16 %v3115
        %v3311 = vunpack.c.l.b16 %v3116
        %v3312 = vunpack.c.l.b16 %v3117
        %v3313 = vunpack.c.h.b16 %v3117
        %v3314 = vunpack.c.l.b16 %v3118
        %v3315 = vunpack.c.l.b16 %v3119
        %v3316 = vunpack.c.h.b16 %v3119
        %v3317 = vunpack.c.l.b16 %v3120
        %v3318 = vpack.c.b16 %v3306, %v3303
        %v3319 = vpack.c.b16 %v3307, %v3304
        %v3320 = vpack.c.b16 %v3308, %v3305
        %v3321 = vpack.c.b16 %v3312, %v3309
        %v3322 = vpack.c.b16 %v3313, %v3310
        %v3323 = vpack.c.b16 %v3314, %v3311
        %v3324 = vpack.c.b16 %v3315, %v3315
        %v3325 = vpack.c.b16 %v3316, %v3316
        %v3326 = vpack.c.b16 %v3317, %v3317
        %v3334 = vsel %vm989, %v3110, 0
        %v3337 = vsel %vm1326, %v3324, 0
        %v3340 = vsel %vm1326, %v3325, 0
        %v3343 = vsel %vm1326, %v3326, 0
        %3345 = vmatpush.bf16.msra.mxu0 0
        %3346 = vmatpush.bf16.msra.mxu0 0
        %3347 = vmatpush.bf16.msra.mxu0 0
        %3348 = vmatpush.bf16.msra.mxu0 0
        %3349 = vmatpush.bf16.msra.mxu0 0
        %3350 = vmatpush.bf16.msra.mxu0 %v3337
        %3351 = vmatpush.bf16.msra.mxu0 %v3321
        %3352 = vmatpush.bf16.msra.mxu0 %v3318
        %3353 = vmatmul.bf16.gmra.mxu0 %v3334
        %v3354 = vpop.f32.mrf.mxu0
        %v3355 = vadd.f32 %v3264, %v3354
        %v3356 = vpop.f32.mrf.mxu0
        %3357 = vdwg.mxu0
        %3358 = vmatpush.bf16.msra.mxu0 0
        %3359 = vmatpush.bf16.msra.mxu0 0
        %3360 = vmatpush.bf16.msra.mxu0 0
        %3361 = vmatpush.bf16.msra.mxu0 0
        %3362 = vmatpush.bf16.msra.mxu0 0
        %3363 = vmatpush.bf16.msra.mxu0 %v3340
        %3364 = vmatpush.bf16.msra.mxu0 %v3322
        %3365 = vmatpush.bf16.msra.mxu0 %v3319
        %3366 = vmatmul.bf16.gmra.mxu0 %v3334
        %v3367 = vpop.f32.mrf.mxu0
        %v3368 = vadd.f32 %v3277, %v3367
        %v3369 = vpop.f32.mrf.mxu0
        %3370 = vdwg.mxu0
        %3371 = vmatpush.bf16.msra.mxu0 0
        %3372 = vmatpush.bf16.msra.mxu0 0
        %3373 = vmatpush.bf16.msra.mxu0 0
        %3374 = vmatpush.bf16.msra.mxu0 0
        %3375 = vmatpush.bf16.msra.mxu0 0
        %3376 = vmatpush.bf16.msra.mxu0 %v3343
        %3377 = vmatpush.bf16.msra.mxu0 %v3323
        %3378 = vmatpush.bf16.msra.mxu0 %v3320
        %3379 = vmatmul.bf16.gmra.mxu0 %v3334
        %v3380 = vpop.f32.mrf.mxu0
        %v3381 = vadd.f32 %v3290, %v3380
        %v3382 = vpop.f32.mrf.mxu0
        %3383 = vdwg.mxu0
        %v3384 = vld [vmem:[#allocation2] sm:$0xff]
        %v3385 = vld [vmem:[#allocation2 + $0x8] sm:$0xf]
        %3388 = vrot.lane.b32.xlu0 %v3384, 88
        %v3389 = vpop.permute.xlu0 %3388
        %3390 = vrot.lane.b32.xlu0 %v3385, 88
        %v3391 = vpop.permute.xlu0 %3390
        %v3392 = vrot.slane %v3389, 4
        %v3393 = vrot.slane %v3391, 4
        %v3394 = vsel %vm1140, %v3392, %v3393
        %v3395 = vsel %vm1477, %v3389, %v3394
        %3398 = vst [vmem:[#allocation3] sm:$0xff] %v3395
        %3399 = vst.msk [vmem:[#allocation3 + $0x8] sm:$0xf] %vm1130, %v3391
        %3400 = vrot.lane.b32.xlu0 %v3384, 87
        %v3401 = vpop.permute.xlu0 %3400
        %3402 = vrot.lane.b32.xlu0 %v3385, 87
        %v3403 = vpop.permute.xlu0 %3402
        %v3404 = vrot.slane %v3401, 4
        %v3405 = vrot.slane %v3403, 4
        %v3406 = vsel %vm1140, %v3404, %v3405
        %v3407 = vsel %vm1490, %v3401, %v3406
        %3410 = vst [vmem:[#allocation3 + $0xc] sm:$0xff] %v3407
        %3411 = vst.msk [vmem:[#allocation3 + $0x14] sm:$0xf] %vm1130, %v3403
        %3412 = vrot.lane.b32.xlu0 %v3384, 86
        %v3413 = vpop.permute.xlu0 %3412
        %3414 = vrot.lane.b32.xlu0 %v3385, 86
        %v3415 = vpop.permute.xlu0 %3414
        %v3416 = vrot.slane %v3413, 4
        %v3417 = vrot.slane %v3415, 4
        %v3418 = vsel %vm1140, %v3416, %v3417
        %v3419 = vsel %vm1503, %v3413, %v3418
        %3422 = vst [vmem:[#allocation3 + $0x18] sm:$0xff] %v3419
        %3423 = vst.msk [vmem:[#allocation3 + $0x20] sm:$0xf] %vm1130, %v3415
        %3424 = vrot.lane.b32.xlu0 %v3384, 85
        %v3425 = vpop.permute.xlu0 %3424
        %3426 = vrot.lane.b32.xlu0 %v3385, 85
        %v3427 = vpop.permute.xlu0 %3426
        %v3428 = vrot.slane %v3425, 4
        %v3429 = vrot.slane %v3427, 4
        %v3430 = vsel %vm1140, %v3428, %v3429
        %v3431 = vsel %vm1516, %v3425, %v3430
        %3434 = vst [vmem:[#allocation3 + $0x24] sm:$0xff] %v3431
        %3435 = vst.msk [vmem:[#allocation3 + $0x2c] sm:$0xf] %vm1130, %v3427
        %3436 = vrot.lane.b32.xlu0 %v3384, 84
        %v3437 = vpop.permute.xlu0 %3436
        %3438 = vrot.lane.b32.xlu0 %v3385, 84
        %v3439 = vpop.permute.xlu0 %3438
        %v3440 = vrot.slane %v3437, 4
        %v3441 = vrot.slane %v3439, 4
        %v3442 = vsel %vm1140, %v3440, %v3441
        %v3443 = vsel %vm1529, %v3437, %v3442
        %3446 = vst [vmem:[#allocation3 + $0x30] sm:$0xff] %v3443
        %3447 = vst.msk [vmem:[#allocation3 + $0x38] sm:$0xf] %vm1130, %v3439
        %v3448 = vld [vmem:[%s3] sm:$0x3]
        %v3449 = vld [vmem:[#allocation3] sm:$0xff]
        %v3450 = vld [vmem:[#allocation3 + $0x8] sm:$0xf]
        %v3451 = vld [vmem:[#allocation3 + $0xc] sm:$0xff]
        %v3452 = vld [vmem:[#allocation3 + $0x14] sm:$0xf]
        %v3453 = vld [vmem:[#allocation3 + $0x18] sm:$0xff]
        %v3454 = vld [vmem:[#allocation3 + $0x20] sm:$0xf]
        %v3455 = vld [vmem:[#allocation3 + $0x24] sm:$0xff]
        %v3456 = vld [vmem:[#allocation3 + $0x2c] sm:$0xf]
        %v3457 = vld [vmem:[#allocation3 + $0x30] sm:$0xff]
        %v3458 = vld [vmem:[#allocation3 + $0x38] sm:$0xf]
        %3460 = vst [vmem:[#allocation1] ss:$4 sm:$0xff] %v3448
        %v3461 = vld.sshfl [vmem:[#allocation1] sm:$0xff pattern:$0x73625140]
        %3463 = vrot.lane.b32.xlu0 %v3461, 48
        %v3464 = vpop.permute.xlu0 %3463
        %v3475 = vunpack.c.l.b16 %v3449
        %v3476 = vunpack.c.h.b16 %v3449
        %v3477 = vunpack.c.l.b16 %v3450
        %v3478 = vunpack.c.l.b16 %v3451
        %v3479 = vunpack.c.h.b16 %v3451
        %v3480 = vunpack.c.l.b16 %v3452
        %v3481 = vunpack.c.l.b16 %v3453
        %v3482 = vunpack.c.h.b16 %v3453
        %v3483 = vunpack.c.l.b16 %v3454
        %v3484 = vunpack.c.l.b16 %v3455
        %v3485 = vunpack.c.h.b16 %v3455
        %v3486 = vunpack.c.l.b16 %v3456
        %v3487 = vunpack.c.l.b16 %v3457
        %v3488 = vunpack.c.h.b16 %v3457
        %v3489 = vunpack.c.l.b16 %v3458
        %v3490 = vpack.c.b16 %v3478, %v3475
        %v3491 = vpack.c.b16 %v3479, %v3476
        %v3492 = vpack.c.b16 %v3480, %v3477
        %v3493 = vpack.c.b16 %v3484, %v3481
        %v3494 = vpack.c.b16 %v3485, %v3482
        %v3495 = vpack.c.b16 %v3486, %v3483
        %v3496 = vpack.c.b16 %v3487, %v3487
        %v3497 = vpack.c.b16 %v3488, %v3488
        %v3498 = vpack.c.b16 %v3489, %v3489
        %v3506 = vsel %vm989, %v3464, 0
        %v3509 = vsel %vm1326, %v3496, 0
        %v3512 = vsel %vm1326, %v3497, 0
        %v3515 = vsel %vm1326, %v3498, 0
        %3517 = vmatpush.bf16.msra.mxu0 0
        %3518 = vmatpush.bf16.msra.mxu0 0
        %3519 = vmatpush.bf16.msra.mxu0 0
        %3520 = vmatpush.bf16.msra.mxu0 0
        %3521 = vmatpush.bf16.msra.mxu0 0
        %3522 = vmatpush.bf16.msra.mxu0 %v3509
        %3523 = vmatpush.bf16.msra.mxu0 %v3493
        %3524 = vmatpush.bf16.msra.mxu0 %v3490
        %3525 = vmatmul.bf16.gmra.mxu0 %v3506
        %v3526 = vpop.f32.mrf.mxu0
        %v3527 = vadd.f32 0.0, %v3526
        %v3528 = vpop.f32.mrf.mxu0
        %3529 = vdwg.mxu0
        %3530 = vmatpush.bf16.msra.mxu0 0
        %3531 = vmatpush.bf16.msra.mxu0 0
        %3532 = vmatpush.bf16.msra.mxu0 0
        %3533 = vmatpush.bf16.msra.mxu0 0
        %3534 = vmatpush.bf16.msra.mxu0 0
        %3535 = vmatpush.bf16.msra.mxu0 %v3512
        %3536 = vmatpush.bf16.msra.mxu0 %v3494
        %3537 = vmatpush.bf16.msra.mxu0 %v3491
        %3538 = vmatmul.bf16.gmra.mxu0 %v3506
        %v3539 = vpop.f32.mrf.mxu0
        %v3540 = vadd.f32 0.0, %v3539
        %v3541 = vpop.f32.mrf.mxu0
        %3542 = vdwg.mxu0
        %3543 = vmatpush.bf16.msra.mxu0 0
        %3544 = vmatpush.bf16.msra.mxu0 0
        %3545 = vmatpush.bf16.msra.mxu0 0
        %3546 = vmatpush.bf16.msra.mxu0 0
        %3547 = vmatpush.bf16.msra.mxu0 0
        %3548 = vmatpush.bf16.msra.mxu0 %v3515
        %3549 = vmatpush.bf16.msra.mxu0 %v3495
        %3550 = vmatpush.bf16.msra.mxu0 %v3492
        %3551 = vmatmul.bf16.gmra.mxu0 %v3506
        %v3552 = vpop.f32.mrf.mxu0
        %v3553 = vadd.f32 0.0, %v3552
        %v3554 = vpop.f32.mrf.mxu0
        %3555 = vdwg.mxu0
        %v3556 = vadd.f32 %v3355, %v3527
        %v3557 = vadd.f32 %v3368, %v3540
        %v3558 = vadd.f32 %v3381, %v3553
        %v3559 = vld [vmem:[#allocation2] sm:$0xff]
        %v3560 = vld [vmem:[#allocation2 + $0x8] sm:$0xf]
        %3563 = vrot.lane.b32.xlu0 %v3559, 68
        %v3564 = vpop.permute.xlu0 %3563
        %3565 = vrot.lane.b32.xlu0 %v3560, 68
        %v3566 = vpop.permute.xlu0 %3565
        %v3567 = vrot.slane %v3564, 4
        %v3568 = vrot.slane %v3566, 4
        %v3569 = vsel %vm1140, %v3567, %v3568
        %v3570 = vsel %vm1657, %v3564, %v3569
        %3573 = vst [vmem:[#allocation3] sm:$0xff] %v3570
        %3574 = vst.msk [vmem:[#allocation3 + $0x8] sm:$0xf] %vm1130, %v3566
        %3575 = vrot.lane.b32.xlu0 %v3559, 67
        %v3576 = vpop.permute.xlu0 %3575
        %3577 = vrot.lane.b32.xlu0 %v3560, 67
        %v3578 = vpop.permute.xlu0 %3577
        %v3579 = vrot.slane %v3576, 4
        %v3580 = vrot.slane %v3578, 4
        %v3581 = vsel %vm1140, %v3579, %v3580
        %v3582 = vsel %vm1670, %v3576, %v3581
        %3585 = vst [vmem:[#allocation3 + $0xc] sm:$0xff] %v3582
        %3586 = vst.msk [vmem:[#allocation3 + $0x14] sm:$0xf] %vm1130, %v3578
        %3587 = vrot.lane.b32.xlu0 %v3559, 66
        %v3588 = vpop.permute.xlu0 %3587
        %3589 = vrot.lane.b32.xlu0 %v3560, 66
        %v3590 = vpop.permute.xlu0 %3589
        %v3591 = vrot.slane %v3588, 4
        %v3592 = vrot.slane %v3590, 4
        %v3593 = vsel %vm1140, %v3591, %v3592
        %v3594 = vsel %vm1683, %v3588, %v3593
        %3597 = vst [vmem:[#allocation3 + $0x18] sm:$0xff] %v3594
        %3598 = vst.msk [vmem:[#allocation3 + $0x20] sm:$0xf] %vm1130, %v3590
        %3599 = vrot.lane.b32.xlu0 %v3559, 65
        %v3600 = vpop.permute.xlu0 %3599
        %3601 = vrot.lane.b32.xlu0 %v3560, 65
        %v3602 = vpop.permute.xlu0 %3601
        %v3603 = vrot.slane %v3600, 4
        %v3604 = vrot.slane %v3602, 4
        %v3605 = vsel %vm1140, %v3603, %v3604
        %v3606 = vsel %vm1696, %v3600, %v3605
        %3609 = vst [vmem:[#allocation3 + $0x24] sm:$0xff] %v3606
        %3610 = vst.msk [vmem:[#allocation3 + $0x2c] sm:$0xf] %vm1130, %v3602
        %3611 = vrot.lane.b32.xlu0 %v3559, 64
        %v3612 = vpop.permute.xlu0 %3611
        %3613 = vrot.lane.b32.xlu0 %v3560, 64
        %v3614 = vpop.permute.xlu0 %3613
        %v3615 = vrot.slane %v3612, 4
        %v3616 = vrot.slane %v3614, 4
        %v3617 = vsel %vm1140, %v3615, %v3616
        %v3618 = vsel %vm1709, %v3612, %v3617
        %3621 = vst [vmem:[#allocation3 + $0x30] sm:$0xff] %v3618
        %3622 = vst.msk [vmem:[#allocation3 + $0x38] sm:$0xf] %vm1130, %v3614
        %v3623 = vld [vmem:[%s3] sm:$0xf]
        %v3624 = vld [vmem:[#allocation3] sm:$0xff]
        %v3625 = vld [vmem:[#allocation3 + $0x8] sm:$0xf]
        %v3626 = vld [vmem:[#allocation3 + $0xc] sm:$0xff]
        %v3627 = vld [vmem:[#allocation3 + $0x14] sm:$0xf]
        %v3628 = vld [vmem:[#allocation3 + $0x18] sm:$0xff]
        %v3629 = vld [vmem:[#allocation3 + $0x20] sm:$0xf]
        %v3630 = vld [vmem:[#allocation3 + $0x24] sm:$0xff]
        %v3631 = vld [vmem:[#allocation3 + $0x2c] sm:$0xf]
        %v3632 = vld [vmem:[#allocation3 + $0x30] sm:$0xff]
        %v3633 = vld [vmem:[#allocation3 + $0x38] sm:$0xf]
        %3635 = vst [vmem:[#allocation1] ss:$4 sm:$0xff] %v3623
        %v3636 = vld.sshfl [vmem:[#allocation1] sm:$0xff pattern:$0x73625140]
        %v3638 = vld.sshfl [vmem:[#allocation1 + $0x8] sm:$0xff pattern:$0x73625140]
        %3640 = vrot.lane.b32.xlu0 %v3636, 8
        %v3641 = vpop.permute.xlu0 %3640
        %3642 = vrot.lane.b32.xlu0 %v3638, 8
        %v3643 = vpop.permute.xlu0 %3642
        %v3644 = vsel %vm1736, %v3641, %v3643
        %v3655 = vunpack.c.l.b16 %v3624
        %v3656 = vunpack.c.h.b16 %v3624
        %v3657 = vunpack.c.l.b16 %v3625
        %v3658 = vunpack.c.l.b16 %v3626
        %v3659 = vunpack.c.h.b16 %v3626
        %v3660 = vunpack.c.l.b16 %v3627
        %v3661 = vunpack.c.l.b16 %v3628
        %v3662 = vunpack.c.h.b16 %v3628
        %v3663 = vunpack.c.l.b16 %v3629
        %v3664 = vunpack.c.l.b16 %v3630
        %v3665 = vunpack.c.h.b16 %v3630
        %v3666 = vunpack.c.l.b16 %v3631
        %v3667 = vunpack.c.l.b16 %v3632
        %v3668 = vunpack.c.h.b16 %v3632
        %v3669 = vunpack.c.l.b16 %v3633
        %v3670 = vpack.c.b16 %v3658, %v3655
        %v3671 = vpack.c.b16 %v3659, %v3656
        %v3672 = vpack.c.b16 %v3660, %v3657
        %v3673 = vpack.c.b16 %v3664, %v3661
        %v3674 = vpack.c.b16 %v3665, %v3662
        %v3675 = vpack.c.b16 %v3666, %v3663
        %v3676 = vpack.c.b16 %v3667, %v3667
        %v3677 = vpack.c.b16 %v3668, %v3668
        %v3678 = vpack.c.b16 %v3669, %v3669
        %v3686 = vsel %vm989, %v3644, 0
        %v3689 = vsel %vm1326, %v3676, 0
        %v3692 = vsel %vm1326, %v3677, 0
        %v3695 = vsel %vm1326, %v3678, 0
        %3697 = vmatpush.bf16.msra.mxu0 0
        %3698 = vmatpush.bf16.msra.mxu0 0
        %3699 = vmatpush.bf16.msra.mxu0 0
        %3700 = vmatpush.bf16.msra.mxu0 0
        %3701 = vmatpush.bf16.msra.mxu0 0
        %3702 = vmatpush.bf16.msra.mxu0 %v3689
        %3703 = vmatpush.bf16.msra.mxu0 %v3673
        %3704 = vmatpush.bf16.msra.mxu0 %v3670
        %3705 = vmatmul.bf16.gmra.mxu0 %v3686
        %v3706 = vpop.f32.mrf.mxu0
        %v3707 = vadd.f32 0.0, %v3706
        %v3708 = vpop.f32.mrf.mxu0
        %3709 = vdwg.mxu0
        %3710 = vmatpush.bf16.msra.mxu0 0
        %3711 = vmatpush.bf16.msra.mxu0 0
        %3712 = vmatpush.bf16.msra.mxu0 0
        %3713 = vmatpush.bf16.msra.mxu0 0
        %3714 = vmatpush.bf16.msra.mxu0 0
        %3715 = vmatpush.bf16.msra.mxu0 %v3692
        %3716 = vmatpush.bf16.msra.mxu0 %v3674
        %3717 = vmatpush.bf16.msra.mxu0 %v3671
        %3718 = vmatmul.bf16.gmra.mxu0 %v3686
        %v3719 = vpop.f32.mrf.mxu0
        %v3720 = vadd.f32 0.0, %v3719
        %v3721 = vpop.f32.mrf.mxu0
        %3722 = vdwg.mxu0
        %3723 = vmatpush.bf16.msra.mxu0 0
        %3724 = vmatpush.bf16.msra.mxu0 0
        %3725 = vmatpush.bf16.msra.mxu0 0
        %3726 = vmatpush.bf16.msra.mxu0 0
        %3727 = vmatpush.bf16.msra.mxu0 0
        %3728 = vmatpush.bf16.msra.mxu0 %v3695
        %3729 = vmatpush.bf16.msra.mxu0 %v3675
        %3730 = vmatpush.bf16.msra.mxu0 %v3672
        %3731 = vmatmul.bf16.gmra.mxu0 %v3686
        %v3732 = vpop.f32.mrf.mxu0
        %v3733 = vadd.f32 0.0, %v3732
        %v3734 = vpop.f32.mrf.mxu0
        %3735 = vdwg.mxu0
        %v3736 = vadd.f32 %v3556, %v3707
        %v3737 = vadd.f32 %v3557, %v3720
        %v3738 = vadd.f32 %v3558, %v3733
        %v3739 = vld [vmem:[#allocation2] sm:$0xff]
        %v3740 = vld [vmem:[#allocation2 + $0x8] sm:$0xff]
        %3743 = vrot.lane.b32.xlu0 %v3739, 48
        %v3744 = vpop.permute.xlu0 %3743
        %3745 = vrot.lane.b32.xlu0 %v3740, 48
        %v3746 = vpop.permute.xlu0 %3745
        %v3747 = vrot.slane %v3744, 4
        %v3748 = vrot.slane %v3746, 4
        %v3749 = vsel %vm1140, %v3747, %v3748
        %v3750 = vsel %vm1843, %v3744, %v3749
        %v3751 = vsel %vm1843, %v3746, %v3748
        %3754 = vst [vmem:[#allocation3] sm:$0xff] %v3750
        %3755 = vst.msk [vmem:[#allocation3 + $0x8] sm:$0xf] %vm1130, %v3751
        %3756 = vrot.lane.b32.xlu0 %v3739, 47
        %v3757 = vpop.permute.xlu0 %3756
        %3758 = vrot.lane.b32.xlu0 %v3740, 47
        %v3759 = vpop.permute.xlu0 %3758
        %v3760 = vrot.slane %v3757, 4
        %v3761 = vrot.slane %v3759, 4
        %v3762 = vsel %vm1140, %v3760, %v3761
        %v3763 = vsel %vm1857, %v3757, %v3762
        %v3764 = vsel %vm1857, %v3759, %v3761
        %3767 = vst [vmem:[#allocation3 + $0xc] sm:$0xff] %v3763
        %3768 = vst.msk [vmem:[#allocation3 + $0x14] sm:$0xf] %vm1130, %v3764
        %3769 = vrot.lane.b32.xlu0 %v3739, 46
        %v3770 = vpop.permute.xlu0 %3769
        %3771 = vrot.lane.b32.xlu0 %v3740, 46
        %v3772 = vpop.permute.xlu0 %3771
        %v3773 = vrot.slane %v3770, 4
        %v3774 = vrot.slane %v3772, 4
        %v3775 = vsel %vm1140, %v3773, %v3774
        %v3776 = vsel %vm1871, %v3770, %v3775
        %v3777 = vsel %vm1871, %v3772, %v3774
        %3780 = vst [vmem:[#allocation3 + $0x18] sm:$0xff] %v3776
        %3781 = vst.msk [vmem:[#allocation3 + $0x20] sm:$0xf] %vm1130, %v3777
        %3782 = vrot.lane.b32.xlu0 %v3739, 45
        %v3783 = vpop.permute.xlu0 %3782
        %3784 = vrot.lane.b32.xlu0 %v3740, 45
        %v3785 = vpop.permute.xlu0 %3784
        %v3786 = vrot.slane %v3783, 4
        %v3787 = vrot.slane %v3785, 4
        %v3788 = vsel %vm1140, %v3786, %v3787
        %v3789 = vsel %vm1885, %v3783, %v3788
        %v3790 = vsel %vm1885, %v3785, %v3787
        %3793 = vst [vmem:[#allocation3 + $0x24] sm:$0xff] %v3789
        %3794 = vst.msk [vmem:[#allocation3 + $0x2c] sm:$0xf] %vm1130, %v3790
        %3795 = vrot.lane.b32.xlu0 %v3739, 44
        %v3796 = vpop.permute.xlu0 %3795
        %3797 = vrot.lane.b32.xlu0 %v3740, 44
        %v3798 = vpop.permute.xlu0 %3797
        %v3799 = vrot.slane %v3796, 4
        %v3800 = vrot.slane %v3798, 4
        %v3801 = vsel %vm1140, %v3799, %v3800
        %v3802 = vsel %vm1899, %v3796, %v3801
        %v3803 = vsel %vm1899, %v3798, %v3800
        %3806 = vst [vmem:[#allocation3 + $0x30] sm:$0xff] %v3802
        %3807 = vst.msk [vmem:[#allocation3 + $0x38] sm:$0xf] %vm1130, %v3803
        %v3808 = vld [vmem:[%s3 + $0x2] sm:$0x3]
        %v3809 = vld [vmem:[#allocation3] sm:$0xff]
        %v3810 = vld [vmem:[#allocation3 + $0x8] sm:$0xf]
        %v3811 = vld [vmem:[#allocation3 + $0xc] sm:$0xff]
        %v3812 = vld [vmem:[#allocation3 + $0x14] sm:$0xf]
        %v3813 = vld [vmem:[#allocation3 + $0x18] sm:$0xff]
        %v3814 = vld [vmem:[#allocation3 + $0x20] sm:$0xf]
        %v3815 = vld [vmem:[#allocation3 + $0x24] sm:$0xff]
        %v3816 = vld [vmem:[#allocation3 + $0x2c] sm:$0xf]
        %v3817 = vld [vmem:[#allocation3 + $0x30] sm:$0xff]
        %v3818 = vld [vmem:[#allocation3 + $0x38] sm:$0xf]
        %3820 = vst [vmem:[#allocation1] ss:$4 sm:$0xff] %v3808
        %v3821 = vld.sshfl [vmem:[#allocation1] sm:$0xff pattern:$0x73625140]
        %3823 = vrot.lane.b32.xlu0 %v3821, 96
        %v3824 = vpop.permute.xlu0 %3823
        %v3835 = vunpack.c.l.b16 %v3809
        %v3836 = vunpack.c.h.b16 %v3809
        %v3837 = vunpack.c.l.b16 %v3810
        %v3838 = vunpack.c.l.b16 %v3811
        %v3839 = vunpack.c.h.b16 %v3811
        %v3840 = vunpack.c.l.b16 %v3812
        %v3841 = vunpack.c.l.b16 %v3813
        %v3842 = vunpack.c.h.b16 %v3813
        %v3843 = vunpack.c.l.b16 %v3814
        %v3844 = vunpack.c.l.b16 %v3815
        %v3845 = vunpack.c.h.b16 %v3815
        %v3846 = vunpack.c.l.b16 %v3816
        %v3847 = vunpack.c.l.b16 %v3817
        %v3848 = vunpack.c.h.b16 %v3817
        %v3849 = vunpack.c.l.b16 %v3818
        %v3850 = vpack.c.b16 %v3838, %v3835
        %v3851 = vpack.c.b16 %v3839, %v3836
        %v3852 = vpack.c.b16 %v3840, %v3837
        %v3853 = vpack.c.b16 %v3844, %v3841
        %v3854 = vpack.c.b16 %v3845, %v3842
        %v3855 = vpack.c.b16 %v3846, %v3843
        %v3856 = vpack.c.b16 %v3847, %v3847
        %v3857 = vpack.c.b16 %v3848, %v3848
        %v3858 = vpack.c.b16 %v3849, %v3849
        %v3866 = vsel %vm989, %v3824, 0
        %v3869 = vsel %vm1326, %v3856, 0
        %v3872 = vsel %vm1326, %v3857, 0
        %v3875 = vsel %vm1326, %v3858, 0
        %3877 = vmatpush.bf16.msra.mxu0 0
        %3878 = vmatpush.bf16.msra.mxu0 0
        %3879 = vmatpush.bf16.msra.mxu0 0
        %3880 = vmatpush.bf16.msra.mxu0 0
        %3881 = vmatpush.bf16.msra.mxu0 0
        %3882 = vmatpush.bf16.msra.mxu0 %v3869
        %3883 = vmatpush.bf16.msra.mxu0 %v3853
        %3884 = vmatpush.bf16.msra.mxu0 %v3850
        %3885 = vmatmul.bf16.gmra.mxu0 %v3866
        %v3886 = vpop.f32.mrf.mxu0
        %v3887 = vadd.f32 0.0, %v3886
        %v3888 = vpop.f32.mrf.mxu0
        %3889 = vdwg.mxu0
        %3890 = vmatpush.bf16.msra.mxu0 0
        %3891 = vmatpush.bf16.msra.mxu0 0
        %3892 = vmatpush.bf16.msra.mxu0 0
        %3893 = vmatpush.bf16.msra.mxu0 0
        %3894 = vmatpush.bf16.msra.mxu0 0
        %3895 = vmatpush.bf16.msra.mxu0 %v3872
        %3896 = vmatpush.bf16.msra.mxu0 %v3854
        %3897 = vmatpush.bf16.msra.mxu0 %v3851
        %3898 = vmatmul.bf16.gmra.mxu0 %v3866
        %v3899 = vpop.f32.mrf.mxu0
        %v3900 = vadd.f32 0.0, %v3899
        %v3901 = vpop.f32.mrf.mxu0
        %3902 = vdwg.mxu0
        %3903 = vmatpush.bf16.msra.mxu0 0
        %3904 = vmatpush.bf16.msra.mxu0 0
        %3905 = vmatpush.bf16.msra.mxu0 0
        %3906 = vmatpush.bf16.msra.mxu0 0
        %3907 = vmatpush.bf16.msra.mxu0 0
        %3908 = vmatpush.bf16.msra.mxu0 %v3875
        %3909 = vmatpush.bf16.msra.mxu0 %v3855
        %3910 = vmatpush.bf16.msra.mxu0 %v3852
        %3911 = vmatmul.bf16.gmra.mxu0 %v3866
        %v3912 = vpop.f32.mrf.mxu0
        %v3913 = vadd.f32 0.0, %v3912
        %v3914 = vpop.f32.mrf.mxu0
        %3915 = vdwg.mxu0
        %v3916 = vadd.f32 %v3736, %v3887
        %v3917 = vadd.f32 %v3737, %v3900
        %v3918 = vadd.f32 %v3738, %v3913
        %3920 = vrot.lane.b32.xlu0 %v3916, 108
        %v3921 = vpop.permute.xlu0 %3920
        %3923 = vrot.lane.b32.xlu0 %v3916, 88
        %v3924 = vpop.permute.xlu0 %3923
        %3926 = vrot.lane.b32.xlu0 %v3916, 68
        %v3927 = vpop.permute.xlu0 %3926
        %3929 = vrot.lane.b32.xlu0 %v3916, 48
        %v3930 = vpop.permute.xlu0 %3929
        %3932 = vrot.lane.b32.xlu0 %v3916, 28
        %v3933 = vpop.permute.xlu0 %3932
        %3936 = vrot.lane.b32.xlu0 %v3916, 8
        %v3937 = vpop.permute.xlu0 %3936
        %3938 = vrot.lane.b32.xlu0 %v3917, 8
        %v3939 = vpop.permute.xlu0 %3938
        %v3940 = vsel %vm2038, %v3937, %v3939
        %3942 = vrot.lane.b32.xlu0 %v3917, 116
        %v3943 = vpop.permute.xlu0 %3942
        %3945 = vrot.lane.b32.xlu0 %v3917, 96
        %v3946 = vpop.permute.xlu0 %3945
        %3948 = vrot.lane.b32.xlu0 %v3917, 76
        %v3949 = vpop.permute.xlu0 %3948
        %3951 = vrot.lane.b32.xlu0 %v3917, 56
        %v3952 = vpop.permute.xlu0 %3951
        %3954 = vrot.lane.b32.xlu0 %v3917, 36
        %v3955 = vpop.permute.xlu0 %3954
        %3958 = vrot.lane.b32.xlu0 %v3917, 16
        %v3959 = vpop.permute.xlu0 %3958
        %3960 = vrot.lane.b32.xlu0 %v3918, 16
        %v3961 = vpop.permute.xlu0 %3960
        %v3962 = vsel %vm2061, %v3959, %v3961
        %3964 = vrot.lane.b32.xlu0 %v3918, 124
        %v3965 = vpop.permute.xlu0 %3964
        %3967 = vrot.lane.b32.xlu0 %v3918, 104
        %v3968 = vpop.permute.xlu0 %3967
        %3970 = vrot.lane.b32.xlu0 %v3918, 84
        %v3971 = vpop.permute.xlu0 %3970
        %v3973 = vrot.slane %v3924, 4
        %v3974 = vsel %vm319, %v3973, %v3916
        %v3976 = vunpack.c.l.s4 1983009808
        %v3977 = vunpack.c.0.s8 %v3976
        %v3978 = vperm.slane %v3974, %v3977
        %v3979 = vrot.slane %v3927, 4
        %v3980 = vsel %vm319, %v3979, %v3921
        %v3982 = vunpack.c.l.s4 1983009808
        %v3983 = vunpack.c.0.s8 %v3982
        %v3984 = vperm.slane %v3980, %v3983
        %v3985 = vrot.slane %v3940, 4
        %v3986 = vsel %vm319, %v3985, %v3930
        %v3988 = vunpack.c.l.s4 1983009808
        %v3989 = vunpack.c.0.s8 %v3988
        %v3990 = vperm.slane %v3986, %v3989
        %v3991 = vrot.slane %v3943, 4
        %v3992 = vsel %vm319, %v3991, %v3933
        %v3994 = vunpack.c.l.s4 1983009808
        %v3995 = vunpack.c.0.s8 %v3994
        %v3996 = vperm.slane %v3992, %v3995
        %v3997 = vrot.slane %v3984, 4
        %v3998 = vsel %vm319, %v3997, %v3978
        %v3999 = vrot.slane %v3978, 4
        %v4000 = vsel %vm319, %v3984, %v3999
        %v4002 = vunpack.c.l.s4 1934713408
        %v4003 = vunpack.c.0.s8 %v4002
        %v4004 = vperm.slane %v3998, %v4003
        %v4006 = vunpack.c.l.s4 1934713408
        %v4007 = vunpack.c.0.s8 %v4006
        %v4008 = vperm.slane %v4000, %v4007
        %v4009 = vrot.slane %v3996, 4
        %v4010 = vsel %vm319, %v4009, %v3990
        %v4011 = vrot.slane %v3990, 4
        %v4012 = vsel %vm319, %v3996, %v4011
        %v4014 = vunpack.c.l.s4 1934713408
        %v4015 = vunpack.c.0.s8 %v4014
        %v4016 = vperm.slane %v4010, %v4015
        %v4018 = vunpack.c.l.s4 1934713408
        %v4019 = vunpack.c.0.s8 %v4018
        %v4020 = vperm.slane %v4012, %v4019
        %v4021 = vrot.slane %v4016, 4
        %v4022 = vsel %vm319, %v4021, %v4004
        %v4023 = vrot.slane %v4004, 4
        %v4024 = vsel %vm319, %v4016, %v4023
        %v4025 = vrot.slane %v4020, 4
        %v4026 = vsel %vm319, %v4025, %v4008
        %v4027 = vrot.slane %v4008, 4
        %v4028 = vsel %vm319, %v4020, %v4027
        %v4029 = vrot.slane %v3952, 4
        %v4030 = vsel %vm319, %v4029, %v3946
        %v4032 = vunpack.c.l.s4 1983009808
        %v4033 = vunpack.c.0.s8 %v4032
        %v4034 = vperm.slane %v4030, %v4033
        %v4035 = vrot.slane %v3955, 4
        %v4036 = vsel %vm319, %v4035, %v3949
        %v4038 = vunpack.c.l.s4 1983009808
        %v4039 = vunpack.c.0.s8 %v4038
        %v4040 = vperm.slane %v4036, %v4039
        %v4041 = vrot.slane %v3968, 4
        %v4042 = vsel %vm319, %v4041, %v3962
        %v4044 = vunpack.c.l.s4 1983009808
        %v4045 = vunpack.c.0.s8 %v4044
        %v4046 = vperm.slane %v4042, %v4045
        %v4047 = vrot.slane %v3971, 4
        %v4048 = vsel %vm319, %v4047, %v3965
        %v4050 = vunpack.c.l.s4 1983009808
        %v4051 = vunpack.c.0.s8 %v4050
        %v4052 = vperm.slane %v4048, %v4051
        %v4053 = vrot.slane %v4040, 4
        %v4054 = vsel %vm319, %v4053, %v4034
        %v4055 = vrot.slane %v4034, 4
        %v4056 = vsel %vm319, %v4040, %v4055
        %v4058 = vunpack.c.l.s4 1934713408
        %v4059 = vunpack.c.0.s8 %v4058
        %v4060 = vperm.slane %v4054, %v4059
        %v4062 = vunpack.c.l.s4 1934713408
        %v4063 = vunpack.c.0.s8 %v4062
        %v4064 = vperm.slane %v4056, %v4063
        %v4065 = vrot.slane %v4052, 4
        %v4066 = vsel %vm319, %v4065, %v4046
        %v4067 = vrot.slane %v4046, 4
        %v4068 = vsel %vm319, %v4052, %v4067
        %v4070 = vunpack.c.l.s4 1934713408
        %v4071 = vunpack.c.0.s8 %v4070
        %v4072 = vperm.slane %v4066, %v4071
        %v4074 = vunpack.c.l.s4 1934713408
        %v4075 = vunpack.c.0.s8 %v4074
        %v4076 = vperm.slane %v4068, %v4075
        %v4077 = vrot.slane %v4072, 4
        %v4078 = vsel %vm319, %v4077, %v4060
        %v4079 = vrot.slane %v4060, 4
        %v4080 = vsel %vm319, %v4072, %v4079
        %v4081 = vrot.slane %v4076, 4
        %v4082 = vsel %vm319, %v4081, %v4064
        %v4083 = vrot.slane %v4064, 4
        %v4084 = vsel %vm319, %v4076, %v4083
        %v4085 = vrot.slane %v4026, 4
        %v4086 = vsel %vm319, %v4085, %v4022
        %v4087 = vrot.slane %v4022, 4
        %v4088 = vsel %vm319, %v4026, %v4087
        %v4090 = vunpack.c.l.s4 1983009808
        %v4091 = vunpack.c.0.s8 %v4090
        %v4092 = vperm.slane %v4086, %v4091
        %v4094 = vunpack.c.l.s4 1983009808
        %v4095 = vunpack.c.0.s8 %v4094
        %v4096 = vperm.slane %v4088, %v4095
        %v4097 = vrot.slane %v4028, 4
        %v4098 = vsel %vm319, %v4097, %v4024
        %v4099 = vrot.slane %v4024, 4
        %v4100 = vsel %vm319, %v4028, %v4099
        %v4102 = vunpack.c.l.s4 1983009808
        %v4103 = vunpack.c.0.s8 %v4102
        %v4104 = vperm.slane %v4098, %v4103
        %v4106 = vunpack.c.l.s4 1983009808
        %v4107 = vunpack.c.0.s8 %v4106
        %v4108 = vperm.slane %v4100, %v4107
        %v4109 = vrot.slane %v4104, 4
        %v4110 = vsel %vm319, %v4109, %v4092
        %v4111 = vrot.slane %v4092, 4
        %v4112 = vsel %vm319, %v4104, %v4111
        %v4114 = vunpack.c.l.s4 1934713408
        %v4115 = vunpack.c.0.s8 %v4114
        %v4116 = vperm.slane %v4110, %v4115
        %v4118 = vunpack.c.l.s4 1934713408
        %v4119 = vunpack.c.0.s8 %v4118
        %v4120 = vperm.slane %v4112, %v4119
        %v4121 = vrot.slane %v4108, 4
        %v4122 = vsel %vm319, %v4121, %v4096
        %v4123 = vrot.slane %v4096, 4
        %v4124 = vsel %vm319, %v4108, %v4123
        %v4126 = vunpack.c.l.s4 1934713408
        %v4127 = vunpack.c.0.s8 %v4126
        %v4128 = vperm.slane %v4122, %v4127
        %v4130 = vunpack.c.l.s4 1934713408
        %v4131 = vunpack.c.0.s8 %v4130
        %v4132 = vperm.slane %v4124, %v4131
        %v4133 = vrot.slane %v4116, 4
        %v4134 = vsel %vm319, 0.0, %v4133
        %v4135 = vrot.slane %v4120, 4
        %v4136 = vsel %vm319, 0.0, %v4135
        %v4137 = vrot.slane %v4128, 4
        %v4138 = vsel %vm319, 0.0, %v4137
        %v4139 = vrot.slane %v4132, 4
        %v4140 = vsel %vm319, 0.0, %v4139
        %v4141 = vrot.slane %v4082, 4
        %v4142 = vsel %vm319, %v4141, %v4078
        %v4143 = vrot.slane %v4078, 4
        %v4144 = vsel %vm319, %v4082, %v4143
        %v4146 = vunpack.c.l.s4 1983009808
        %v4147 = vunpack.c.0.s8 %v4146
        %v4148 = vperm.slane %v4142, %v4147
        %v4150 = vunpack.c.l.s4 1983009808
        %v4151 = vunpack.c.0.s8 %v4150
        %v4152 = vperm.slane %v4144, %v4151
        %v4153 = vrot.slane %v4084, 4
        %v4154 = vsel %vm319, %v4153, %v4080
        %v4155 = vrot.slane %v4080, 4
        %v4156 = vsel %vm319, %v4084, %v4155
        %v4158 = vunpack.c.l.s4 1983009808
        %v4159 = vunpack.c.0.s8 %v4158
        %v4160 = vperm.slane %v4154, %v4159
        %v4162 = vunpack.c.l.s4 1983009808
        %v4163 = vunpack.c.0.s8 %v4162
        %v4164 = vperm.slane %v4156, %v4163
        %v4165 = vrot.slane %v4160, 4
        %v4166 = vsel %vm319, %v4165, %v4148
        %v4167 = vrot.slane %v4148, 4
        %v4168 = vsel %vm319, %v4160, %v4167
        %v4170 = vunpack.c.l.s4 1934713408
        %v4171 = vunpack.c.0.s8 %v4170
        %v4172 = vperm.slane %v4166, %v4171
        %v4174 = vunpack.c.l.s4 1934713408
        %v4175 = vunpack.c.0.s8 %v4174
        %v4176 = vperm.slane %v4168, %v4175
        %v4177 = vrot.slane %v4164, 4
        %v4178 = vsel %vm319, %v4177, %v4152
        %v4179 = vrot.slane %v4152, 4
        %v4180 = vsel %vm319, %v4164, %v4179
        %v4182 = vunpack.c.l.s4 1934713408
        %v4183 = vunpack.c.0.s8 %v4182
        %v4184 = vperm.slane %v4178, %v4183
        %v4186 = vunpack.c.l.s4 1934713408
        %v4187 = vunpack.c.0.s8 %v4186
        %v4188 = vperm.slane %v4180, %v4187
        %v4189 = vrot.slane %v4172, 4
        %v4190 = vsel %vm319, 0.0, %v4189
        %v4191 = vrot.slane %v4176, 4
        %v4192 = vsel %vm319, 0.0, %v4191
        %v4193 = vrot.slane %v4184, 4
        %v4194 = vsel %vm319, 0.0, %v4193
        %v4195 = vrot.slane %v4188, 4
        %v4196 = vsel %vm319, 0.0, %v4195
        %4198 = vrot.lane.b32.xlu0 %v4134, 16
        %v4199 = vpop.permute.xlu0 %4198
        %4202 = vrot.lane.b32.xlu0 %v4120, 32
        %v4203 = vpop.permute.xlu0 %4202
        %4206 = vrot.lane.b32.xlu0 %v4136, 48
        %v4207 = vpop.permute.xlu0 %4206
        %4210 = vrot.lane.b32.xlu0 %v4128, 64
        %v4211 = vpop.permute.xlu0 %4210
        %4214 = vrot.lane.b32.xlu0 %v4138, 80
        %v4215 = vpop.permute.xlu0 %4214
        %4218 = vrot.lane.b32.xlu0 %v4132, 96
        %v4219 = vpop.permute.xlu0 %4218
        %4222 = vrot.lane.b32.xlu0 %v4140, 112
        %v4223 = vpop.permute.xlu0 %4222
        %4226 = vrot.lane.b32.xlu0 %v4190, 16
        %v4227 = vpop.permute.xlu0 %4226
        %4230 = vrot.lane.b32.xlu0 %v4176, 32
        %v4231 = vpop.permute.xlu0 %4230
        %4234 = vrot.lane.b32.xlu0 %v4192, 48
        %v4235 = vpop.permute.xlu0 %4234
        %4238 = vrot.lane.b32.xlu0 %v4184, 64
        %v4239 = vpop.permute.xlu0 %4238
        %4242 = vrot.lane.b32.xlu0 %v4194, 80
        %v4243 = vpop.permute.xlu0 %4242
        %4246 = vrot.lane.b32.xlu0 %v4188, 96
        %v4247 = vpop.permute.xlu0 %4246
        %4250 = vrot.lane.b32.xlu0 %v4196, 112
        %v4251 = vpop.permute.xlu0 %4250
        %v4253 = vsel %vm2061, %v4116, %v4199
        %v4254 = vsel %vm1007, %v4253, %v4203
        %v4255 = vsel %vm2355, %v4254, %v4207
        %v4256 = vsel %vm2357, %v4255, %v4211
        %v4257 = vsel %vm995, %v4256, %v4215
        %v4258 = vsel %vm2360, %v4257, %v4219
        %v4259 = vsel %vm1019, %v4258, %v4223
        %v4260 = vsel %vm2061, %v4172, %v4227
        %v4261 = vsel %vm1007, %v4260, %v4231
        %v4262 = vsel %vm2355, %v4261, %v4235
        %v4263 = vsel %vm2357, %v4262, %v4239
        %v4264 = vsel %vm995, %v4263, %v4243
        %v4265 = vsel %vm2360, %v4264, %v4247
        %v4266 = vsel %vm1019, %v4265, %v4251
        %v4267 = vld [vmem:[%s4] sm:$0xf]
        %4269 = vset.pattern.permute.xlu0 0
        %4270 = vperm.xlu0 %4269, %v4267
        %v4271 = vpop.permute.xlu0 %4270
        %v4273 = vadd.f32 %v4259, %v4271
        %v4274 = vadd.f32 %v4266, %v4271
        %v4275 = vsel %vm1326, %v4273, 0.0
        %v4276 = vsel %vm1326, %v4274, 0.0
        %v4277 = vadd.f32 %v4275, %v4276
        %4278 = vadd.xlane.f32.xlu0 %v4277
        %v4279 = vpop.xlane.xlu0 %4278
        %v4280 = vmul.f32 %v4279, 0.00390625
        %v4281 = vsub.f32 %v4273, %v4280
        %v4282 = vsub.f32 %v4274, %v4280
        %v4283 = vmul.f32 %v4281, %v4281
        %v4284 = vmul.f32 %v4282, %v4282
        %v4285 = vsel %vm1326, %v4283, 0.0
        %v4286 = vsel %vm1326, %v4284, 0.0
        %v4287 = vadd.f32 %v4285, %v4286
        %4288 = vadd.xlane.f32.xlu0 %v4287
        %v4289 = vpop.xlane.xlu0 %4288
        %v4290 = vmul.f32 %v4289, 0.00390625
        %v4291 = vadd.f32 %v4290, 1e-05
        %v4292 = vrsqrt.pop %v4291
        %v4293 = vmul.f32 %v4292, %v4291
        %v4294 = vmul.f32 %v4293, %v4292
        %v4295 = vmul.f32 0.5, %v4294
        %v4296 = vsub.f32 1.5, %v4295
        %v4297 = vmul.f32 %v4292, %v4296
        %vm4298 = vweird.f32 %v4291
        %vm4299 = vweird.f32 %v4292
        %vm4300 = vmor %vm4298, %vm4299
        %v4301 = vsel %vm4300, %v4292, %v4297
        %v4302 = vmul.f32 %v4281, %v4301
        %v4303 = vmul.f32 %v4282, %v4301
        %s4304 = sld [smem:[#allocation4]]
        %v4305 = vstv %s4304
        %v4306 = vmul.f32 %v4305, %v4302
        %v4307 = vmul.f32 %v4305, %v4303
        %v4310 = vrot.slane %v4307, 4
        %v4311 = vsel %vm1326, %v4306, %v4310
        %v4313 = vadd.f32 %v279, %v4311
        %4314 = vst [vmem:[%s270] sm:$0xff] %v4313
        %s4315 = sand.u32 %s163, 1
        %s4316 = scalar_lea.sflag [#allocation7], %s4315
        %s4317 = sand.u32 %s163, 1
        %s4318 = smul.addr %s4317, 8
        %s4319 = scalar_lea.vmem [#allocation8], %s4318
        // Predicated region
        $region49: #{tpu_custom_call.1} parent=43 // pred_check
          %p4320 = pneg %p173
        $region50: #{tpu_custom_call.1} parent=43 // pred_check_branch
          %4322 = sbr.rel (%p4320) target = $region52
        $region51: #{tpu_custom_call.1} parent=43 // pred_region
          %4324 = vsyncadd %s4316, 0
          %s4325 = smul.addr %s24, 2
          %s4326 = smul.addr %s4325, 4
          %s4327 = scalar_lea.hbm %s6, %s4326
          %s4329 = sshll.u32 %s4319, 4
          %s4330 = int_to_ptr.vmem [resolvable:$true] %s4329
          %s4331 = sshll.u32 %s4327, 4
          %s4332 = int_to_ptr.hbm [resolvable:$true] %s4331
          %4334 = dma.vmem_to_hbm [thread:$0]  %s4330, 128, %s4332, %s4316
        $region52: #{tpu_custom_call.1} parent=43 // pred_fallthru
          _
      $region44: #{tpu_custom_call.1} parent=5 // pred_fallthru
        _
      %p4335 = scmp.le.s32.totalorder 2, %s19
      // Predicated region
      $region53: #{tpu_custom_call.1} parent=5 // pred_check
        %p4336 = pneg %p4335
      $region54: #{tpu_custom_call.1} parent=5 // pred_check_branch
        %4338 = sbr.rel (%p4336) target = $region56
      $region55: #{tpu_custom_call.1} parent=5 // pred_region
        %s4339 = ssub.s32 %s19, 2
        // Predicated region
        $region57: #{tpu_custom_call.1} parent=55 // pred_check
          %p4340 = pneg %p179
        $region58: #{tpu_custom_call.1} parent=55 // pred_check_branch
          %4342 = sbr.rel (%p4340) target = $region60
        $region59: #{tpu_custom_call.1} parent=55 // pred_region
          %s4343 = sand.u32 %s164, 1
          %s4344 = scalar_lea.sflag [#allocation7], %s4343
          %s4345 = sand.u32 %s164, 1
          %s4346 = smul.addr %s4345, 8
          %s4347 = scalar_lea.vmem [#allocation8], %s4346
          %4349 = dma.done %s4344, 128
        $region60: #{tpu_custom_call.1} parent=55 // pred_fallthru
          _
      $region56: #{tpu_custom_call.1} parent=5 // pred_fallthru
        _
    $region6: #{tpu_custom_call.1} parent=1 // loop_footer
      %s23 = sadd.s32 1, %s19
    $region7: #{tpu_custom_call.1} parent=1 // loop_footer_branch
      %18 = sbr.rel target = $region3
    $region8: #{tpu_custom_call.1} parent=1 // loop_exit
      _
    %4350 = vsyncpa [#allocation6], 1
    %s4351 = scalar_lea.sflag [#allocation6], 1
    %4352 = vsyncpa %s4351, 1
    %4353 = vsyncpa [#allocation7], 1
    %s4354 = scalar_lea.sflag [#allocation7], 1
    %4355 = vsyncpa %s4354, 1

</llo_original>
